<compile_context>
chip_gen: v6e
topology: v6e:2x2x1
jax: 0.10.0
libtpu: 0.0.40
codegen_flags: <defaults>
</compile_context>

<pallas_src>
import functools
import math

import jax
import jax.numpy as jnp
from jax.experimental import pallas as pl
from jax.experimental.pallas import tpu as pltpu

NOISE_PROB = 0.0
DISCOUNT = 1.0
THRESHOLD = 50.0

LANE = 128


def _round_up(x, m):
    return (x + m - 1) // m * m


def preference_kernel(x_ref, gd_ref,
                      w1_ref, b1_ref, w2_ref, b2_ref, w3sd_ref,
                      probs_ref, gt_probs_ref):
    """One grid step processes one block of BP fragment pairs.

    x_ref    : (BP, K, D)   transition features; per pair the K = 2*Tp rows are
                            fragment-1 transitions then fragment-2 transitions.
    gd_ref   : (1, BP)      precomputed ground-truth discounted return diffs.
    w1..b2   : reward-MLP params (hidden dim zero-padded to 128 lanes),
               resident in VMEM across the grid (constant index_maps).
    w3sd_ref : (1, K, Hp)   fused final-layer / return-diff weights
                            w3[h] * sign(fragment) * discount^t (0 on padding;
                            b3 cancels exactly because sum_k sd[k] == 0).
    outputs  : (1, BP)      lane-dense preference probabilities for this block.
    """
    bp, k, d = x_ref.shape
    hp = w1_ref.shape[1]

    # ---- reward MLP over all BP*K transitions of this block (MXU matmuls) ----
    x = x_ref[...].reshape(bp * k, d)          # layout-preserving (k % 8 == 0)
    h = jnp.dot(x, w1_ref[...], preferred_element_type=jnp.float32) + b1_ref[...]
    h = jnp.maximum(h, 0.0)
    h = jnp.dot(h, w2_ref[...], preferred_element_type=jnp.float32) + b2_ref[...]
    h = jnp.maximum(h, 0.0)                    # (BP*K, Hp), lane-dense

    # ---- fused final (Hp -> 1) layer + discounted return difference ----------
    # rd[b] = sum_{k,h} h[b,k,h] * (w3[h] * sd[k])
    hw = h.reshape(bp, k, hp) * w3sd_ref[...]          # (BP, K, Hp)
    rd = jnp.sum(jnp.sum(hw, axis=-1), axis=-1)        # (BP,)
    rd = jnp.clip(rd, -THRESHOLD, THRESHOLD).reshape(1, bp)   # lane-dense row
    model_prob = 1.0 / (1.0 + jnp.exp(rd))
    probs_ref[...] = NOISE_PROB * 0.5 + (1.0 - NOISE_PROB) * model_prob

    # ---- ground-truth preference probabilities (lane-dense, no MXU) ----------
    gd = jnp.clip(gd_ref[...], -THRESHOLD, THRESHOLD)          # (1, BP)
    gt_model_prob = 1.0 / (1.0 + jnp.exp(gd))
    gt_probs_ref[...] = NOISE_PROB * 0.5 + (1.0 - NOISE_PROB) * gt_model_prob


def preference_model(obs1, acts1, obs2, acts2, gt_rews1, gt_rews2, params,
                     *, block_pairs=256):
    """Returns (probs, gt_probs), each shape (P,) float32."""
    P, T, _ = obs1.shape
    d_in = obs1.shape[-1] + acts1.shape[-1]

    w1, b1, w2, b2, w3, b3 = params
    H = w1.shape[1]
    Hp = _round_up(H, LANE)
    f32 = jnp.float32

    # --- zero-pad the hidden dim to 128 lanes (exact under matmul + ReLU) -----
    w1p = jnp.zeros((d_in, Hp), f32).at[:, :H].set(w1.astype(f32))
    b1p = jnp.zeros((1, Hp), f32).at[:, :H].set(b1.reshape(1, H).astype(f32))
    w2p = jnp.zeros((Hp, Hp), f32).at[:H, :H].set(w2.astype(f32))
    b2p = jnp.zeros((1, Hp), f32).at[:, :H].set(b2.reshape(1, H).astype(f32))
    w3p = jnp.zeros((Hp,), f32).at[:H].set(w3.reshape(H).astype(f32))

    # --- pack transitions as (P, K, D): frag-1 rows then frag-2 rows per pair -
    Tp = _round_up(T, 4)            # K = 2*Tp is a multiple of 8 (sublane tile)
    K = 2 * Tp
    x = jnp.concatenate([jnp.stack([obs1, obs2], axis=1),
                         jnp.stack([acts1, acts2], axis=1)], axis=-1)  # (P,2,T,D)
    x = x.astype(f32)
    if Tp != T:
        x = jnp.pad(x, ((0, 0), (0, 0), (0, Tp - T), (0, 0)))
    x = x.reshape(P, K, d_in)

    # signed discount weights per row: frag1 -> -disc^t, frag2 -> +disc^t
    disc = DISCOUNT ** jnp.arange(T, dtype=f32)
    zpad = jnp.zeros((Tp - T,), f32)
    sd = jnp.concatenate([-disc, zpad, disc, zpad])                    # (K,)
    # Fused final-layer / return-diff weights.  b3 drops since sum(sd) == 0.
    w3sd = (sd[:, None] * w3p[None, :]).reshape(1, K, Hp)

    # --- ground-truth discounted return diff precomputed in plain XLA ---------
    gd = jnp.sum((gt_rews2.astype(f32) - gt_rews1.astype(f32)) * disc,
                 axis=-1)                                              # (P,)

    # --- choose a lane-multiple pair-block size and pad the pair axis ---------
    BP = max(LANE, _round_up(block_pairs, LANE))
    BP = min(BP, _round_up(P, LANE))   # don't over-allocate for small batches
    Pp = _round_up(P, BP)
    if Pp != P:
        pad = Pp - P
        x = jnp.pad(x, ((0, pad), (0, 0), (0, 0)))
        gd = jnp.pad(gd, ((0, pad),))
    gd = gd.reshape(1, Pp)
    num_blocks = Pp // BP

    in_specs = [
        pl.BlockSpec((BP, K, d_in), lambda i: (i, 0, 0)),   # x (streamed)
        pl.BlockSpec((1, BP), lambda i: (0, i)),            # gt return diffs
        pl.BlockSpec((d_in, Hp), lambda i: (0, 0)),         # w1 (resident)
        pl.BlockSpec((1, Hp), lambda i: (0, 0)),            # b1
        pl.BlockSpec((Hp, Hp), lambda i: (0, 0)),           # w2
        pl.BlockSpec((1, Hp), lambda i: (0, 0)),            # b2
        pl.BlockSpec((1, K, Hp), lambda i: (0, 0, 0)),      # w3 * sd (fused)
    ]
    out_specs = (pl.BlockSpec((1, BP), lambda i: (0, i)),
                 pl.BlockSpec((1, BP), lambda i: (0, i)))
    out_shape = (jax.ShapeDtypeStruct((1, Pp), f32),
                 jax.ShapeDtypeStruct((1, Pp), f32))

    # VMEM budget: double-buffered lane-padded x block + activation working set
    # + resident weights + slack, capped well under v7x's 64 MiB per TC.
    x_blk = BP * K * LANE * 4
    act = 4 * BP * K * Hp * 4
    wts = (d_in * Hp + Hp * Hp + 2 * Hp + K * Hp) * 4
    vmem_limit = int(min(32 * 2**20,
                         max(8 * 2**20, 2 * x_blk + act + wts + (2 << 20))))

    probs, gt_probs = pl.pallas_call(
        preference_kernel,
        grid=(num_blocks,),
        in_specs=in_specs,
        out_specs=out_specs,
        out_shape=out_shape,
        compiler_params=pltpu.CompilerParams(
            dimension_semantics=("parallel",),
            vmem_limit_bytes=vmem_limit),
    )(x, gd, w1p, b1p, w2p, b2p, w3sd)

    return probs.reshape(Pp)[:P], gt_probs.reshape(Pp)[:P]


def _reference(obs1, acts1, obs2, acts2, gt1, gt2, params):
    """Pure-JAX reference for correctness checking."""
    w1, b1, w2, b2, w3, b3 = params
    hi = jax.lax.Precision.HIGHEST

    def mlp(o, a):
        x = jnp.concatenate([o, a], axis=-1)
        h = jnp.maximum(jnp.dot(x, w1, precision=hi) + b1, 0.0)
        h = jnp.maximum(jnp.dot(h, w2, precision=hi) + b2, 0.0)
        return (jnp.dot(h, w3, precision=hi) + b3)[..., 0]              # (P, T)

    def prob_of(r1, r2):
        disc = DISCOUNT ** jnp.arange(r1.shape[-1], dtype=jnp.float32)
        d = jnp.clip(((r2 - r1) * disc).sum(-1), -THRESHOLD, THRESHOLD)
        mp = 1.0 / (1.0 + jnp.exp(d))
        return NOISE_PROB * 0.5 + (1.0 - NOISE_PROB) * mp

    return prob_of(mlp(obs1, acts1), mlp(obs2, acts2)), prob_of(gt1, gt2)


if __name__ == "__main__":
    P, T, OBS, ACT, H = 20, 8, 16, 4, 32     # pairs, fragment length, dims
    D_IN = OBS + ACT

    key = jax.random.PRNGKey(0)
    ks = jax.random.split(key, 12)

    obs1 = jax.random.normal(ks[0], (P, T, OBS), jnp.float32)
    acts1 = jax.random.normal(ks[1], (P, T, ACT), jnp.float32)
    obs2 = jax.random.normal(ks[2], (P, T, OBS), jnp.float32)
    acts2 = jax.random.normal(ks[3], (P, T, ACT), jnp.float32)
    gt_rews1 = jax.random.normal(ks[4], (P, T), jnp.float32)
    gt_rews2 = jax.random.normal(ks[5], (P, T), jnp.float32)

    # Deterministic MLP params (BasicRewardNet: hidden sizes (H, H) -> 1).
    w1 = jax.random.normal(ks[6], (D_IN, H), jnp.float32) / math.sqrt(D_IN)
    b1 = 0.1 * jax.random.normal(ks[9], (1, H), jnp.float32)
    w2 = jax.random.normal(ks[7], (H, H), jnp.float32) / math.sqrt(H)
    b2 = 0.1 * jax.random.normal(ks[10], (1, H), jnp.float32)
    w3 = jax.random.normal(ks[8], (H, 1), jnp.float32) / math.sqrt(H)
    b3 = 0.1 * jax.random.normal(ks[11], (1, 1), jnp.float32)
    params = (w1, b1, w2, b2, w3, b3)

    fn = jax.jit(functools.partial(preference_model, block_pairs=256))
    probs, gt_probs = fn(obs1, acts1, obs2, acts2, gt_rews1, gt_rews2, params)
    jax.block_until_ready((probs, gt_probs))

    ref_probs, ref_gt = _reference(obs1, acts1, obs2, acts2,
                                   gt_rews1, gt_rews2, params)
    assert probs.shape == (P,) and gt_probs.shape == (P,)
    assert jnp.allclose(probs, ref_probs, atol=2e-5, rtol=2e-5), \
        float(jnp.max(jnp.abs(probs - ref_probs)))
    assert jnp.allclose(gt_probs, ref_gt, atol=2e-5, rtol=2e-5), \
        float(jnp.max(jnp.abs(gt_probs - ref_gt)))

    print("KERNEL_OK")
</pallas_src>

<mosaic_0001>
module attributes {stable_mosaic.version = 11 : i64} {
  func.func @preference_kernel(%arg0: i32, %arg1: memref<128x16x20xf32, #tpu.memory_space<vmem>>, %arg2: memref<1x128xf32, #tpu.memory_space<vmem>>, %arg3: memref<20x128xf32, #tpu.memory_space<vmem>>, %arg4: memref<1x128xf32, #tpu.memory_space<vmem>>, %arg5: memref<128x128xf32, #tpu.memory_space<vmem>>, %arg6: memref<1x128xf32, #tpu.memory_space<vmem>>, %arg7: memref<1x16x128xf32, #tpu.memory_space<vmem>>, %arg8: memref<1x128xf32, #tpu.memory_space<vmem>>, %arg9: memref<1x128xf32, #tpu.memory_space<vmem>>) attributes {dimension_semantics = [#tpu.dimension_semantics<parallel>], iteration_bounds = array<i64: 1>, scalar_prefetch = 0 : i64, scratch_operands = 0 : i64, tpu.core_type = #tpu.core_type<tc>, window_params = [{transform_indices = @transform_0, window_bounds = array<i64: 128, 16, 20>}, {transform_indices = @transform_1, window_bounds = array<i64: 1, 128>}, {pipeline_mode = #tpu.pipeline_mode<synchronous>, transform_indices = @transform_2, window_bounds = array<i64: 20, 128>}, {pipeline_mode = #tpu.pipeline_mode<synchronous>, transform_indices = @transform_3, window_bounds = array<i64: 1, 128>}, {pipeline_mode = #tpu.pipeline_mode<synchronous>, transform_indices = @transform_4, window_bounds = array<i64: 128, 128>}, {pipeline_mode = #tpu.pipeline_mode<synchronous>, transform_indices = @transform_5, window_bounds = array<i64: 1, 128>}, {pipeline_mode = #tpu.pipeline_mode<synchronous>, transform_indices = @transform_6, window_bounds = array<i64: 1, 16, 128>}, {transform_indices = @transform_7, window_bounds = array<i64: 1, 128>}, {transform_indices = @transform_8, window_bounds = array<i64: 1, 128>}]} {
    %c0 = arith.constant 0 : index
    %c0_0 = arith.constant 0 : index
    %c0_1 = arith.constant 0 : index
    %0 = vector.load %arg1[%c0, %c0_0, %c0_1] : memref<128x16x20xf32, #tpu.memory_space<vmem>>, vector<128x16x20xf32>
    %1 = vector.shape_cast %0 : vector<128x16x20xf32> to vector<2048x20xf32>
    %c0_2 = arith.constant 0 : index
    %c0_3 = arith.constant 0 : index
    %2 = vector.load %arg3[%c0_2, %c0_3] : memref<20x128xf32, #tpu.memory_space<vmem>>, vector<20x128xf32>
    %cst = arith.constant dense<0.000000e+00> : vector<2048x128xf32>
    %3 = tpu.matmul %1, %2, %cst {dimension_numbers = #tpu.dot_dimension_numbers<[1], [0], [0], [1], [0, 0, 1, 1], [], []>} : vector<2048x20xf32>, vector<20x128xf32>, vector<2048x128xf32> -> vector<2048x128xf32>
    %c0_4 = arith.constant 0 : index
    %c0_5 = arith.constant 0 : index
    %4 = vector.load %arg4[%c0_4, %c0_5] : memref<1x128xf32, #tpu.memory_space<vmem>>, vector<1x128xf32>
    %5 = vector.broadcast %4 : vector<1x128xf32> to vector<2048x128xf32>
    %6 = arith.addf %3, %5 : vector<2048x128xf32>
    %cst_6 = arith.constant 0.000000e+00 : f32
    %7 = vector.broadcast %cst_6 : f32 to vector<2048x128xf32>
    %8 = arith.maximumf %6, %7 : vector<2048x128xf32>
    %c0_7 = arith.constant 0 : index
    %c0_8 = arith.constant 0 : index
    %9 = vector.load %arg5[%c0_7, %c0_8] : memref<128x128xf32, #tpu.memory_space<vmem>>, vector<128x128xf32>
    %cst_9 = arith.constant dense<0.000000e+00> : vector<2048x128xf32>
    %10 = tpu.matmul %8, %9, %cst_9 {dimension_numbers = #tpu.dot_dimension_numbers<[1], [0], [0], [1], [0, 0, 1, 1], [], []>} : vector<2048x128xf32>, vector<128x128xf32>, vector<2048x128xf32> -> vector<2048x128xf32>
    %c0_10 = arith.constant 0 : index
    %c0_11 = arith.constant 0 : index
    %11 = vector.load %arg6[%c0_10, %c0_11] : memref<1x128xf32, #tpu.memory_space<vmem>>, vector<1x128xf32>
    %12 = vector.broadcast %11 : vector<1x128xf32> to vector<2048x128xf32>
    %13 = arith.addf %10, %12 : vector<2048x128xf32>
    %cst_12 = arith.constant 0.000000e+00 : f32
    %14 = vector.broadcast %cst_12 : f32 to vector<2048x128xf32>
    %15 = arith.maximumf %13, %14 : vector<2048x128xf32>
    %16 = vector.shape_cast %15 : vector<2048x128xf32> to vector<128x16x128xf32>
    %c0_13 = arith.constant 0 : index
    %c0_14 = arith.constant 0 : index
    %c0_15 = arith.constant 0 : index
    %17 = vector.load %arg7[%c0_13, %c0_14, %c0_15] : memref<1x16x128xf32, #tpu.memory_space<vmem>>, vector<1x16x128xf32>
    %18 = vector.broadcast %17 : vector<1x16x128xf32> to vector<128x16x128xf32>
    %19 = arith.mulf %16, %18 : vector<128x16x128xf32>
    %cst_16 = arith.constant dense<0.000000e+00> : vector<128x16xf32>
    %20 = vector.multi_reduction <add>, %19, %cst_16 [2] : vector<128x16x128xf32> to vector<128x16xf32>
    %cst_17 = arith.constant dense<0.000000e+00> : vector<128xf32>
    %21 = vector.multi_reduction <add>, %20, %cst_17 [1] : vector<128x16xf32> to vector<128xf32>
    %cst_18 = arith.constant -5.000000e+01 : f32
    %cst_19 = arith.constant 5.000000e+01 : f32
    %22 = vector.broadcast %cst_18 : f32 to vector<128xf32>
    %23 = arith.maximumf %22, %21 : vector<128xf32>
    %24 = vector.broadcast %cst_19 : f32 to vector<128xf32>
    %25 = arith.minimumf %24, %23 : vector<128xf32>
    %26 = vector.shape_cast %25 : vector<128xf32> to vector<1x128xf32>
    %27 = math.exp %26 : vector<1x128xf32>
    %cst_20 = arith.constant 1.000000e+00 : f32
    %28 = vector.broadcast %cst_20 : f32 to vector<1x128xf32>
    %29 = arith.addf %28, %27 : vector<1x128xf32>
    %cst_21 = arith.constant 1.000000e+00 : f32
    %30 = vector.broadcast %cst_21 : f32 to vector<1x128xf32>
    %31 = arith.divf %30, %29 : vector<1x128xf32>
    %cst_22 = arith.constant 1.000000e+00 : f32
    %32 = vector.broadcast %cst_22 : f32 to vector<1x128xf32>
    %33 = arith.mulf %32, %31 : vector<1x128xf32>
    %cst_23 = arith.constant 0.000000e+00 : f32
    %34 = vector.broadcast %cst_23 : f32 to vector<1x128xf32>
    %35 = arith.addf %34, %33 : vector<1x128xf32>
    %c0_24 = arith.constant 0 : index
    %c0_25 = arith.constant 0 : index
    %36 = vector.load %arg8[%c0_24, %c0_25] : memref<1x128xf32, #tpu.memory_space<vmem>>, vector<1x128xf32>
    tpu.vector_store %arg8[%c0_24, %c0_25], %35 {strides = array<i32>} : memref<1x128xf32, #tpu.memory_space<vmem>>, vector<1x128xf32>,
    %c0_26 = arith.constant 0 : index
    %c0_27 = arith.constant 0 : index
    %37 = vector.load %arg2[%c0_26, %c0_27] : memref<1x128xf32, #tpu.memory_space<vmem>>, vector<1x128xf32>
    %cst_28 = arith.constant -5.000000e+01 : f32
    %cst_29 = arith.constant 5.000000e+01 : f32
    %38 = vector.broadcast %cst_28 : f32 to vector<1x128xf32>
    %39 = arith.maximumf %38, %37 : vector<1x128xf32>
    %40 = vector.broadcast %cst_29 : f32 to vector<1x128xf32>
    %41 = arith.minimumf %40, %39 : vector<1x128xf32>
    %42 = math.exp %41 : vector<1x128xf32>
    %cst_30 = arith.constant 1.000000e+00 : f32
    %43 = vector.broadcast %cst_30 : f32 to vector<1x128xf32>
    %44 = arith.addf %43, %42 : vector<1x128xf32>
    %cst_31 = arith.constant 1.000000e+00 : f32
    %45 = vector.broadcast %cst_31 : f32 to vector<1x128xf32>
    %46 = arith.divf %45, %44 : vector<1x128xf32>
    %cst_32 = arith.constant 1.000000e+00 : f32
    %47 = vector.broadcast %cst_32 : f32 to vector<1x128xf32>
    %48 = arith.mulf %47, %46 : vector<1x128xf32>
    %cst_33 = arith.constant 0.000000e+00 : f32
    %49 = vector.broadcast %cst_33 : f32 to vector<1x128xf32>
    %50 = arith.addf %49, %48 : vector<1x128xf32>
    %c0_34 = arith.constant 0 : index
    %c0_35 = arith.constant 0 : index
    %51 = vector.load %arg9[%c0_34, %c0_35] : memref<1x128xf32, #tpu.memory_space<vmem>>, vector<1x128xf32>
    tpu.vector_store %arg9[%c0_34, %c0_35], %50 {strides = array<i32>} : memref<1x128xf32, #tpu.memory_space<vmem>>, vector<1x128xf32>,
    return
  }
  func.func @transform_0(%arg0: i32) -> (i32, i32, i32) {
    %c0_i32 = arith.constant 0 : i32
    %c0_i32_0 = arith.constant 0 : i32
    %c0_i32_1 = arith.constant 0 : i32
    return %arg0, %c0_i32, %c0_i32_0 : i32, i32, i32
  }
  func.func @transform_1(%arg0: i32) -> (i32, i32) {
    %c0_i32 = arith.constant 0 : i32
    %c0_i32_0 = arith.constant 0 : i32
    return %c0_i32, %arg0 : i32, i32
  }
  func.func @transform_2(%arg0: i32) -> (i32, i32) {
    %c0_i32 = arith.constant 0 : i32
    %c0_i32_0 = arith.constant 0 : i32
    %c0_i32_1 = arith.constant 0 : i32
    return %c0_i32, %c0_i32_0 : i32, i32
  }
  func.func @transform_3(%arg0: i32) -> (i32, i32) {
    %c0_i32 = arith.constant 0 : i32
    %c0_i32_0 = arith.constant 0 : i32
    %c0_i32_1 = arith.constant 0 : i32
    return %c0_i32, %c0_i32_0 : i32, i32
  }
  func.func @transform_4(%arg0: i32) -> (i32, i32) {
    %c0_i32 = arith.constant 0 : i32
    %c0_i32_0 = arith.constant 0 : i32
    %c0_i32_1 = arith.constant 0 : i32
    return %c0_i32, %c0_i32_0 : i32, i32
  }
  func.func @transform_5(%arg0: i32) -> (i32, i32) {
    %c0_i32 = arith.constant 0 : i32
    %c0_i32_0 = arith.constant 0 : i32
    %c0_i32_1 = arith.constant 0 : i32
    return %c0_i32, %c0_i32_0 : i32, i32
  }
  func.func @transform_6(%arg0: i32) -> (i32, i32, i32) {
    %c0_i32 = arith.constant 0 : i32
    %c0_i32_0 = arith.constant 0 : i32
    %c0_i32_1 = arith.constant 0 : i32
    %c0_i32_2 = arith.constant 0 : i32
    return %c0_i32, %c0_i32_0, %c0_i32_1 : i32, i32, i32
  }
  func.func @transform_7(%arg0: i32) -> (i32, i32) {
    %c0_i32 = arith.constant 0 : i32
    %c0_i32_0 = arith.constant 0 : i32
    return %c0_i32, %arg0 : i32, i32
  }
  func.func @transform_8(%arg0: i32) -> (i32, i32) {
    %c0_i32 = arith.constant 0 : i32
    %c0_i32_0 = arith.constant 0 : i32
    return %c0_i32, %arg0 : i32, i32
  }
}

</mosaic_0001>

<llo_original>
// kernel: preference_model.1
$region0: #{preference_model.1}
  #allocation0 [shape = 'u32[]', space=smem, size = 0x4, offset = 0x4, fixed_abs, tag = 'smem constant byte address 0x4 - core index']
  #allocation1 [shape = 'u32[144,128]{1,0:T(1,128)}', space=vmem, size = 0x12000, scoped, tag = 'internal scratch']
  %s0 = inlined_call_operand.vmem [shape: f32[128,16,20], index: 0, kind: input, shape index: {}]
  %s1 = inlined_call_operand.vmem [shape: f32[1,128], index: 1, kind: input, shape index: {}]
  %s2 = inlined_call_operand.vmem [shape: f32[20,128], index: 2, kind: input, shape index: {}]
  %s3 = inlined_call_operand.vmem [shape: f32[1,128], index: 3, kind: input, shape index: {}]
  %s4 = inlined_call_operand.vmem [shape: f32[128,128], index: 4, kind: input, shape index: {}]
  %s5 = inlined_call_operand.vmem [shape: f32[1,128], index: 5, kind: input, shape index: {}]
  %s6 = inlined_call_operand.vmem [shape: f32[1,16,128], index: 6, kind: input, shape index: {}]
  %s7 = inlined_call_operand.vmem [shape: f32[1,128], index: 7, kind: output, shape index: {0}]
  %s8 = inlined_call_operand.vmem [shape: f32[1,128], index: 8, kind: output, shape index: {1}]
  %9 = xla_tuple %s7, %s8
  %s10 = sld [smem:[#allocation0]]
  $region46: #{preference_model.1} parent=0
    _
  %s12 = ssub.s32 1, %s10
  %s13 = scalar_select 0, %s12, %s10
  // Predicated region
  $region2: #{preference_model.1} parent=0 // pred_check
    _
  $region3: #{preference_model.1} parent=0 // pred_check_branch
    %15 = sbr.rel (0) target = $region5
  $region4: #{preference_model.1} parent=0 // pred_region
    _
  $region5: #{preference_model.1} parent=0 // pred_fallthru
    _
  // Predicated region
  $region6: #{preference_model.1} parent=0 // pred_check
    _
  $region7: #{preference_model.1} parent=0 // pred_check_branch
    %17 = sbr.rel (0) target = $region9
  $region8: #{preference_model.1} parent=0 // pred_region
    _
  $region9: #{preference_model.1} parent=0 // pred_fallthru
    _
  // Predicated region
  $region10: #{preference_model.1} parent=0 // pred_check
    _
  $region11: #{preference_model.1} parent=0 // pred_check_branch
    %19 = sbr.rel (0) target = $region13
  $region12: #{preference_model.1} parent=0 // pred_region
    _
  $region13: #{preference_model.1} parent=0 // pred_fallthru
    _
  // Predicated region
  $region14: #{preference_model.1} parent=0 // pred_check
    _
  $region15: #{preference_model.1} parent=0 // pred_check_branch
    %21 = sbr.rel (0) target = $region17
  $region16: #{preference_model.1} parent=0 // pred_region
    _
  $region17: #{preference_model.1} parent=0 // pred_fallthru
    _
  // Predicated region
  $region18: #{preference_model.1} parent=0 // pred_check
    _
  $region19: #{preference_model.1} parent=0 // pred_check_branch
    %23 = sbr.rel (0) target = $region21
  $region20: #{preference_model.1} parent=0 // pred_region
    _
  $region21: #{preference_model.1} parent=0 // pred_fallthru
    _
  // Predicated region
  $region22: #{preference_model.1} parent=0 // pred_check
    _
  $region23: #{preference_model.1} parent=0 // pred_check_branch
    %25 = sbr.rel (0) target = $region25
  $region24: #{preference_model.1} parent=0 // pred_region
    _
  $region25: #{preference_model.1} parent=0 // pred_fallthru
    _
  // Predicated region
  $region26: #{preference_model.1} parent=0 // pred_check
    _
  $region27: #{preference_model.1} parent=0 // pred_check_branch
    %27 = sbr.rel (0) target = $region29
  $region28: #{preference_model.1} parent=0 // pred_region
    _
  $region29: #{preference_model.1} parent=0 // pred_fallthru
    _
  %v28 = vld [vmem:[%s0] sm:$0xff]
  %v29 = vld [vmem:[%s0 + $0x8] sm:$0xff]
  %v30 = vld [vmem:[%s0 + $0x10] sm:$0xff]
  %v31 = vld [vmem:[%s0 + $0x18] sm:$0xff]
  %v32 = vld [vmem:[%s0 + $0x20] sm:$0xff]
  %v33 = vld [vmem:[%s0 + $0x28] sm:$0xff]
  %v34 = vld [vmem:[%s0 + $0x30] sm:$0xff]
  %v35 = vld [vmem:[%s0 + $0x38] sm:$0xff]
  %v36 = vld [vmem:[%s0 + $0x40] sm:$0xff]
  %v37 = vld [vmem:[%s0 + $0x48] sm:$0xff]
  %v38 = vld [vmem:[%s0 + $0x50] sm:$0xff]
  %v39 = vld [vmem:[%s0 + $0x58] sm:$0xff]
  %v40 = vld [vmem:[%s0 + $0x60] sm:$0xff]
  %v41 = vld [vmem:[%s0 + $0x68] sm:$0xff]
  %v42 = vld [vmem:[%s0 + $0x70] sm:$0xff]
  %v43 = vld [vmem:[%s0 + $0x78] sm:$0xff]
  %v44 = vld [vmem:[%s0 + $0x80] sm:$0xff]
  %v45 = vld [vmem:[%s0 + $0x88] sm:$0xff]
  %v46 = vld [vmem:[%s0 + $0x90] sm:$0xff]
  %v47 = vld [vmem:[%s0 + $0x98] sm:$0xff]
  %v48 = vld [vmem:[%s0 + $0xa0] sm:$0xff]
  %v49 = vld [vmem:[%s0 + $0xa8] sm:$0xff]
  %v50 = vld [vmem:[%s0 + $0xb0] sm:$0xff]
  %v51 = vld [vmem:[%s0 + $0xb8] sm:$0xff]
  %v52 = vld [vmem:[%s0 + $0xc0] sm:$0xff]
  %v53 = vld [vmem:[%s0 + $0xc8] sm:$0xff]
  %v54 = vld [vmem:[%s0 + $0xd0] sm:$0xff]
  %v55 = vld [vmem:[%s0 + $0xd8] sm:$0xff]
  %v56 = vld [vmem:[%s0 + $0xe0] sm:$0xff]
  %v57 = vld [vmem:[%s0 + $0xe8] sm:$0xff]
  %v58 = vld [vmem:[%s0 + $0xf0] sm:$0xff]
  %v59 = vld [vmem:[%s0 + $0xf8] sm:$0xff]
  %v60 = vld [vmem:[%s0 + $0x100] sm:$0xff]
  %v61 = vld [vmem:[%s0 + $0x108] sm:$0xff]
  %v62 = vld [vmem:[%s0 + $0x110] sm:$0xff]
  %v63 = vld [vmem:[%s0 + $0x118] sm:$0xff]
  %v64 = vld [vmem:[%s0 + $0x120] sm:$0xff]
  %v65 = vld [vmem:[%s0 + $0x128] sm:$0xff]
  %v66 = vld [vmem:[%s0 + $0x130] sm:$0xff]
  %v67 = vld [vmem:[%s0 + $0x138] sm:$0xff]
  %v68 = vld [vmem:[%s0 + $0x140] sm:$0xff]
  %v69 = vld [vmem:[%s0 + $0x148] sm:$0xff]
  %v70 = vld [vmem:[%s0 + $0x150] sm:$0xff]
  %v71 = vld [vmem:[%s0 + $0x158] sm:$0xff]
  %v72 = vld [vmem:[%s0 + $0x160] sm:$0xff]
  %v73 = vld [vmem:[%s0 + $0x168] sm:$0xff]
  %v74 = vld [vmem:[%s0 + $0x170] sm:$0xff]
  %v75 = vld [vmem:[%s0 + $0x178] sm:$0xff]
  %v76 = vld [vmem:[%s0 + $0x180] sm:$0xff]
  %v77 = vld [vmem:[%s0 + $0x188] sm:$0xff]
  %v78 = vld [vmem:[%s0 + $0x190] sm:$0xff]
  %v79 = vld [vmem:[%s0 + $0x198] sm:$0xff]
  %v80 = vld [vmem:[%s0 + $0x1a0] sm:$0xff]
  %v81 = vld [vmem:[%s0 + $0x1a8] sm:$0xff]
  %v82 = vld [vmem:[%s0 + $0x1b0] sm:$0xff]
  %v83 = vld [vmem:[%s0 + $0x1b8] sm:$0xff]
  %v84 = vld [vmem:[%s0 + $0x1c0] sm:$0xff]
  %v85 = vld [vmem:[%s0 + $0x1c8] sm:$0xff]
  %v86 = vld [vmem:[%s0 + $0x1d0] sm:$0xff]
  %v87 = vld [vmem:[%s0 + $0x1d8] sm:$0xff]
  %v88 = vld [vmem:[%s0 + $0x1e0] sm:$0xff]
  %v89 = vld [vmem:[%s0 + $0x1e8] sm:$0xff]
  %v90 = vld [vmem:[%s0 + $0x1f0] sm:$0xff]
  %v91 = vld [vmem:[%s0 + $0x1f8] sm:$0xff]
  %v92 = vld [vmem:[%s0 + $0x200] sm:$0xff]
  %v93 = vld [vmem:[%s0 + $0x208] sm:$0xff]
  %v94 = vld [vmem:[%s0 + $0x210] sm:$0xff]
  %v95 = vld [vmem:[%s0 + $0x218] sm:$0xff]
  %v96 = vld [vmem:[%s0 + $0x220] sm:$0xff]
  %v97 = vld [vmem:[%s0 + $0x228] sm:$0xff]
  %v98 = vld [vmem:[%s0 + $0x230] sm:$0xff]
  %v99 = vld [vmem:[%s0 + $0x238] sm:$0xff]
  %v100 = vld [vmem:[%s0 + $0x240] sm:$0xff]
  %v101 = vld [vmem:[%s0 + $0x248] sm:$0xff]
  %v102 = vld [vmem:[%s0 + $0x250] sm:$0xff]
  %v103 = vld [vmem:[%s0 + $0x258] sm:$0xff]
  %v104 = vld [vmem:[%s0 + $0x260] sm:$0xff]
  %v105 = vld [vmem:[%s0 + $0x268] sm:$0xff]
  %v106 = vld [vmem:[%s0 + $0x270] sm:$0xff]
  %v107 = vld [vmem:[%s0 + $0x278] sm:$0xff]
  %v108 = vld [vmem:[%s0 + $0x280] sm:$0xff]
  %v109 = vld [vmem:[%s0 + $0x288] sm:$0xff]
  %v110 = vld [vmem:[%s0 + $0x290] sm:$0xff]
  %v111 = vld [vmem:[%s0 + $0x298] sm:$0xff]
  %v112 = vld [vmem:[%s0 + $0x2a0] sm:$0xff]
  %v113 = vld [vmem:[%s0 + $0x2a8] sm:$0xff]
  %v114 = vld [vmem:[%s0 + $0x2b0] sm:$0xff]
  %v115 = vld [vmem:[%s0 + $0x2b8] sm:$0xff]
  %v116 = vld [vmem:[%s0 + $0x2c0] sm:$0xff]
  %v117 = vld [vmem:[%s0 + $0x2c8] sm:$0xff]
  %v118 = vld [vmem:[%s0 + $0x2d0] sm:$0xff]
  %v119 = vld [vmem:[%s0 + $0x2d8] sm:$0xff]
  %v120 = vld [vmem:[%s0 + $0x2e0] sm:$0xff]
  %v121 = vld [vmem:[%s0 + $0x2e8] sm:$0xff]
  %v122 = vld [vmem:[%s0 + $0x2f0] sm:$0xff]
  %v123 = vld [vmem:[%s0 + $0x2f8] sm:$0xff]
  %v124 = vld [vmem:[%s0 + $0x300] sm:$0xff]
  %v125 = vld [vmem:[%s0 + $0x308] sm:$0xff]
  %v126 = vld [vmem:[%s0 + $0x310] sm:$0xff]
  %v127 = vld [vmem:[%s0 + $0x318] sm:$0xff]
  %v128 = vld [vmem:[%s0 + $0x320] sm:$0xff]
  %v129 = vld [vmem:[%s0 + $0x328] sm:$0xff]
  %v130 = vld [vmem:[%s0 + $0x330] sm:$0xff]
  %v131 = vld [vmem:[%s0 + $0x338] sm:$0xff]
  %v132 = vld [vmem:[%s0 + $0x340] sm:$0xff]
  %v133 = vld [vmem:[%s0 + $0x348] sm:$0xff]
  %v134 = vld [vmem:[%s0 + $0x350] sm:$0xff]
  %v135 = vld [vmem:[%s0 + $0x358] sm:$0xff]
  %v136 = vld [vmem:[%s0 + $0x360] sm:$0xff]
  %v137 = vld [vmem:[%s0 + $0x368] sm:$0xff]
  %v138 = vld [vmem:[%s0 + $0x370] sm:$0xff]
  %v139 = vld [vmem:[%s0 + $0x378] sm:$0xff]
  %v140 = vld [vmem:[%s0 + $0x380] sm:$0xff]
  %v141 = vld [vmem:[%s0 + $0x388] sm:$0xff]
  %v142 = vld [vmem:[%s0 + $0x390] sm:$0xff]
  %v143 = vld [vmem:[%s0 + $0x398] sm:$0xff]
  %v144 = vld [vmem:[%s0 + $0x3a0] sm:$0xff]
  %v145 = vld [vmem:[%s0 + $0x3a8] sm:$0xff]
  %v146 = vld [vmem:[%s0 + $0x3b0] sm:$0xff]
  %v147 = vld [vmem:[%s0 + $0x3b8] sm:$0xff]
  %v148 = vld [vmem:[%s0 + $0x3c0] sm:$0xff]
  %v149 = vld [vmem:[%s0 + $0x3c8] sm:$0xff]
  %v150 = vld [vmem:[%s0 + $0x3d0] sm:$0xff]
  %v151 = vld [vmem:[%s0 + $0x3d8] sm:$0xff]
  %v152 = vld [vmem:[%s0 + $0x3e0] sm:$0xff]
  %v153 = vld [vmem:[%s0 + $0x3e8] sm:$0xff]
  %v154 = vld [vmem:[%s0 + $0x3f0] sm:$0xff]
  %v155 = vld [vmem:[%s0 + $0x3f8] sm:$0xff]
  %v156 = vld [vmem:[%s0 + $0x400] sm:$0xff]
  %v157 = vld [vmem:[%s0 + $0x408] sm:$0xff]
  %v158 = vld [vmem:[%s0 + $0x410] sm:$0xff]
  %v159 = vld [vmem:[%s0 + $0x418] sm:$0xff]
  %v160 = vld [vmem:[%s0 + $0x420] sm:$0xff]
  %v161 = vld [vmem:[%s0 + $0x428] sm:$0xff]
  %v162 = vld [vmem:[%s0 + $0x430] sm:$0xff]
  %v163 = vld [vmem:[%s0 + $0x438] sm:$0xff]
  %v164 = vld [vmem:[%s0 + $0x440] sm:$0xff]
  %v165 = vld [vmem:[%s0 + $0x448] sm:$0xff]
  %v166 = vld [vmem:[%s0 + $0x450] sm:$0xff]
  %v167 = vld [vmem:[%s0 + $0x458] sm:$0xff]
  %v168 = vld [vmem:[%s0 + $0x460] sm:$0xff]
  %v169 = vld [vmem:[%s0 + $0x468] sm:$0xff]
  %v170 = vld [vmem:[%s0 + $0x470] sm:$0xff]
  %v171 = vld [vmem:[%s0 + $0x478] sm:$0xff]
  %v172 = vld [vmem:[%s0 + $0x480] sm:$0xff]
  %v173 = vld [vmem:[%s0 + $0x488] sm:$0xff]
  %v174 = vld [vmem:[%s0 + $0x490] sm:$0xff]
  %v175 = vld [vmem:[%s0 + $0x498] sm:$0xff]
  %v176 = vld [vmem:[%s0 + $0x4a0] sm:$0xff]
  %v177 = vld [vmem:[%s0 + $0x4a8] sm:$0xff]
  %v178 = vld [vmem:[%s0 + $0x4b0] sm:$0xff]
  %v179 = vld [vmem:[%s0 + $0x4b8] sm:$0xff]
  %v180 = vld [vmem:[%s0 + $0x4c0] sm:$0xff]
  %v181 = vld [vmem:[%s0 + $0x4c8] sm:$0xff]
  %v182 = vld [vmem:[%s0 + $0x4d0] sm:$0xff]
  %v183 = vld [vmem:[%s0 + $0x4d8] sm:$0xff]
  %v184 = vld [vmem:[%s0 + $0x4e0] sm:$0xff]
  %v185 = vld [vmem:[%s0 + $0x4e8] sm:$0xff]
  %v186 = vld [vmem:[%s0 + $0x4f0] sm:$0xff]
  %v187 = vld [vmem:[%s0 + $0x4f8] sm:$0xff]
  %v188 = vld [vmem:[%s0 + $0x500] sm:$0xff]
  %v189 = vld [vmem:[%s0 + $0x508] sm:$0xff]
  %v190 = vld [vmem:[%s0 + $0x510] sm:$0xff]
  %v191 = vld [vmem:[%s0 + $0x518] sm:$0xff]
  %v192 = vld [vmem:[%s0 + $0x520] sm:$0xff]
  %v193 = vld [vmem:[%s0 + $0x528] sm:$0xff]
  %v194 = vld [vmem:[%s0 + $0x530] sm:$0xff]
  %v195 = vld [vmem:[%s0 + $0x538] sm:$0xff]
  %v196 = vld [vmem:[%s0 + $0x540] sm:$0xff]
  %v197 = vld [vmem:[%s0 + $0x548] sm:$0xff]
  %v198 = vld [vmem:[%s0 + $0x550] sm:$0xff]
  %v199 = vld [vmem:[%s0 + $0x558] sm:$0xff]
  %v200 = vld [vmem:[%s0 + $0x560] sm:$0xff]
  %v201 = vld [vmem:[%s0 + $0x568] sm:$0xff]
  %v202 = vld [vmem:[%s0 + $0x570] sm:$0xff]
  %v203 = vld [vmem:[%s0 + $0x578] sm:$0xff]
  %v204 = vld [vmem:[%s0 + $0x580] sm:$0xff]
  %v205 = vld [vmem:[%s0 + $0x588] sm:$0xff]
  %v206 = vld [vmem:[%s0 + $0x590] sm:$0xff]
  %v207 = vld [vmem:[%s0 + $0x598] sm:$0xff]
  %v208 = vld [vmem:[%s0 + $0x5a0] sm:$0xff]
  %v209 = vld [vmem:[%s0 + $0x5a8] sm:$0xff]
  %v210 = vld [vmem:[%s0 + $0x5b0] sm:$0xff]
  %v211 = vld [vmem:[%s0 + $0x5b8] sm:$0xff]
  %v212 = vld [vmem:[%s0 + $0x5c0] sm:$0xff]
  %v213 = vld [vmem:[%s0 + $0x5c8] sm:$0xff]
  %v214 = vld [vmem:[%s0 + $0x5d0] sm:$0xff]
  %v215 = vld [vmem:[%s0 + $0x5d8] sm:$0xff]
  %v216 = vld [vmem:[%s0 + $0x5e0] sm:$0xff]
  %v217 = vld [vmem:[%s0 + $0x5e8] sm:$0xff]
  %v218 = vld [vmem:[%s0 + $0x5f0] sm:$0xff]
  %v219 = vld [vmem:[%s0 + $0x5f8] sm:$0xff]
  %v220 = vld [vmem:[%s0 + $0x600] sm:$0xff]
  %v221 = vld [vmem:[%s0 + $0x608] sm:$0xff]
  %v222 = vld [vmem:[%s0 + $0x610] sm:$0xff]
  %v223 = vld [vmem:[%s0 + $0x618] sm:$0xff]
  %v224 = vld [vmem:[%s0 + $0x620] sm:$0xff]
  %v225 = vld [vmem:[%s0 + $0x628] sm:$0xff]
  %v226 = vld [vmem:[%s0 + $0x630] sm:$0xff]
  %v227 = vld [vmem:[%s0 + $0x638] sm:$0xff]
  %v228 = vld [vmem:[%s0 + $0x640] sm:$0xff]
  %v229 = vld [vmem:[%s0 + $0x648] sm:$0xff]
  %v230 = vld [vmem:[%s0 + $0x650] sm:$0xff]
  %v231 = vld [vmem:[%s0 + $0x658] sm:$0xff]
  %v232 = vld [vmem:[%s0 + $0x660] sm:$0xff]
  %v233 = vld [vmem:[%s0 + $0x668] sm:$0xff]
  %v234 = vld [vmem:[%s0 + $0x670] sm:$0xff]
  %v235 = vld [vmem:[%s0 + $0x678] sm:$0xff]
  %v236 = vld [vmem:[%s0 + $0x680] sm:$0xff]
  %v237 = vld [vmem:[%s0 + $0x688] sm:$0xff]
  %v238 = vld [vmem:[%s0 + $0x690] sm:$0xff]
  %v239 = vld [vmem:[%s0 + $0x698] sm:$0xff]
  %v240 = vld [vmem:[%s0 + $0x6a0] sm:$0xff]
  %v241 = vld [vmem:[%s0 + $0x6a8] sm:$0xff]
  %v242 = vld [vmem:[%s0 + $0x6b0] sm:$0xff]
  %v243 = vld [vmem:[%s0 + $0x6b8] sm:$0xff]
  %v244 = vld [vmem:[%s0 + $0x6c0] sm:$0xff]
  %v245 = vld [vmem:[%s0 + $0x6c8] sm:$0xff]
  %v246 = vld [vmem:[%s0 + $0x6d0] sm:$0xff]
  %v247 = vld [vmem:[%s0 + $0x6d8] sm:$0xff]
  %v248 = vld [vmem:[%s0 + $0x6e0] sm:$0xff]
  %v249 = vld [vmem:[%s0 + $0x6e8] sm:$0xff]
  %v250 = vld [vmem:[%s0 + $0x6f0] sm:$0xff]
  %v251 = vld [vmem:[%s0 + $0x6f8] sm:$0xff]
  %v252 = vld [vmem:[%s0 + $0x700] sm:$0xff]
  %v253 = vld [vmem:[%s0 + $0x708] sm:$0xff]
  %v254 = vld [vmem:[%s0 + $0x710] sm:$0xff]
  %v255 = vld [vmem:[%s0 + $0x718] sm:$0xff]
  %v256 = vld [vmem:[%s0 + $0x720] sm:$0xff]
  %v257 = vld [vmem:[%s0 + $0x728] sm:$0xff]
  %v258 = vld [vmem:[%s0 + $0x730] sm:$0xff]
  %v259 = vld [vmem:[%s0 + $0x738] sm:$0xff]
  %v260 = vld [vmem:[%s0 + $0x740] sm:$0xff]
  %v261 = vld [vmem:[%s0 + $0x748] sm:$0xff]
  %v262 = vld [vmem:[%s0 + $0x750] sm:$0xff]
  %v263 = vld [vmem:[%s0 + $0x758] sm:$0xff]
  %v264 = vld [vmem:[%s0 + $0x760] sm:$0xff]
  %v265 = vld [vmem:[%s0 + $0x768] sm:$0xff]
  %v266 = vld [vmem:[%s0 + $0x770] sm:$0xff]
  %v267 = vld [vmem:[%s0 + $0x778] sm:$0xff]
  %v268 = vld [vmem:[%s0 + $0x780] sm:$0xff]
  %v269 = vld [vmem:[%s0 + $0x788] sm:$0xff]
  %v270 = vld [vmem:[%s0 + $0x790] sm:$0xff]
  %v271 = vld [vmem:[%s0 + $0x798] sm:$0xff]
  %v272 = vld [vmem:[%s0 + $0x7a0] sm:$0xff]
  %v273 = vld [vmem:[%s0 + $0x7a8] sm:$0xff]
  %v274 = vld [vmem:[%s0 + $0x7b0] sm:$0xff]
  %v275 = vld [vmem:[%s0 + $0x7b8] sm:$0xff]
  %v276 = vld [vmem:[%s0 + $0x7c0] sm:$0xff]
  %v277 = vld [vmem:[%s0 + $0x7c8] sm:$0xff]
  %v278 = vld [vmem:[%s0 + $0x7d0] sm:$0xff]
  %v279 = vld [vmem:[%s0 + $0x7d8] sm:$0xff]
  %v280 = vld [vmem:[%s0 + $0x7e0] sm:$0xff]
  %v281 = vld [vmem:[%s0 + $0x7e8] sm:$0xff]
  %v282 = vld [vmem:[%s0 + $0x7f0] sm:$0xff]
  %v283 = vld [vmem:[%s0 + $0x7f8] sm:$0xff]
  %v284 = vld [vmem:[%s2] sm:$0xff]
  %v285 = vld [vmem:[%s2 + $0x8] sm:$0xff]
  %v286 = vld [vmem:[%s2 + $0x10] sm:$0xf]
  %v287 = vld [vmem:[%s3] sm:$0x1]
  %v289 = vlaneseq
  %v290 = vshrl.u32 %v289, 7
  %v291 = vsub.s32 0, %v290
  %v292 = vrot.slane %v287, %v291
  %vm294 = vcmask 162816
  %v296 = vsel %vm294, %v28, 0
  %v299 = vsel %vm294, %v29, 0
  %v302 = vsel %vm294, %v30, 0
  %v305 = vsel %vm294, %v31, 0
  %v308 = vsel %vm294, %v32, 0
  %v311 = vsel %vm294, %v33, 0
  %v314 = vsel %vm294, %v34, 0
  %v317 = vsel %vm294, %v35, 0
  %v320 = vsel %vm294, %v36, 0
  %v323 = vsel %vm294, %v37, 0
  %v326 = vsel %vm294, %v38, 0
  %v329 = vsel %vm294, %v39, 0
  %v332 = vsel %vm294, %v40, 0
  %v335 = vsel %vm294, %v41, 0
  %v338 = vsel %vm294, %v42, 0
  %v341 = vsel %vm294, %v43, 0
  %v344 = vsel %vm294, %v44, 0
  %v347 = vsel %vm294, %v45, 0
  %v350 = vsel %vm294, %v46, 0
  %v353 = vsel %vm294, %v47, 0
  %v356 = vsel %vm294, %v48, 0
  %v359 = vsel %vm294, %v49, 0
  %v362 = vsel %vm294, %v50, 0
  %v365 = vsel %vm294, %v51, 0
  %v368 = vsel %vm294, %v52, 0
  %v371 = vsel %vm294, %v53, 0
  %v374 = vsel %vm294, %v54, 0
  %v377 = vsel %vm294, %v55, 0
  %v380 = vsel %vm294, %v56, 0
  %v383 = vsel %vm294, %v57, 0
  %v386 = vsel %vm294, %v58, 0
  %v389 = vsel %vm294, %v59, 0
  %v392 = vsel %vm294, %v60, 0
  %v395 = vsel %vm294, %v61, 0
  %v398 = vsel %vm294, %v62, 0
  %v401 = vsel %vm294, %v63, 0
  %v404 = vsel %vm294, %v64, 0
  %v407 = vsel %vm294, %v65, 0
  %v410 = vsel %vm294, %v66, 0
  %v413 = vsel %vm294, %v67, 0
  %v416 = vsel %vm294, %v68, 0
  %v419 = vsel %vm294, %v69, 0
  %v422 = vsel %vm294, %v70, 0
  %v425 = vsel %vm294, %v71, 0
  %v428 = vsel %vm294, %v72, 0
  %v431 = vsel %vm294, %v73, 0
  %v434 = vsel %vm294, %v74, 0
  %v437 = vsel %vm294, %v75, 0
  %v440 = vsel %vm294, %v76, 0
  %v443 = vsel %vm294, %v77, 0
  %v446 = vsel %vm294, %v78, 0
  %v449 = vsel %vm294, %v79, 0
  %v452 = vsel %vm294, %v80, 0
  %v455 = vsel %vm294, %v81, 0
  %v458 = vsel %vm294, %v82, 0
  %v461 = vsel %vm294, %v83, 0
  %v464 = vsel %vm294, %v84, 0
  %v467 = vsel %vm294, %v85, 0
  %v470 = vsel %vm294, %v86, 0
  %v473 = vsel %vm294, %v87, 0
  %v476 = vsel %vm294, %v88, 0
  %v479 = vsel %vm294, %v89, 0
  %v482 = vsel %vm294, %v90, 0
  %v485 = vsel %vm294, %v91, 0
  %v488 = vsel %vm294, %v92, 0
  %v491 = vsel %vm294, %v93, 0
  %v494 = vsel %vm294, %v94, 0
  %v497 = vsel %vm294, %v95, 0
  %v500 = vsel %vm294, %v96, 0
  %v503 = vsel %vm294, %v97, 0
  %v506 = vsel %vm294, %v98, 0
  %v509 = vsel %vm294, %v99, 0
  %v512 = vsel %vm294, %v100, 0
  %v515 = vsel %vm294, %v101, 0
  %v518 = vsel %vm294, %v102, 0
  %v521 = vsel %vm294, %v103, 0
  %v524 = vsel %vm294, %v104, 0
  %v527 = vsel %vm294, %v105, 0
  %v530 = vsel %vm294, %v106, 0
  %v533 = vsel %vm294, %v107, 0
  %v536 = vsel %vm294, %v108, 0
  %v539 = vsel %vm294, %v109, 0
  %v542 = vsel %vm294, %v110, 0
  %v545 = vsel %vm294, %v111, 0
  %v548 = vsel %vm294, %v112, 0
  %v551 = vsel %vm294, %v113, 0
  %v554 = vsel %vm294, %v114, 0
  %v557 = vsel %vm294, %v115, 0
  %v560 = vsel %vm294, %v116, 0
  %v563 = vsel %vm294, %v117, 0
  %v566 = vsel %vm294, %v118, 0
  %v569 = vsel %vm294, %v119, 0
  %v572 = vsel %vm294, %v120, 0
  %v575 = vsel %vm294, %v121, 0
  %v578 = vsel %vm294, %v122, 0
  %v581 = vsel %vm294, %v123, 0
  %v584 = vsel %vm294, %v124, 0
  %v587 = vsel %vm294, %v125, 0
  %v590 = vsel %vm294, %v126, 0
  %v593 = vsel %vm294, %v127, 0
  %v596 = vsel %vm294, %v128, 0
  %v599 = vsel %vm294, %v129, 0
  %v602 = vsel %vm294, %v130, 0
  %v605 = vsel %vm294, %v131, 0
  %v608 = vsel %vm294, %v132, 0
  %v611 = vsel %vm294, %v133, 0
  %v614 = vsel %vm294, %v134, 0
  %v617 = vsel %vm294, %v135, 0
  %v620 = vsel %vm294, %v136, 0
  %v623 = vsel %vm294, %v137, 0
  %v626 = vsel %vm294, %v138, 0
  %v629 = vsel %vm294, %v139, 0
  %v632 = vsel %vm294, %v140, 0
  %v635 = vsel %vm294, %v141, 0
  %v638 = vsel %vm294, %v142, 0
  %v641 = vsel %vm294, %v143, 0
  %v644 = vsel %vm294, %v144, 0
  %v647 = vsel %vm294, %v145, 0
  %v650 = vsel %vm294, %v146, 0
  %v653 = vsel %vm294, %v147, 0
  %v656 = vsel %vm294, %v148, 0
  %v659 = vsel %vm294, %v149, 0
  %v662 = vsel %vm294, %v150, 0
  %v665 = vsel %vm294, %v151, 0
  %v668 = vsel %vm294, %v152, 0
  %v671 = vsel %vm294, %v153, 0
  %v674 = vsel %vm294, %v154, 0
  %v677 = vsel %vm294, %v155, 0
  %v680 = vsel %vm294, %v156, 0
  %v683 = vsel %vm294, %v157, 0
  %v686 = vsel %vm294, %v158, 0
  %v689 = vsel %vm294, %v159, 0
  %v692 = vsel %vm294, %v160, 0
  %v695 = vsel %vm294, %v161, 0
  %v698 = vsel %vm294, %v162, 0
  %v701 = vsel %vm294, %v163, 0
  %v704 = vsel %vm294, %v164, 0
  %v707 = vsel %vm294, %v165, 0
  %v710 = vsel %vm294, %v166, 0
  %v713 = vsel %vm294, %v167, 0
  %v716 = vsel %vm294, %v168, 0
  %v719 = vsel %vm294, %v169, 0
  %v722 = vsel %vm294, %v170, 0
  %v725 = vsel %vm294, %v171, 0
  %v728 = vsel %vm294, %v172, 0
  %v731 = vsel %vm294, %v173, 0
  %v734 = vsel %vm294, %v174, 0
  %v737 = vsel %vm294, %v175, 0
  %v740 = vsel %vm294, %v176, 0
  %v743 = vsel %vm294, %v177, 0
  %v746 = vsel %vm294, %v178, 0
  %v749 = vsel %vm294, %v179, 0
  %v752 = vsel %vm294, %v180, 0
  %v755 = vsel %vm294, %v181, 0
  %v758 = vsel %vm294, %v182, 0
  %v761 = vsel %vm294, %v183, 0
  %v764 = vsel %vm294, %v184, 0
  %v767 = vsel %vm294, %v185, 0
  %v770 = vsel %vm294, %v186, 0
  %v773 = vsel %vm294, %v187, 0
  %v776 = vsel %vm294, %v188, 0
  %v779 = vsel %vm294, %v189, 0
  %v782 = vsel %vm294, %v190, 0
  %v785 = vsel %vm294, %v191, 0
  %v788 = vsel %vm294, %v192, 0
  %v791 = vsel %vm294, %v193, 0
  %v794 = vsel %vm294, %v194, 0
  %v797 = vsel %vm294, %v195, 0
  %v800 = vsel %vm294, %v196, 0
  %v803 = vsel %vm294, %v197, 0
  %v806 = vsel %vm294, %v198, 0
  %v809 = vsel %vm294, %v199, 0
  %v812 = vsel %vm294, %v200, 0
  %v815 = vsel %vm294, %v201, 0
  %v818 = vsel %vm294, %v202, 0
  %v821 = vsel %vm294, %v203, 0
  %v824 = vsel %vm294, %v204, 0
  %v827 = vsel %vm294, %v205, 0
  %v830 = vsel %vm294, %v206, 0
  %v833 = vsel %vm294, %v207, 0
  %v836 = vsel %vm294, %v208, 0
  %v839 = vsel %vm294, %v209, 0
  %v842 = vsel %vm294, %v210, 0
  %v845 = vsel %vm294, %v211, 0
  %v848 = vsel %vm294, %v212, 0
  %v851 = vsel %vm294, %v213, 0
  %v854 = vsel %vm294, %v214, 0
  %v857 = vsel %vm294, %v215, 0
  %v860 = vsel %vm294, %v216, 0
  %v863 = vsel %vm294, %v217, 0
  %v866 = vsel %vm294, %v218, 0
  %v869 = vsel %vm294, %v219, 0
  %v872 = vsel %vm294, %v220, 0
  %v875 = vsel %vm294, %v221, 0
  %v878 = vsel %vm294, %v222, 0
  %v881 = vsel %vm294, %v223, 0
  %v884 = vsel %vm294, %v224, 0
  %v887 = vsel %vm294, %v225, 0
  %v890 = vsel %vm294, %v226, 0
  %v893 = vsel %vm294, %v227, 0
  %v896 = vsel %vm294, %v228, 0
  %v899 = vsel %vm294, %v229, 0
  %v902 = vsel %vm294, %v230, 0
  %v905 = vsel %vm294, %v231, 0
  %v908 = vsel %vm294, %v232, 0
  %v911 = vsel %vm294, %v233, 0
  %v914 = vsel %vm294, %v234, 0
  %v917 = vsel %vm294, %v235, 0
  %v920 = vsel %vm294, %v236, 0
  %v923 = vsel %vm294, %v237, 0
  %v926 = vsel %vm294, %v238, 0
  %v929 = vsel %vm294, %v239, 0
  %v932 = vsel %vm294, %v240, 0
  %v935 = vsel %vm294, %v241, 0
  %v938 = vsel %vm294, %v242, 0
  %v941 = vsel %vm294, %v243, 0
  %v944 = vsel %vm294, %v244, 0
  %v947 = vsel %vm294, %v245, 0
  %v950 = vsel %vm294, %v246, 0
  %v953 = vsel %vm294, %v247, 0
  %v956 = vsel %vm294, %v248, 0
  %v959 = vsel %vm294, %v249, 0
  %v962 = vsel %vm294, %v250, 0
  %v965 = vsel %vm294, %v251, 0
  %v968 = vsel %vm294, %v252, 0
  %v971 = vsel %vm294, %v253, 0
  %v974 = vsel %vm294, %v254, 0
  %v977 = vsel %vm294, %v255, 0
  %v980 = vsel %vm294, %v256, 0
  %v983 = vsel %vm294, %v257, 0
  %v986 = vsel %vm294, %v258, 0
  %v989 = vsel %vm294, %v259, 0
  %v992 = vsel %vm294, %v260, 0
  %v995 = vsel %vm294, %v261, 0
  %v998 = vsel %vm294, %v262, 0
  %v1001 = vsel %vm294, %v263, 0
  %v1004 = vsel %vm294, %v264, 0
  %v1007 = vsel %vm294, %v265, 0
  %v1010 = vsel %vm294, %v266, 0
  %v1013 = vsel %vm294, %v267, 0
  %v1016 = vsel %vm294, %v268, 0
  %v1019 = vsel %vm294, %v269, 0
  %v1022 = vsel %vm294, %v270, 0
  %v1025 = vsel %vm294, %v271, 0
  %v1028 = vsel %vm294, %v272, 0
  %v1031 = vsel %vm294, %v273, 0
  %v1034 = vsel %vm294, %v274, 0
  %v1037 = vsel %vm294, %v275, 0
  %v1040 = vsel %vm294, %v276, 0
  %v1043 = vsel %vm294, %v277, 0
  %v1046 = vsel %vm294, %v278, 0
  %v1049 = vsel %vm294, %v279, 0
  %v1052 = vsel %vm294, %v280, 0
  %v1055 = vsel %vm294, %v281, 0
  %v1058 = vsel %vm294, %v282, 0
  %v1061 = vsel %vm294, %v283, 0
  %vm1063 = vcmask 1043456
  %v1065 = vsel %vm1063, %v286, 0
  %1067 = vmatprep.subr.mxu0 0.0
  %1068 = vmatpush1.msra.mxu0 0.0
  %1069 = vmatprep.subr.mxu0 0.0
  %1070 = vmatpush1.msra.mxu0 0.0
  %1071 = vmatprep.subr.mxu0 0.0
  %1072 = vmatpush1.msra.mxu0 0.0
  %1073 = vmatprep.subr.mxu0 0.0
  %1074 = vmatpush1.msra.mxu0 0.0
  %1075 = vmatprep.subr.mxu0 0.0
  %1076 = vmatpush1.msra.mxu0 0.0
  %1077 = vmatprep.subr.mxu0 0.0
  %1078 = vmatpush1.msra.mxu0 0.0
  %1079 = vmatprep.subr.mxu0 0.0
  %1080 = vmatpush1.msra.mxu0 0.0
  %1081 = vmatprep.subr.mxu0 0.0
  %1082 = vmatpush1.msra.mxu0 0.0
  %1083 = vmatprep.subr.mxu0 0.0
  %1084 = vmatpush1.msra.mxu0 0.0
  %1085 = vmatprep.subr.mxu0 0.0
  %1086 = vmatpush1.msra.mxu0 0.0
  %1087 = vmatprep.subr.mxu0 0.0
  %1088 = vmatpush1.msra.mxu0 0.0
  %1089 = vmatprep.subr.mxu0 0.0
  %1090 = vmatpush1.msra.mxu0 0.0
  %1091 = vmatprep.subr.mxu0 0.0
  %1092 = vmatpush1.msra.mxu0 0.0
  %1093 = vmatprep.subr.mxu0 0.0
  %1094 = vmatpush1.msra.mxu0 %v1065
  %1095 = vmatprep.subr.mxu0 0.0
  %1096 = vmatpush1.msra.mxu0 %v285
  %1097 = vmatprep.subr.mxu0 0.0
  %1098 = vmatpush1.msra.mxu0 %v284
  %1099 = vmatprep.subr.mxu0 0.0
  %1100 = vmatpush2.msra.mxu0 0.0
  %1101 = vmatprep.subr.mxu0 0.0
  %1102 = vmatpush2.msra.mxu0 0.0
  %1103 = vmatprep.subr.mxu0 0.0
  %1104 = vmatpush2.msra.mxu0 0.0
  %1105 = vmatprep.subr.mxu0 0.0
  %1106 = vmatpush2.msra.mxu0 0.0
  %1107 = vmatprep.subr.mxu0 0.0
  %1108 = vmatpush2.msra.mxu0 0.0
  %1109 = vmatprep.subr.mxu0 0.0
  %1110 = vmatpush2.msra.mxu0 0.0
  %1111 = vmatprep.subr.mxu0 0.0
  %1112 = vmatpush2.msra.mxu0 0.0
  %1113 = vmatprep.subr.mxu0 0.0
  %1114 = vmatpush2.msra.mxu0 0.0
  %1115 = vmatprep.subr.mxu0 0.0
  %1116 = vmatpush2.msra.mxu0 0.0
  %1117 = vmatprep.subr.mxu0 0.0
  %1118 = vmatpush2.msra.mxu0 0.0
  %1119 = vmatprep.subr.mxu0 0.0
  %1120 = vmatpush2.msra.mxu0 0.0
  %1121 = vmatprep.subr.mxu0 0.0
  %1122 = vmatpush2.msra.mxu0 0.0
  %1123 = vmatprep.subr.mxu0 0.0
  %1124 = vmatpush2.msra.mxu0 0.0
  %1125 = vmatprep.subr.mxu0 0.0
  %1126 = vmatpush2.msra.mxu0 0.0
  %1127 = vmatprep.subr.mxu0 0.0
  %1128 = vmatpush2.msra.mxu0 0.0
  %1129 = vmatprep.subr.mxu0 0.0
  %1130 = vmatpush2.msra.mxu0 0.0
  %1131 = vmatprep.mubr.f32.mxu0 0.0
  %1132 = vmatmul.mubr.f32.gmra.mxu0 %v296
  %v1133 = vpop.f32.mrf.mxu0
  %v1134 = vadd.f32 %v292, %v1133
  %v1135 = vpop.f32.mrf.mxu0
  %1136 = vmatprep.mubr.f32.mxu0 0.0
  %1137 = vmatmul.mubr.f32.gmra.mxu0 %v299
  %v1138 = vpop.f32.mrf.mxu0
  %v1139 = vadd.f32 %v292, %v1138
  %v1140 = vpop.f32.mrf.mxu0
  %1141 = vmatprep.mubr.f32.mxu0 0.0
  %1142 = vmatmul.mubr.f32.gmra.mxu0 %v302
  %v1143 = vpop.f32.mrf.mxu0
  %v1144 = vadd.f32 %v292, %v1143
  %v1145 = vpop.f32.mrf.mxu0
  %1146 = vmatprep.mubr.f32.mxu0 0.0
  %1147 = vmatmul.mubr.f32.gmra.mxu0 %v305
  %v1148 = vpop.f32.mrf.mxu0
  %v1149 = vadd.f32 %v292, %v1148
  %v1150 = vpop.f32.mrf.mxu0
  %1151 = vmatprep.mubr.f32.mxu0 0.0
  %1152 = vmatmul.mubr.f32.gmra.mxu0 %v308
  %v1153 = vpop.f32.mrf.mxu0
  %v1154 = vadd.f32 %v292, %v1153
  %v1155 = vpop.f32.mrf.mxu0
  %1156 = vmatprep.mubr.f32.mxu0 0.0
  %1157 = vmatmul.mubr.f32.gmra.mxu0 %v311
  %v1158 = vpop.f32.mrf.mxu0
  %v1159 = vadd.f32 %v292, %v1158
  %v1160 = vpop.f32.mrf.mxu0
  %1161 = vmatprep.mubr.f32.mxu0 0.0
  %1162 = vmatmul.mubr.f32.gmra.mxu0 %v314
  %v1163 = vpop.f32.mrf.mxu0
  %v1164 = vadd.f32 %v292, %v1163
  %v1165 = vpop.f32.mrf.mxu0
  %1166 = vmatprep.mubr.f32.mxu0 0.0
  %1167 = vmatmul.mubr.f32.gmra.mxu0 %v317
  %v1168 = vpop.f32.mrf.mxu0
  %v1169 = vadd.f32 %v292, %v1168
  %v1170 = vpop.f32.mrf.mxu0
  %1171 = vmatprep.mubr.f32.mxu0 0.0
  %1172 = vmatmul.mubr.f32.gmra.mxu0 %v320
  %v1173 = vpop.f32.mrf.mxu0
  %v1174 = vadd.f32 %v292, %v1173
  %v1175 = vpop.f32.mrf.mxu0
  %1176 = vmatprep.mubr.f32.mxu0 0.0
  %1177 = vmatmul.mubr.f32.gmra.mxu0 %v323
  %v1178 = vpop.f32.mrf.mxu0
  %v1179 = vadd.f32 %v292, %v1178
  %v1180 = vpop.f32.mrf.mxu0
  %1181 = vmatprep.mubr.f32.mxu0 0.0
  %1182 = vmatmul.mubr.f32.gmra.mxu0 %v326
  %v1183 = vpop.f32.mrf.mxu0
  %v1184 = vadd.f32 %v292, %v1183
  %v1185 = vpop.f32.mrf.mxu0
  %1186 = vmatprep.mubr.f32.mxu0 0.0
  %1187 = vmatmul.mubr.f32.gmra.mxu0 %v329
  %v1188 = vpop.f32.mrf.mxu0
  %v1189 = vadd.f32 %v292, %v1188
  %v1190 = vpop.f32.mrf.mxu0
  %1191 = vmatprep.mubr.f32.mxu0 0.0
  %1192 = vmatmul.mubr.f32.gmra.mxu0 %v332
  %v1193 = vpop.f32.mrf.mxu0
  %v1194 = vadd.f32 %v292, %v1193
  %v1195 = vpop.f32.mrf.mxu0
  %1196 = vmatprep.mubr.f32.mxu0 0.0
  %1197 = vmatmul.mubr.f32.gmra.mxu0 %v335
  %v1198 = vpop.f32.mrf.mxu0
  %v1199 = vadd.f32 %v292, %v1198
  %v1200 = vpop.f32.mrf.mxu0
  %1201 = vmatprep.mubr.f32.mxu0 0.0
  %1202 = vmatmul.mubr.f32.gmra.mxu0 %v338
  %v1203 = vpop.f32.mrf.mxu0
  %v1204 = vadd.f32 %v292, %v1203
  %v1205 = vpop.f32.mrf.mxu0
  %1206 = vmatprep.mubr.f32.mxu0 0.0
  %1207 = vmatmul.mubr.f32.gmra.mxu0 %v341
  %v1208 = vpop.f32.mrf.mxu0
  %v1209 = vadd.f32 %v292, %v1208
  %v1210 = vpop.f32.mrf.mxu0
  %1211 = vmatprep.mubr.f32.mxu0 0.0
  %1212 = vmatmul.mubr.f32.gmra.mxu0 %v344
  %v1213 = vpop.f32.mrf.mxu0
  %v1214 = vadd.f32 %v292, %v1213
  %v1215 = vpop.f32.mrf.mxu0
  %1216 = vmatprep.mubr.f32.mxu0 0.0
  %1217 = vmatmul.mubr.f32.gmra.mxu0 %v347
  %v1218 = vpop.f32.mrf.mxu0
  %v1219 = vadd.f32 %v292, %v1218
  %v1220 = vpop.f32.mrf.mxu0
  %1221 = vmatprep.mubr.f32.mxu0 0.0
  %1222 = vmatmul.mubr.f32.gmra.mxu0 %v350
  %v1223 = vpop.f32.mrf.mxu0
  %v1224 = vadd.f32 %v292, %v1223
  %v1225 = vpop.f32.mrf.mxu0
  %1226 = vmatprep.mubr.f32.mxu0 0.0
  %1227 = vmatmul.mubr.f32.gmra.mxu0 %v353
  %v1228 = vpop.f32.mrf.mxu0
  %v1229 = vadd.f32 %v292, %v1228
  %v1230 = vpop.f32.mrf.mxu0
  %1231 = vmatprep.mubr.f32.mxu0 0.0
  %1232 = vmatmul.mubr.f32.gmra.mxu0 %v356
  %v1233 = vpop.f32.mrf.mxu0
  %v1234 = vadd.f32 %v292, %v1233
  %v1235 = vpop.f32.mrf.mxu0
  %1236 = vmatprep.mubr.f32.mxu0 0.0
  %1237 = vmatmul.mubr.f32.gmra.mxu0 %v359
  %v1238 = vpop.f32.mrf.mxu0
  %v1239 = vadd.f32 %v292, %v1238
  %v1240 = vpop.f32.mrf.mxu0
  %1241 = vmatprep.mubr.f32.mxu0 0.0
  %1242 = vmatmul.mubr.f32.gmra.mxu0 %v362
  %v1243 = vpop.f32.mrf.mxu0
  %v1244 = vadd.f32 %v292, %v1243
  %v1245 = vpop.f32.mrf.mxu0
  %1246 = vmatprep.mubr.f32.mxu0 0.0
  %1247 = vmatmul.mubr.f32.gmra.mxu0 %v365
  %v1248 = vpop.f32.mrf.mxu0
  %v1249 = vadd.f32 %v292, %v1248
  %v1250 = vpop.f32.mrf.mxu0
  %1251 = vmatprep.mubr.f32.mxu0 0.0
  %1252 = vmatmul.mubr.f32.gmra.mxu0 %v368
  %v1253 = vpop.f32.mrf.mxu0
  %v1254 = vadd.f32 %v292, %v1253
  %v1255 = vpop.f32.mrf.mxu0
  %1256 = vmatprep.mubr.f32.mxu0 0.0
  %1257 = vmatmul.mubr.f32.gmra.mxu0 %v371
  %v1258 = vpop.f32.mrf.mxu0
  %v1259 = vadd.f32 %v292, %v1258
  %v1260 = vpop.f32.mrf.mxu0
  %1261 = vmatprep.mubr.f32.mxu0 0.0
  %1262 = vmatmul.mubr.f32.gmra.mxu0 %v374
  %v1263 = vpop.f32.mrf.mxu0
  %v1264 = vadd.f32 %v292, %v1263
  %v1265 = vpop.f32.mrf.mxu0
  %1266 = vmatprep.mubr.f32.mxu0 0.0
  %1267 = vmatmul.mubr.f32.gmra.mxu0 %v377
  %v1268 = vpop.f32.mrf.mxu0
  %v1269 = vadd.f32 %v292, %v1268
  %v1270 = vpop.f32.mrf.mxu0
  %1271 = vmatprep.mubr.f32.mxu0 0.0
  %1272 = vmatmul.mubr.f32.gmra.mxu0 %v380
  %v1273 = vpop.f32.mrf.mxu0
  %v1274 = vadd.f32 %v292, %v1273
  %v1275 = vpop.f32.mrf.mxu0
  %1276 = vmatprep.mubr.f32.mxu0 0.0
  %1277 = vmatmul.mubr.f32.gmra.mxu0 %v383
  %v1278 = vpop.f32.mrf.mxu0
  %v1279 = vadd.f32 %v292, %v1278
  %v1280 = vpop.f32.mrf.mxu0
  %1281 = vmatprep.mubr.f32.mxu0 0.0
  %1282 = vmatmul.mubr.f32.gmra.mxu0 %v386
  %v1283 = vpop.f32.mrf.mxu0
  %v1284 = vadd.f32 %v292, %v1283
  %v1285 = vpop.f32.mrf.mxu0
  %1286 = vmatprep.mubr.f32.mxu0 0.0
  %1287 = vmatmul.mubr.f32.gmra.mxu0 %v389
  %v1288 = vpop.f32.mrf.mxu0
  %v1289 = vadd.f32 %v292, %v1288
  %v1290 = vpop.f32.mrf.mxu0
  %1291 = vmatprep.mubr.f32.mxu0 0.0
  %1292 = vmatmul.mubr.f32.gmra.mxu0 %v392
  %v1293 = vpop.f32.mrf.mxu0
  %v1294 = vadd.f32 %v292, %v1293
  %v1295 = vpop.f32.mrf.mxu0
  %1296 = vmatprep.mubr.f32.mxu0 0.0
  %1297 = vmatmul.mubr.f32.gmra.mxu0 %v395
  %v1298 = vpop.f32.mrf.mxu0
  %v1299 = vadd.f32 %v292, %v1298
  %v1300 = vpop.f32.mrf.mxu0
  %1301 = vmatprep.mubr.f32.mxu0 0.0
  %1302 = vmatmul.mubr.f32.gmra.mxu0 %v398
  %v1303 = vpop.f32.mrf.mxu0
  %v1304 = vadd.f32 %v292, %v1303
  %v1305 = vpop.f32.mrf.mxu0
  %1306 = vmatprep.mubr.f32.mxu0 0.0
  %1307 = vmatmul.mubr.f32.gmra.mxu0 %v401
  %v1308 = vpop.f32.mrf.mxu0
  %v1309 = vadd.f32 %v292, %v1308
  %v1310 = vpop.f32.mrf.mxu0
  %1311 = vmatprep.mubr.f32.mxu0 0.0
  %1312 = vmatmul.mubr.f32.gmra.mxu0 %v404
  %v1313 = vpop.f32.mrf.mxu0
  %v1314 = vadd.f32 %v292, %v1313
  %v1315 = vpop.f32.mrf.mxu0
  %1316 = vmatprep.mubr.f32.mxu0 0.0
  %1317 = vmatmul.mubr.f32.gmra.mxu0 %v407
  %v1318 = vpop.f32.mrf.mxu0
  %v1319 = vadd.f32 %v292, %v1318
  %v1320 = vpop.f32.mrf.mxu0
  %1321 = vmatprep.mubr.f32.mxu0 0.0
  %1322 = vmatmul.mubr.f32.gmra.mxu0 %v410
  %v1323 = vpop.f32.mrf.mxu0
  %v1324 = vadd.f32 %v292, %v1323
  %v1325 = vpop.f32.mrf.mxu0
  %1326 = vmatprep.mubr.f32.mxu0 0.0
  %1327 = vmatmul.mubr.f32.gmra.mxu0 %v413
  %v1328 = vpop.f32.mrf.mxu0
  %v1329 = vadd.f32 %v292, %v1328
  %v1330 = vpop.f32.mrf.mxu0
  %1331 = vmatprep.mubr.f32.mxu0 0.0
  %1332 = vmatmul.mubr.f32.gmra.mxu0 %v416
  %v1333 = vpop.f32.mrf.mxu0
  %v1334 = vadd.f32 %v292, %v1333
  %v1335 = vpop.f32.mrf.mxu0
  %1336 = vmatprep.mubr.f32.mxu0 0.0
  %1337 = vmatmul.mubr.f32.gmra.mxu0 %v419
  %v1338 = vpop.f32.mrf.mxu0
  %v1339 = vadd.f32 %v292, %v1338
  %v1340 = vpop.f32.mrf.mxu0
  %1341 = vmatprep.mubr.f32.mxu0 0.0
  %1342 = vmatmul.mubr.f32.gmra.mxu0 %v422
  %v1343 = vpop.f32.mrf.mxu0
  %v1344 = vadd.f32 %v292, %v1343
  %v1345 = vpop.f32.mrf.mxu0
  %1346 = vmatprep.mubr.f32.mxu0 0.0
  %1347 = vmatmul.mubr.f32.gmra.mxu0 %v425
  %v1348 = vpop.f32.mrf.mxu0
  %v1349 = vadd.f32 %v292, %v1348
  %v1350 = vpop.f32.mrf.mxu0
  %1351 = vmatprep.mubr.f32.mxu0 0.0
  %1352 = vmatmul.mubr.f32.gmra.mxu0 %v428
  %v1353 = vpop.f32.mrf.mxu0
  %v1354 = vadd.f32 %v292, %v1353
  %v1355 = vpop.f32.mrf.mxu0
  %1356 = vmatprep.mubr.f32.mxu0 0.0
  %1357 = vmatmul.mubr.f32.gmra.mxu0 %v431
  %v1358 = vpop.f32.mrf.mxu0
  %v1359 = vadd.f32 %v292, %v1358
  %v1360 = vpop.f32.mrf.mxu0
  %1361 = vmatprep.mubr.f32.mxu0 0.0
  %1362 = vmatmul.mubr.f32.gmra.mxu0 %v434
  %v1363 = vpop.f32.mrf.mxu0
  %v1364 = vadd.f32 %v292, %v1363
  %v1365 = vpop.f32.mrf.mxu0
  %1366 = vmatprep.mubr.f32.mxu0 0.0
  %1367 = vmatmul.mubr.f32.gmra.mxu0 %v437
  %v1368 = vpop.f32.mrf.mxu0
  %v1369 = vadd.f32 %v292, %v1368
  %v1370 = vpop.f32.mrf.mxu0
  %1371 = vmatprep.mubr.f32.mxu0 0.0
  %1372 = vmatmul.mubr.f32.gmra.mxu0 %v440
  %v1373 = vpop.f32.mrf.mxu0
  %v1374 = vadd.f32 %v292, %v1373
  %v1375 = vpop.f32.mrf.mxu0
  %1376 = vmatprep.mubr.f32.mxu0 0.0
  %1377 = vmatmul.mubr.f32.gmra.mxu0 %v443
  %v1378 = vpop.f32.mrf.mxu0
  %v1379 = vadd.f32 %v292, %v1378
  %v1380 = vpop.f32.mrf.mxu0
  %1381 = vmatprep.mubr.f32.mxu0 0.0
  %1382 = vmatmul.mubr.f32.gmra.mxu0 %v446
  %v1383 = vpop.f32.mrf.mxu0
  %v1384 = vadd.f32 %v292, %v1383
  %v1385 = vpop.f32.mrf.mxu0
  %1386 = vmatprep.mubr.f32.mxu0 0.0
  %1387 = vmatmul.mubr.f32.gmra.mxu0 %v449
  %v1388 = vpop.f32.mrf.mxu0
  %v1389 = vadd.f32 %v292, %v1388
  %v1390 = vpop.f32.mrf.mxu0
  %1391 = vmatprep.mubr.f32.mxu0 0.0
  %1392 = vmatmul.mubr.f32.gmra.mxu0 %v452
  %v1393 = vpop.f32.mrf.mxu0
  %v1394 = vadd.f32 %v292, %v1393
  %v1395 = vpop.f32.mrf.mxu0
  %1396 = vmatprep.mubr.f32.mxu0 0.0
  %1397 = vmatmul.mubr.f32.gmra.mxu0 %v455
  %v1398 = vpop.f32.mrf.mxu0
  %v1399 = vadd.f32 %v292, %v1398
  %v1400 = vpop.f32.mrf.mxu0
  %1401 = vmatprep.mubr.f32.mxu0 0.0
  %1402 = vmatmul.mubr.f32.gmra.mxu0 %v458
  %v1403 = vpop.f32.mrf.mxu0
  %v1404 = vadd.f32 %v292, %v1403
  %v1405 = vpop.f32.mrf.mxu0
  %1406 = vmatprep.mubr.f32.mxu0 0.0
  %1407 = vmatmul.mubr.f32.gmra.mxu0 %v461
  %v1408 = vpop.f32.mrf.mxu0
  %v1409 = vadd.f32 %v292, %v1408
  %v1410 = vpop.f32.mrf.mxu0
  %1411 = vmatprep.mubr.f32.mxu0 0.0
  %1412 = vmatmul.mubr.f32.gmra.mxu0 %v464
  %v1413 = vpop.f32.mrf.mxu0
  %v1414 = vadd.f32 %v292, %v1413
  %v1415 = vpop.f32.mrf.mxu0
  %1416 = vmatprep.mubr.f32.mxu0 0.0
  %1417 = vmatmul.mubr.f32.gmra.mxu0 %v467
  %v1418 = vpop.f32.mrf.mxu0
  %v1419 = vadd.f32 %v292, %v1418
  %v1420 = vpop.f32.mrf.mxu0
  %1421 = vmatprep.mubr.f32.mxu0 0.0
  %1422 = vmatmul.mubr.f32.gmra.mxu0 %v470
  %v1423 = vpop.f32.mrf.mxu0
  %v1424 = vadd.f32 %v292, %v1423
  %v1425 = vpop.f32.mrf.mxu0
  %1426 = vmatprep.mubr.f32.mxu0 0.0
  %1427 = vmatmul.mubr.f32.gmra.mxu0 %v473
  %v1428 = vpop.f32.mrf.mxu0
  %v1429 = vadd.f32 %v292, %v1428
  %v1430 = vpop.f32.mrf.mxu0
  %1431 = vmatprep.mubr.f32.mxu0 0.0
  %1432 = vmatmul.mubr.f32.gmra.mxu0 %v476
  %v1433 = vpop.f32.mrf.mxu0
  %v1434 = vadd.f32 %v292, %v1433
  %v1435 = vpop.f32.mrf.mxu0
  %1436 = vmatprep.mubr.f32.mxu0 0.0
  %1437 = vmatmul.mubr.f32.gmra.mxu0 %v479
  %v1438 = vpop.f32.mrf.mxu0
  %v1439 = vadd.f32 %v292, %v1438
  %v1440 = vpop.f32.mrf.mxu0
  %1441 = vmatprep.mubr.f32.mxu0 0.0
  %1442 = vmatmul.mubr.f32.gmra.mxu0 %v482
  %v1443 = vpop.f32.mrf.mxu0
  %v1444 = vadd.f32 %v292, %v1443
  %v1445 = vpop.f32.mrf.mxu0
  %1446 = vmatprep.mubr.f32.mxu0 0.0
  %1447 = vmatmul.mubr.f32.gmra.mxu0 %v485
  %v1448 = vpop.f32.mrf.mxu0
  %v1449 = vadd.f32 %v292, %v1448
  %v1450 = vpop.f32.mrf.mxu0
  %1451 = vmatprep.mubr.f32.mxu0 0.0
  %1452 = vmatmul.mubr.f32.gmra.mxu0 %v488
  %v1453 = vpop.f32.mrf.mxu0
  %v1454 = vadd.f32 %v292, %v1453
  %v1455 = vpop.f32.mrf.mxu0
  %1456 = vmatprep.mubr.f32.mxu0 0.0
  %1457 = vmatmul.mubr.f32.gmra.mxu0 %v491
  %v1458 = vpop.f32.mrf.mxu0
  %v1459 = vadd.f32 %v292, %v1458
  %v1460 = vpop.f32.mrf.mxu0
  %1461 = vmatprep.mubr.f32.mxu0 0.0
  %1462 = vmatmul.mubr.f32.gmra.mxu0 %v494
  %v1463 = vpop.f32.mrf.mxu0
  %v1464 = vadd.f32 %v292, %v1463
  %v1465 = vpop.f32.mrf.mxu0
  %1466 = vmatprep.mubr.f32.mxu0 0.0
  %1467 = vmatmul.mubr.f32.gmra.mxu0 %v497
  %v1468 = vpop.f32.mrf.mxu0
  %v1469 = vadd.f32 %v292, %v1468
  %v1470 = vpop.f32.mrf.mxu0
  %1471 = vmatprep.mubr.f32.mxu0 0.0
  %1472 = vmatmul.mubr.f32.gmra.mxu0 %v500
  %v1473 = vpop.f32.mrf.mxu0
  %v1474 = vadd.f32 %v292, %v1473
  %v1475 = vpop.f32.mrf.mxu0
  %1476 = vmatprep.mubr.f32.mxu0 0.0
  %1477 = vmatmul.mubr.f32.gmra.mxu0 %v503
  %v1478 = vpop.f32.mrf.mxu0
  %v1479 = vadd.f32 %v292, %v1478
  %v1480 = vpop.f32.mrf.mxu0
  %1481 = vmatprep.mubr.f32.mxu0 0.0
  %1482 = vmatmul.mubr.f32.gmra.mxu0 %v506
  %v1483 = vpop.f32.mrf.mxu0
  %v1484 = vadd.f32 %v292, %v1483
  %v1485 = vpop.f32.mrf.mxu0
  %1486 = vmatprep.mubr.f32.mxu0 0.0
  %1487 = vmatmul.mubr.f32.gmra.mxu0 %v509
  %v1488 = vpop.f32.mrf.mxu0
  %v1489 = vadd.f32 %v292, %v1488
  %v1490 = vpop.f32.mrf.mxu0
  %1491 = vmatprep.mubr.f32.mxu0 0.0
  %1492 = vmatmul.mubr.f32.gmra.mxu0 %v512
  %v1493 = vpop.f32.mrf.mxu0
  %v1494 = vadd.f32 %v292, %v1493
  %v1495 = vpop.f32.mrf.mxu0
  %1496 = vmatprep.mubr.f32.mxu0 0.0
  %1497 = vmatmul.mubr.f32.gmra.mxu0 %v515
  %v1498 = vpop.f32.mrf.mxu0
  %v1499 = vadd.f32 %v292, %v1498
  %v1500 = vpop.f32.mrf.mxu0
  %1501 = vmatprep.mubr.f32.mxu0 0.0
  %1502 = vmatmul.mubr.f32.gmra.mxu0 %v518
  %v1503 = vpop.f32.mrf.mxu0
  %v1504 = vadd.f32 %v292, %v1503
  %v1505 = vpop.f32.mrf.mxu0
  %1506 = vmatprep.mubr.f32.mxu0 0.0
  %1507 = vmatmul.mubr.f32.gmra.mxu0 %v521
  %v1508 = vpop.f32.mrf.mxu0
  %v1509 = vadd.f32 %v292, %v1508
  %v1510 = vpop.f32.mrf.mxu0
  %1511 = vmatprep.mubr.f32.mxu0 0.0
  %1512 = vmatmul.mubr.f32.gmra.mxu0 %v524
  %v1513 = vpop.f32.mrf.mxu0
  %v1514 = vadd.f32 %v292, %v1513
  %v1515 = vpop.f32.mrf.mxu0
  %1516 = vmatprep.mubr.f32.mxu0 0.0
  %1517 = vmatmul.mubr.f32.gmra.mxu0 %v527
  %v1518 = vpop.f32.mrf.mxu0
  %v1519 = vadd.f32 %v292, %v1518
  %v1520 = vpop.f32.mrf.mxu0
  %1521 = vmatprep.mubr.f32.mxu0 0.0
  %1522 = vmatmul.mubr.f32.gmra.mxu0 %v530
  %v1523 = vpop.f32.mrf.mxu0
  %v1524 = vadd.f32 %v292, %v1523
  %v1525 = vpop.f32.mrf.mxu0
  %1526 = vmatprep.mubr.f32.mxu0 0.0
  %1527 = vmatmul.mubr.f32.gmra.mxu0 %v533
  %v1528 = vpop.f32.mrf.mxu0
  %v1529 = vadd.f32 %v292, %v1528
  %v1530 = vpop.f32.mrf.mxu0
  %1531 = vmatprep.mubr.f32.mxu0 0.0
  %1532 = vmatmul.mubr.f32.gmra.mxu0 %v536
  %v1533 = vpop.f32.mrf.mxu0
  %v1534 = vadd.f32 %v292, %v1533
  %v1535 = vpop.f32.mrf.mxu0
  %1536 = vmatprep.mubr.f32.mxu0 0.0
  %1537 = vmatmul.mubr.f32.gmra.mxu0 %v539
  %v1538 = vpop.f32.mrf.mxu0
  %v1539 = vadd.f32 %v292, %v1538
  %v1540 = vpop.f32.mrf.mxu0
  %1541 = vmatprep.mubr.f32.mxu0 0.0
  %1542 = vmatmul.mubr.f32.gmra.mxu0 %v542
  %v1543 = vpop.f32.mrf.mxu0
  %v1544 = vadd.f32 %v292, %v1543
  %v1545 = vpop.f32.mrf.mxu0
  %1546 = vmatprep.mubr.f32.mxu0 0.0
  %1547 = vmatmul.mubr.f32.gmra.mxu0 %v545
  %v1548 = vpop.f32.mrf.mxu0
  %v1549 = vadd.f32 %v292, %v1548
  %v1550 = vpop.f32.mrf.mxu0
  %1551 = vmatprep.mubr.f32.mxu0 0.0
  %1552 = vmatmul.mubr.f32.gmra.mxu0 %v548
  %v1553 = vpop.f32.mrf.mxu0
  %v1554 = vadd.f32 %v292, %v1553
  %v1555 = vpop.f32.mrf.mxu0
  %1556 = vmatprep.mubr.f32.mxu0 0.0
  %1557 = vmatmul.mubr.f32.gmra.mxu0 %v551
  %v1558 = vpop.f32.mrf.mxu0
  %v1559 = vadd.f32 %v292, %v1558
  %v1560 = vpop.f32.mrf.mxu0
  %1561 = vmatprep.mubr.f32.mxu0 0.0
  %1562 = vmatmul.mubr.f32.gmra.mxu0 %v554
  %v1563 = vpop.f32.mrf.mxu0
  %v1564 = vadd.f32 %v292, %v1563
  %v1565 = vpop.f32.mrf.mxu0
  %1566 = vmatprep.mubr.f32.mxu0 0.0
  %1567 = vmatmul.mubr.f32.gmra.mxu0 %v557
  %v1568 = vpop.f32.mrf.mxu0
  %v1569 = vadd.f32 %v292, %v1568
  %v1570 = vpop.f32.mrf.mxu0
  %1571 = vmatprep.mubr.f32.mxu0 0.0
  %1572 = vmatmul.mubr.f32.gmra.mxu0 %v560
  %v1573 = vpop.f32.mrf.mxu0
  %v1574 = vadd.f32 %v292, %v1573
  %v1575 = vpop.f32.mrf.mxu0
  %1576 = vmatprep.mubr.f32.mxu0 0.0
  %1577 = vmatmul.mubr.f32.gmra.mxu0 %v563
  %v1578 = vpop.f32.mrf.mxu0
  %v1579 = vadd.f32 %v292, %v1578
  %v1580 = vpop.f32.mrf.mxu0
  %1581 = vmatprep.mubr.f32.mxu0 0.0
  %1582 = vmatmul.mubr.f32.gmra.mxu0 %v566
  %v1583 = vpop.f32.mrf.mxu0
  %v1584 = vadd.f32 %v292, %v1583
  %v1585 = vpop.f32.mrf.mxu0
  %1586 = vmatprep.mubr.f32.mxu0 0.0
  %1587 = vmatmul.mubr.f32.gmra.mxu0 %v569
  %v1588 = vpop.f32.mrf.mxu0
  %v1589 = vadd.f32 %v292, %v1588
  %v1590 = vpop.f32.mrf.mxu0
  %1591 = vmatprep.mubr.f32.mxu0 0.0
  %1592 = vmatmul.mubr.f32.gmra.mxu0 %v572
  %v1593 = vpop.f32.mrf.mxu0
  %v1594 = vadd.f32 %v292, %v1593
  %v1595 = vpop.f32.mrf.mxu0
  %1596 = vmatprep.mubr.f32.mxu0 0.0
  %1597 = vmatmul.mubr.f32.gmra.mxu0 %v575
  %v1598 = vpop.f32.mrf.mxu0
  %v1599 = vadd.f32 %v292, %v1598
  %v1600 = vpop.f32.mrf.mxu0
  %1601 = vmatprep.mubr.f32.mxu0 0.0
  %1602 = vmatmul.mubr.f32.gmra.mxu0 %v578
  %v1603 = vpop.f32.mrf.mxu0
  %v1604 = vadd.f32 %v292, %v1603
  %v1605 = vpop.f32.mrf.mxu0
  %1606 = vmatprep.mubr.f32.mxu0 0.0
  %1607 = vmatmul.mubr.f32.gmra.mxu0 %v581
  %v1608 = vpop.f32.mrf.mxu0
  %v1609 = vadd.f32 %v292, %v1608
  %v1610 = vpop.f32.mrf.mxu0
  %1611 = vmatprep.mubr.f32.mxu0 0.0
  %1612 = vmatmul.mubr.f32.gmra.mxu0 %v584
  %v1613 = vpop.f32.mrf.mxu0
  %v1614 = vadd.f32 %v292, %v1613
  %v1615 = vpop.f32.mrf.mxu0
  %1616 = vmatprep.mubr.f32.mxu0 0.0
  %1617 = vmatmul.mubr.f32.gmra.mxu0 %v587
  %v1618 = vpop.f32.mrf.mxu0
  %v1619 = vadd.f32 %v292, %v1618
  %v1620 = vpop.f32.mrf.mxu0
  %1621 = vmatprep.mubr.f32.mxu0 0.0
  %1622 = vmatmul.mubr.f32.gmra.mxu0 %v590
  %v1623 = vpop.f32.mrf.mxu0
  %v1624 = vadd.f32 %v292, %v1623
  %v1625 = vpop.f32.mrf.mxu0
  %1626 = vmatprep.mubr.f32.mxu0 0.0
  %1627 = vmatmul.mubr.f32.gmra.mxu0 %v593
  %v1628 = vpop.f32.mrf.mxu0
  %v1629 = vadd.f32 %v292, %v1628
  %v1630 = vpop.f32.mrf.mxu0
  %1631 = vmatprep.mubr.f32.mxu0 0.0
  %1632 = vmatmul.mubr.f32.gmra.mxu0 %v596
  %v1633 = vpop.f32.mrf.mxu0
  %v1634 = vadd.f32 %v292, %v1633
  %v1635 = vpop.f32.mrf.mxu0
  %1636 = vmatprep.mubr.f32.mxu0 0.0
  %1637 = vmatmul.mubr.f32.gmra.mxu0 %v599
  %v1638 = vpop.f32.mrf.mxu0
  %v1639 = vadd.f32 %v292, %v1638
  %v1640 = vpop.f32.mrf.mxu0
  %1641 = vmatprep.mubr.f32.mxu0 0.0
  %1642 = vmatmul.mubr.f32.gmra.mxu0 %v602
  %v1643 = vpop.f32.mrf.mxu0
  %v1644 = vadd.f32 %v292, %v1643
  %v1645 = vpop.f32.mrf.mxu0
  %1646 = vmatprep.mubr.f32.mxu0 0.0
  %1647 = vmatmul.mubr.f32.gmra.mxu0 %v605
  %v1648 = vpop.f32.mrf.mxu0
  %v1649 = vadd.f32 %v292, %v1648
  %v1650 = vpop.f32.mrf.mxu0
  %1651 = vmatprep.mubr.f32.mxu0 0.0
  %1652 = vmatmul.mubr.f32.gmra.mxu0 %v608
  %v1653 = vpop.f32.mrf.mxu0
  %v1654 = vadd.f32 %v292, %v1653
  %v1655 = vpop.f32.mrf.mxu0
  %1656 = vmatprep.mubr.f32.mxu0 0.0
  %1657 = vmatmul.mubr.f32.gmra.mxu0 %v611
  %v1658 = vpop.f32.mrf.mxu0
  %v1659 = vadd.f32 %v292, %v1658
  %v1660 = vpop.f32.mrf.mxu0
  %1661 = vmatprep.mubr.f32.mxu0 0.0
  %1662 = vmatmul.mubr.f32.gmra.mxu0 %v614
  %v1663 = vpop.f32.mrf.mxu0
  %v1664 = vadd.f32 %v292, %v1663
  %v1665 = vpop.f32.mrf.mxu0
  %1666 = vmatprep.mubr.f32.mxu0 0.0
  %1667 = vmatmul.mubr.f32.gmra.mxu0 %v617
  %v1668 = vpop.f32.mrf.mxu0
  %v1669 = vadd.f32 %v292, %v1668
  %v1670 = vpop.f32.mrf.mxu0
  %1671 = vmatprep.mubr.f32.mxu0 0.0
  %1672 = vmatmul.mubr.f32.gmra.mxu0 %v620
  %v1673 = vpop.f32.mrf.mxu0
  %v1674 = vadd.f32 %v292, %v1673
  %v1675 = vpop.f32.mrf.mxu0
  %1676 = vmatprep.mubr.f32.mxu0 0.0
  %1677 = vmatmul.mubr.f32.gmra.mxu0 %v623
  %v1678 = vpop.f32.mrf.mxu0
  %v1679 = vadd.f32 %v292, %v1678
  %v1680 = vpop.f32.mrf.mxu0
  %1681 = vmatprep.mubr.f32.mxu0 0.0
  %1682 = vmatmul.mubr.f32.gmra.mxu0 %v626
  %v1683 = vpop.f32.mrf.mxu0
  %v1684 = vadd.f32 %v292, %v1683
  %v1685 = vpop.f32.mrf.mxu0
  %1686 = vmatprep.mubr.f32.mxu0 0.0
  %1687 = vmatmul.mubr.f32.gmra.mxu0 %v629
  %v1688 = vpop.f32.mrf.mxu0
  %v1689 = vadd.f32 %v292, %v1688
  %v1690 = vpop.f32.mrf.mxu0
  %1691 = vmatprep.mubr.f32.mxu0 0.0
  %1692 = vmatmul.mubr.f32.gmra.mxu0 %v632
  %v1693 = vpop.f32.mrf.mxu0
  %v1694 = vadd.f32 %v292, %v1693
  %v1695 = vpop.f32.mrf.mxu0
  %1696 = vmatprep.mubr.f32.mxu0 0.0
  %1697 = vmatmul.mubr.f32.gmra.mxu0 %v635
  %v1698 = vpop.f32.mrf.mxu0
  %v1699 = vadd.f32 %v292, %v1698
  %v1700 = vpop.f32.mrf.mxu0
  %1701 = vmatprep.mubr.f32.mxu0 0.0
  %1702 = vmatmul.mubr.f32.gmra.mxu0 %v638
  %v1703 = vpop.f32.mrf.mxu0
  %v1704 = vadd.f32 %v292, %v1703
  %v1705 = vpop.f32.mrf.mxu0
  %1706 = vmatprep.mubr.f32.mxu0 0.0
  %1707 = vmatmul.mubr.f32.gmra.mxu0 %v641
  %v1708 = vpop.f32.mrf.mxu0
  %v1709 = vadd.f32 %v292, %v1708
  %v1710 = vpop.f32.mrf.mxu0
  %1711 = vmatprep.mubr.f32.mxu0 0.0
  %1712 = vmatmul.mubr.f32.gmra.mxu0 %v644
  %v1713 = vpop.f32.mrf.mxu0
  %v1714 = vadd.f32 %v292, %v1713
  %v1715 = vpop.f32.mrf.mxu0
  %1716 = vmatprep.mubr.f32.mxu0 0.0
  %1717 = vmatmul.mubr.f32.gmra.mxu0 %v647
  %v1718 = vpop.f32.mrf.mxu0
  %v1719 = vadd.f32 %v292, %v1718
  %v1720 = vpop.f32.mrf.mxu0
  %1721 = vmatprep.mubr.f32.mxu0 0.0
  %1722 = vmatmul.mubr.f32.gmra.mxu0 %v650
  %v1723 = vpop.f32.mrf.mxu0
  %v1724 = vadd.f32 %v292, %v1723
  %v1725 = vpop.f32.mrf.mxu0
  %1726 = vmatprep.mubr.f32.mxu0 0.0
  %1727 = vmatmul.mubr.f32.gmra.mxu0 %v653
  %v1728 = vpop.f32.mrf.mxu0
  %v1729 = vadd.f32 %v292, %v1728
  %v1730 = vpop.f32.mrf.mxu0
  %1731 = vmatprep.mubr.f32.mxu0 0.0
  %1732 = vmatmul.mubr.f32.gmra.mxu0 %v656
  %v1733 = vpop.f32.mrf.mxu0
  %v1734 = vadd.f32 %v292, %v1733
  %v1735 = vpop.f32.mrf.mxu0
  %1736 = vmatprep.mubr.f32.mxu0 0.0
  %1737 = vmatmul.mubr.f32.gmra.mxu0 %v659
  %v1738 = vpop.f32.mrf.mxu0
  %v1739 = vadd.f32 %v292, %v1738
  %v1740 = vpop.f32.mrf.mxu0
  %1741 = vmatprep.mubr.f32.mxu0 0.0
  %1742 = vmatmul.mubr.f32.gmra.mxu0 %v662
  %v1743 = vpop.f32.mrf.mxu0
  %v1744 = vadd.f32 %v292, %v1743
  %v1745 = vpop.f32.mrf.mxu0
  %1746 = vmatprep.mubr.f32.mxu0 0.0
  %1747 = vmatmul.mubr.f32.gmra.mxu0 %v665
  %v1748 = vpop.f32.mrf.mxu0
  %v1749 = vadd.f32 %v292, %v1748
  %v1750 = vpop.f32.mrf.mxu0
  %1751 = vmatprep.mubr.f32.mxu0 0.0
  %1752 = vmatmul.mubr.f32.gmra.mxu0 %v668
  %v1753 = vpop.f32.mrf.mxu0
  %v1754 = vadd.f32 %v292, %v1753
  %v1755 = vpop.f32.mrf.mxu0
  %1756 = vmatprep.mubr.f32.mxu0 0.0
  %1757 = vmatmul.mubr.f32.gmra.mxu0 %v671
  %v1758 = vpop.f32.mrf.mxu0
  %v1759 = vadd.f32 %v292, %v1758
  %v1760 = vpop.f32.mrf.mxu0
  %1761 = vmatprep.mubr.f32.mxu0 0.0
  %1762 = vmatmul.mubr.f32.gmra.mxu0 %v674
  %v1763 = vpop.f32.mrf.mxu0
  %v1764 = vadd.f32 %v292, %v1763
  %v1765 = vpop.f32.mrf.mxu0
  %1766 = vmatprep.mubr.f32.mxu0 0.0
  %1767 = vmatmul.mubr.f32.gmra.mxu0 %v677
  %v1768 = vpop.f32.mrf.mxu0
  %v1769 = vadd.f32 %v292, %v1768
  %v1770 = vpop.f32.mrf.mxu0
  %1771 = vmatprep.mubr.f32.mxu0 0.0
  %1772 = vmatmul.mubr.f32.gmra.mxu0 %v680
  %v1773 = vpop.f32.mrf.mxu0
  %v1774 = vadd.f32 %v292, %v1773
  %v1775 = vpop.f32.mrf.mxu0
  %1776 = vmatprep.mubr.f32.mxu0 0.0
  %1777 = vmatmul.mubr.f32.gmra.mxu0 %v683
  %v1778 = vpop.f32.mrf.mxu0
  %v1779 = vadd.f32 %v292, %v1778
  %v1780 = vpop.f32.mrf.mxu0
  %1781 = vmatprep.mubr.f32.mxu0 0.0
  %1782 = vmatmul.mubr.f32.gmra.mxu0 %v686
  %v1783 = vpop.f32.mrf.mxu0
  %v1784 = vadd.f32 %v292, %v1783
  %v1785 = vpop.f32.mrf.mxu0
  %1786 = vmatprep.mubr.f32.mxu0 0.0
  %1787 = vmatmul.mubr.f32.gmra.mxu0 %v689
  %v1788 = vpop.f32.mrf.mxu0
  %v1789 = vadd.f32 %v292, %v1788
  %v1790 = vpop.f32.mrf.mxu0
  %1791 = vmatprep.mubr.f32.mxu0 0.0
  %1792 = vmatmul.mubr.f32.gmra.mxu0 %v692
  %v1793 = vpop.f32.mrf.mxu0
  %v1794 = vadd.f32 %v292, %v1793
  %v1795 = vpop.f32.mrf.mxu0
  %1796 = vmatprep.mubr.f32.mxu0 0.0
  %1797 = vmatmul.mubr.f32.gmra.mxu0 %v695
  %v1798 = vpop.f32.mrf.mxu0
  %v1799 = vadd.f32 %v292, %v1798
  %v1800 = vpop.f32.mrf.mxu0
  %1801 = vmatprep.mubr.f32.mxu0 0.0
  %1802 = vmatmul.mubr.f32.gmra.mxu0 %v698
  %v1803 = vpop.f32.mrf.mxu0
  %v1804 = vadd.f32 %v292, %v1803
  %v1805 = vpop.f32.mrf.mxu0
  %1806 = vmatprep.mubr.f32.mxu0 0.0
  %1807 = vmatmul.mubr.f32.gmra.mxu0 %v701
  %v1808 = vpop.f32.mrf.mxu0
  %v1809 = vadd.f32 %v292, %v1808
  %v1810 = vpop.f32.mrf.mxu0
  %1811 = vmatprep.mubr.f32.mxu0 0.0
  %1812 = vmatmul.mubr.f32.gmra.mxu0 %v704
  %v1813 = vpop.f32.mrf.mxu0
  %v1814 = vadd.f32 %v292, %v1813
  %v1815 = vpop.f32.mrf.mxu0
  %1816 = vmatprep.mubr.f32.mxu0 0.0
  %1817 = vmatmul.mubr.f32.gmra.mxu0 %v707
  %v1818 = vpop.f32.mrf.mxu0
  %v1819 = vadd.f32 %v292, %v1818
  %v1820 = vpop.f32.mrf.mxu0
  %1821 = vmatprep.mubr.f32.mxu0 0.0
  %1822 = vmatmul.mubr.f32.gmra.mxu0 %v710
  %v1823 = vpop.f32.mrf.mxu0
  %v1824 = vadd.f32 %v292, %v1823
  %v1825 = vpop.f32.mrf.mxu0
  %1826 = vmatprep.mubr.f32.mxu0 0.0
  %1827 = vmatmul.mubr.f32.gmra.mxu0 %v713
  %v1828 = vpop.f32.mrf.mxu0
  %v1829 = vadd.f32 %v292, %v1828
  %v1830 = vpop.f32.mrf.mxu0
  %1831 = vmatprep.mubr.f32.mxu0 0.0
  %1832 = vmatmul.mubr.f32.gmra.mxu0 %v716
  %v1833 = vpop.f32.mrf.mxu0
  %v1834 = vadd.f32 %v292, %v1833
  %v1835 = vpop.f32.mrf.mxu0
  %1836 = vmatprep.mubr.f32.mxu0 0.0
  %1837 = vmatmul.mubr.f32.gmra.mxu0 %v719
  %v1838 = vpop.f32.mrf.mxu0
  %v1839 = vadd.f32 %v292, %v1838
  %v1840 = vpop.f32.mrf.mxu0
  %1841 = vmatprep.mubr.f32.mxu0 0.0
  %1842 = vmatmul.mubr.f32.gmra.mxu0 %v722
  %v1843 = vpop.f32.mrf.mxu0
  %v1844 = vadd.f32 %v292, %v1843
  %v1845 = vpop.f32.mrf.mxu0
  %1846 = vmatprep.mubr.f32.mxu0 0.0
  %1847 = vmatmul.mubr.f32.gmra.mxu0 %v725
  %v1848 = vpop.f32.mrf.mxu0
  %v1849 = vadd.f32 %v292, %v1848
  %v1850 = vpop.f32.mrf.mxu0
  %1851 = vmatprep.mubr.f32.mxu0 0.0
  %1852 = vmatmul.mubr.f32.gmra.mxu0 %v728
  %v1853 = vpop.f32.mrf.mxu0
  %v1854 = vadd.f32 %v292, %v1853
  %v1855 = vpop.f32.mrf.mxu0
  %1856 = vmatprep.mubr.f32.mxu0 0.0
  %1857 = vmatmul.mubr.f32.gmra.mxu0 %v731
  %v1858 = vpop.f32.mrf.mxu0
  %v1859 = vadd.f32 %v292, %v1858
  %v1860 = vpop.f32.mrf.mxu0
  %1861 = vmatprep.mubr.f32.mxu0 0.0
  %1862 = vmatmul.mubr.f32.gmra.mxu0 %v734
  %v1863 = vpop.f32.mrf.mxu0
  %v1864 = vadd.f32 %v292, %v1863
  %v1865 = vpop.f32.mrf.mxu0
  %1866 = vmatprep.mubr.f32.mxu0 0.0
  %1867 = vmatmul.mubr.f32.gmra.mxu0 %v737
  %v1868 = vpop.f32.mrf.mxu0
  %v1869 = vadd.f32 %v292, %v1868
  %v1870 = vpop.f32.mrf.mxu0
  %1871 = vmatprep.mubr.f32.mxu0 0.0
  %1872 = vmatmul.mubr.f32.gmra.mxu0 %v740
  %v1873 = vpop.f32.mrf.mxu0
  %v1874 = vadd.f32 %v292, %v1873
  %v1875 = vpop.f32.mrf.mxu0
  %1876 = vmatprep.mubr.f32.mxu0 0.0
  %1877 = vmatmul.mubr.f32.gmra.mxu0 %v743
  %v1878 = vpop.f32.mrf.mxu0
  %v1879 = vadd.f32 %v292, %v1878
  %v1880 = vpop.f32.mrf.mxu0
  %1881 = vmatprep.mubr.f32.mxu0 0.0
  %1882 = vmatmul.mubr.f32.gmra.mxu0 %v746
  %v1883 = vpop.f32.mrf.mxu0
  %v1884 = vadd.f32 %v292, %v1883
  %v1885 = vpop.f32.mrf.mxu0
  %1886 = vmatprep.mubr.f32.mxu0 0.0
  %1887 = vmatmul.mubr.f32.gmra.mxu0 %v749
  %v1888 = vpop.f32.mrf.mxu0
  %v1889 = vadd.f32 %v292, %v1888
  %v1890 = vpop.f32.mrf.mxu0
  %1891 = vmatprep.mubr.f32.mxu0 0.0
  %1892 = vmatmul.mubr.f32.gmra.mxu0 %v752
  %v1893 = vpop.f32.mrf.mxu0
  %v1894 = vadd.f32 %v292, %v1893
  %v1895 = vpop.f32.mrf.mxu0
  %1896 = vmatprep.mubr.f32.mxu0 0.0
  %1897 = vmatmul.mubr.f32.gmra.mxu0 %v755
  %v1898 = vpop.f32.mrf.mxu0
  %v1899 = vadd.f32 %v292, %v1898
  %v1900 = vpop.f32.mrf.mxu0
  %1901 = vmatprep.mubr.f32.mxu0 0.0
  %1902 = vmatmul.mubr.f32.gmra.mxu0 %v758
  %v1903 = vpop.f32.mrf.mxu0
  %v1904 = vadd.f32 %v292, %v1903
  %v1905 = vpop.f32.mrf.mxu0
  %1906 = vmatprep.mubr.f32.mxu0 0.0
  %1907 = vmatmul.mubr.f32.gmra.mxu0 %v761
  %v1908 = vpop.f32.mrf.mxu0
  %v1909 = vadd.f32 %v292, %v1908
  %v1910 = vpop.f32.mrf.mxu0
  %1911 = vmatprep.mubr.f32.mxu0 0.0
  %1912 = vmatmul.mubr.f32.gmra.mxu0 %v764
  %v1913 = vpop.f32.mrf.mxu0
  %v1914 = vadd.f32 %v292, %v1913
  %v1915 = vpop.f32.mrf.mxu0
  %1916 = vmatprep.mubr.f32.mxu0 0.0
  %1917 = vmatmul.mubr.f32.gmra.mxu0 %v767
  %v1918 = vpop.f32.mrf.mxu0
  %v1919 = vadd.f32 %v292, %v1918
  %v1920 = vpop.f32.mrf.mxu0
  %1921 = vmatprep.mubr.f32.mxu0 0.0
  %1922 = vmatmul.mubr.f32.gmra.mxu0 %v770
  %v1923 = vpop.f32.mrf.mxu0
  %v1924 = vadd.f32 %v292, %v1923
  %v1925 = vpop.f32.mrf.mxu0
  %1926 = vmatprep.mubr.f32.mxu0 0.0
  %1927 = vmatmul.mubr.f32.gmra.mxu0 %v773
  %v1928 = vpop.f32.mrf.mxu0
  %v1929 = vadd.f32 %v292, %v1928
  %v1930 = vpop.f32.mrf.mxu0
  %1931 = vmatprep.mubr.f32.mxu0 0.0
  %1932 = vmatmul.mubr.f32.gmra.mxu0 %v776
  %v1933 = vpop.f32.mrf.mxu0
  %v1934 = vadd.f32 %v292, %v1933
  %v1935 = vpop.f32.mrf.mxu0
  %1936 = vmatprep.mubr.f32.mxu0 0.0
  %1937 = vmatmul.mubr.f32.gmra.mxu0 %v779
  %v1938 = vpop.f32.mrf.mxu0
  %v1939 = vadd.f32 %v292, %v1938
  %v1940 = vpop.f32.mrf.mxu0
  %1941 = vmatprep.mubr.f32.mxu0 0.0
  %1942 = vmatmul.mubr.f32.gmra.mxu0 %v782
  %v1943 = vpop.f32.mrf.mxu0
  %v1944 = vadd.f32 %v292, %v1943
  %v1945 = vpop.f32.mrf.mxu0
  %1946 = vmatprep.mubr.f32.mxu0 0.0
  %1947 = vmatmul.mubr.f32.gmra.mxu0 %v785
  %v1948 = vpop.f32.mrf.mxu0
  %v1949 = vadd.f32 %v292, %v1948
  %v1950 = vpop.f32.mrf.mxu0
  %1951 = vmatprep.mubr.f32.mxu0 0.0
  %1952 = vmatmul.mubr.f32.gmra.mxu0 %v788
  %v1953 = vpop.f32.mrf.mxu0
  %v1954 = vadd.f32 %v292, %v1953
  %v1955 = vpop.f32.mrf.mxu0
  %1956 = vmatprep.mubr.f32.mxu0 0.0
  %1957 = vmatmul.mubr.f32.gmra.mxu0 %v791
  %v1958 = vpop.f32.mrf.mxu0
  %v1959 = vadd.f32 %v292, %v1958
  %v1960 = vpop.f32.mrf.mxu0
  %1961 = vmatprep.mubr.f32.mxu0 0.0
  %1962 = vmatmul.mubr.f32.gmra.mxu0 %v794
  %v1963 = vpop.f32.mrf.mxu0
  %v1964 = vadd.f32 %v292, %v1963
  %v1965 = vpop.f32.mrf.mxu0
  %1966 = vmatprep.mubr.f32.mxu0 0.0
  %1967 = vmatmul.mubr.f32.gmra.mxu0 %v797
  %v1968 = vpop.f32.mrf.mxu0
  %v1969 = vadd.f32 %v292, %v1968
  %v1970 = vpop.f32.mrf.mxu0
  %1971 = vmatprep.mubr.f32.mxu0 0.0
  %1972 = vmatmul.mubr.f32.gmra.mxu0 %v800
  %v1973 = vpop.f32.mrf.mxu0
  %v1974 = vadd.f32 %v292, %v1973
  %v1975 = vpop.f32.mrf.mxu0
  %1976 = vmatprep.mubr.f32.mxu0 0.0
  %1977 = vmatmul.mubr.f32.gmra.mxu0 %v803
  %v1978 = vpop.f32.mrf.mxu0
  %v1979 = vadd.f32 %v292, %v1978
  %v1980 = vpop.f32.mrf.mxu0
  %1981 = vmatprep.mubr.f32.mxu0 0.0
  %1982 = vmatmul.mubr.f32.gmra.mxu0 %v806
  %v1983 = vpop.f32.mrf.mxu0
  %v1984 = vadd.f32 %v292, %v1983
  %v1985 = vpop.f32.mrf.mxu0
  %1986 = vmatprep.mubr.f32.mxu0 0.0
  %1987 = vmatmul.mubr.f32.gmra.mxu0 %v809
  %v1988 = vpop.f32.mrf.mxu0
  %v1989 = vadd.f32 %v292, %v1988
  %v1990 = vpop.f32.mrf.mxu0
  %1991 = vmatprep.mubr.f32.mxu0 0.0
  %1992 = vmatmul.mubr.f32.gmra.mxu0 %v812
  %v1993 = vpop.f32.mrf.mxu0
  %v1994 = vadd.f32 %v292, %v1993
  %v1995 = vpop.f32.mrf.mxu0
  %1996 = vmatprep.mubr.f32.mxu0 0.0
  %1997 = vmatmul.mubr.f32.gmra.mxu0 %v815
  %v1998 = vpop.f32.mrf.mxu0
  %v1999 = vadd.f32 %v292, %v1998
  %v2000 = vpop.f32.mrf.mxu0
  %2001 = vmatprep.mubr.f32.mxu0 0.0
  %2002 = vmatmul.mubr.f32.gmra.mxu0 %v818
  %v2003 = vpop.f32.mrf.mxu0
  %v2004 = vadd.f32 %v292, %v2003
  %v2005 = vpop.f32.mrf.mxu0
  %2006 = vmatprep.mubr.f32.mxu0 0.0
  %2007 = vmatmul.mubr.f32.gmra.mxu0 %v821
  %v2008 = vpop.f32.mrf.mxu0
  %v2009 = vadd.f32 %v292, %v2008
  %v2010 = vpop.f32.mrf.mxu0
  %2011 = vmatprep.mubr.f32.mxu0 0.0
  %2012 = vmatmul.mubr.f32.gmra.mxu0 %v824
  %v2013 = vpop.f32.mrf.mxu0
  %v2014 = vadd.f32 %v292, %v2013
  %v2015 = vpop.f32.mrf.mxu0
  %2016 = vmatprep.mubr.f32.mxu0 0.0
  %2017 = vmatmul.mubr.f32.gmra.mxu0 %v827
  %v2018 = vpop.f32.mrf.mxu0
  %v2019 = vadd.f32 %v292, %v2018
  %v2020 = vpop.f32.mrf.mxu0
  %2021 = vmatprep.mubr.f32.mxu0 0.0
  %2022 = vmatmul.mubr.f32.gmra.mxu0 %v830
  %v2023 = vpop.f32.mrf.mxu0
  %v2024 = vadd.f32 %v292, %v2023
  %v2025 = vpop.f32.mrf.mxu0
  %2026 = vmatprep.mubr.f32.mxu0 0.0
  %2027 = vmatmul.mubr.f32.gmra.mxu0 %v833
  %v2028 = vpop.f32.mrf.mxu0
  %v2029 = vadd.f32 %v292, %v2028
  %v2030 = vpop.f32.mrf.mxu0
  %2031 = vmatprep.mubr.f32.mxu0 0.0
  %2032 = vmatmul.mubr.f32.gmra.mxu0 %v836
  %v2033 = vpop.f32.mrf.mxu0
  %v2034 = vadd.f32 %v292, %v2033
  %v2035 = vpop.f32.mrf.mxu0
  %2036 = vmatprep.mubr.f32.mxu0 0.0
  %2037 = vmatmul.mubr.f32.gmra.mxu0 %v839
  %v2038 = vpop.f32.mrf.mxu0
  %v2039 = vadd.f32 %v292, %v2038
  %v2040 = vpop.f32.mrf.mxu0
  %2041 = vmatprep.mubr.f32.mxu0 0.0
  %2042 = vmatmul.mubr.f32.gmra.mxu0 %v842
  %v2043 = vpop.f32.mrf.mxu0
  %v2044 = vadd.f32 %v292, %v2043
  %v2045 = vpop.f32.mrf.mxu0
  %2046 = vmatprep.mubr.f32.mxu0 0.0
  %2047 = vmatmul.mubr.f32.gmra.mxu0 %v845
  %v2048 = vpop.f32.mrf.mxu0
  %v2049 = vadd.f32 %v292, %v2048
  %v2050 = vpop.f32.mrf.mxu0
  %2051 = vmatprep.mubr.f32.mxu0 0.0
  %2052 = vmatmul.mubr.f32.gmra.mxu0 %v848
  %v2053 = vpop.f32.mrf.mxu0
  %v2054 = vadd.f32 %v292, %v2053
  %v2055 = vpop.f32.mrf.mxu0
  %2056 = vmatprep.mubr.f32.mxu0 0.0
  %2057 = vmatmul.mubr.f32.gmra.mxu0 %v851
  %v2058 = vpop.f32.mrf.mxu0
  %v2059 = vadd.f32 %v292, %v2058
  %v2060 = vpop.f32.mrf.mxu0
  %2061 = vmatprep.mubr.f32.mxu0 0.0
  %2062 = vmatmul.mubr.f32.gmra.mxu0 %v854
  %v2063 = vpop.f32.mrf.mxu0
  %v2064 = vadd.f32 %v292, %v2063
  %v2065 = vpop.f32.mrf.mxu0
  %2066 = vmatprep.mubr.f32.mxu0 0.0
  %2067 = vmatmul.mubr.f32.gmra.mxu0 %v857
  %v2068 = vpop.f32.mrf.mxu0
  %v2069 = vadd.f32 %v292, %v2068
  %v2070 = vpop.f32.mrf.mxu0
  %2071 = vmatprep.mubr.f32.mxu0 0.0
  %2072 = vmatmul.mubr.f32.gmra.mxu0 %v860
  %v2073 = vpop.f32.mrf.mxu0
  %v2074 = vadd.f32 %v292, %v2073
  %v2075 = vpop.f32.mrf.mxu0
  %2076 = vmatprep.mubr.f32.mxu0 0.0
  %2077 = vmatmul.mubr.f32.gmra.mxu0 %v863
  %v2078 = vpop.f32.mrf.mxu0
  %v2079 = vadd.f32 %v292, %v2078
  %v2080 = vpop.f32.mrf.mxu0
  %2081 = vmatprep.mubr.f32.mxu0 0.0
  %2082 = vmatmul.mubr.f32.gmra.mxu0 %v866
  %v2083 = vpop.f32.mrf.mxu0
  %v2084 = vadd.f32 %v292, %v2083
  %v2085 = vpop.f32.mrf.mxu0
  %2086 = vmatprep.mubr.f32.mxu0 0.0
  %2087 = vmatmul.mubr.f32.gmra.mxu0 %v869
  %v2088 = vpop.f32.mrf.mxu0
  %v2089 = vadd.f32 %v292, %v2088
  %v2090 = vpop.f32.mrf.mxu0
  %2091 = vmatprep.mubr.f32.mxu0 0.0
  %2092 = vmatmul.mubr.f32.gmra.mxu0 %v872
  %v2093 = vpop.f32.mrf.mxu0
  %v2094 = vadd.f32 %v292, %v2093
  %v2095 = vpop.f32.mrf.mxu0
  %2096 = vmatprep.mubr.f32.mxu0 0.0
  %2097 = vmatmul.mubr.f32.gmra.mxu0 %v875
  %v2098 = vpop.f32.mrf.mxu0
  %v2099 = vadd.f32 %v292, %v2098
  %v2100 = vpop.f32.mrf.mxu0
  %2101 = vmatprep.mubr.f32.mxu0 0.0
  %2102 = vmatmul.mubr.f32.gmra.mxu0 %v878
  %v2103 = vpop.f32.mrf.mxu0
  %v2104 = vadd.f32 %v292, %v2103
  %v2105 = vpop.f32.mrf.mxu0
  %2106 = vmatprep.mubr.f32.mxu0 0.0
  %2107 = vmatmul.mubr.f32.gmra.mxu0 %v881
  %v2108 = vpop.f32.mrf.mxu0
  %v2109 = vadd.f32 %v292, %v2108
  %v2110 = vpop.f32.mrf.mxu0
  %2111 = vmatprep.mubr.f32.mxu0 0.0
  %2112 = vmatmul.mubr.f32.gmra.mxu0 %v884
  %v2113 = vpop.f32.mrf.mxu0
  %v2114 = vadd.f32 %v292, %v2113
  %v2115 = vpop.f32.mrf.mxu0
  %2116 = vmatprep.mubr.f32.mxu0 0.0
  %2117 = vmatmul.mubr.f32.gmra.mxu0 %v887
  %v2118 = vpop.f32.mrf.mxu0
  %v2119 = vadd.f32 %v292, %v2118
  %v2120 = vpop.f32.mrf.mxu0
  %2121 = vmatprep.mubr.f32.mxu0 0.0
  %2122 = vmatmul.mubr.f32.gmra.mxu0 %v890
  %v2123 = vpop.f32.mrf.mxu0
  %v2124 = vadd.f32 %v292, %v2123
  %v2125 = vpop.f32.mrf.mxu0
  %2126 = vmatprep.mubr.f32.mxu0 0.0
  %2127 = vmatmul.mubr.f32.gmra.mxu0 %v893
  %v2128 = vpop.f32.mrf.mxu0
  %v2129 = vadd.f32 %v292, %v2128
  %v2130 = vpop.f32.mrf.mxu0
  %2131 = vmatprep.mubr.f32.mxu0 0.0
  %2132 = vmatmul.mubr.f32.gmra.mxu0 %v896
  %v2133 = vpop.f32.mrf.mxu0
  %v2134 = vadd.f32 %v292, %v2133
  %v2135 = vpop.f32.mrf.mxu0
  %2136 = vmatprep.mubr.f32.mxu0 0.0
  %2137 = vmatmul.mubr.f32.gmra.mxu0 %v899
  %v2138 = vpop.f32.mrf.mxu0
  %v2139 = vadd.f32 %v292, %v2138
  %v2140 = vpop.f32.mrf.mxu0
  %2141 = vmatprep.mubr.f32.mxu0 0.0
  %2142 = vmatmul.mubr.f32.gmra.mxu0 %v902
  %v2143 = vpop.f32.mrf.mxu0
  %v2144 = vadd.f32 %v292, %v2143
  %v2145 = vpop.f32.mrf.mxu0
  %2146 = vmatprep.mubr.f32.mxu0 0.0
  %2147 = vmatmul.mubr.f32.gmra.mxu0 %v905
  %v2148 = vpop.f32.mrf.mxu0
  %v2149 = vadd.f32 %v292, %v2148
  %v2150 = vpop.f32.mrf.mxu0
  %2151 = vmatprep.mubr.f32.mxu0 0.0
  %2152 = vmatmul.mubr.f32.gmra.mxu0 %v908
  %v2153 = vpop.f32.mrf.mxu0
  %v2154 = vadd.f32 %v292, %v2153
  %v2155 = vpop.f32.mrf.mxu0
  %2156 = vmatprep.mubr.f32.mxu0 0.0
  %2157 = vmatmul.mubr.f32.gmra.mxu0 %v911
  %v2158 = vpop.f32.mrf.mxu0
  %v2159 = vadd.f32 %v292, %v2158
  %v2160 = vpop.f32.mrf.mxu0
  %2161 = vmatprep.mubr.f32.mxu0 0.0
  %2162 = vmatmul.mubr.f32.gmra.mxu0 %v914
  %v2163 = vpop.f32.mrf.mxu0
  %v2164 = vadd.f32 %v292, %v2163
  %v2165 = vpop.f32.mrf.mxu0
  %2166 = vmatprep.mubr.f32.mxu0 0.0
  %2167 = vmatmul.mubr.f32.gmra.mxu0 %v917
  %v2168 = vpop.f32.mrf.mxu0
  %v2169 = vadd.f32 %v292, %v2168
  %v2170 = vpop.f32.mrf.mxu0
  %2171 = vmatprep.mubr.f32.mxu0 0.0
  %2172 = vmatmul.mubr.f32.gmra.mxu0 %v920
  %v2173 = vpop.f32.mrf.mxu0
  %v2174 = vadd.f32 %v292, %v2173
  %v2175 = vpop.f32.mrf.mxu0
  %2176 = vmatprep.mubr.f32.mxu0 0.0
  %2177 = vmatmul.mubr.f32.gmra.mxu0 %v923
  %v2178 = vpop.f32.mrf.mxu0
  %v2179 = vadd.f32 %v292, %v2178
  %v2180 = vpop.f32.mrf.mxu0
  %2181 = vmatprep.mubr.f32.mxu0 0.0
  %2182 = vmatmul.mubr.f32.gmra.mxu0 %v926
  %v2183 = vpop.f32.mrf.mxu0
  %v2184 = vadd.f32 %v292, %v2183
  %v2185 = vpop.f32.mrf.mxu0
  %2186 = vmatprep.mubr.f32.mxu0 0.0
  %2187 = vmatmul.mubr.f32.gmra.mxu0 %v929
  %v2188 = vpop.f32.mrf.mxu0
  %v2189 = vadd.f32 %v292, %v2188
  %v2190 = vpop.f32.mrf.mxu0
  %2191 = vmatprep.mubr.f32.mxu0 0.0
  %2192 = vmatmul.mubr.f32.gmra.mxu0 %v932
  %v2193 = vpop.f32.mrf.mxu0
  %v2194 = vadd.f32 %v292, %v2193
  %v2195 = vpop.f32.mrf.mxu0
  %2196 = vmatprep.mubr.f32.mxu0 0.0
  %2197 = vmatmul.mubr.f32.gmra.mxu0 %v935
  %v2198 = vpop.f32.mrf.mxu0
  %v2199 = vadd.f32 %v292, %v2198
  %v2200 = vpop.f32.mrf.mxu0
  %2201 = vmatprep.mubr.f32.mxu0 0.0
  %2202 = vmatmul.mubr.f32.gmra.mxu0 %v938
  %v2203 = vpop.f32.mrf.mxu0
  %v2204 = vadd.f32 %v292, %v2203
  %v2205 = vpop.f32.mrf.mxu0
  %2206 = vmatprep.mubr.f32.mxu0 0.0
  %2207 = vmatmul.mubr.f32.gmra.mxu0 %v941
  %v2208 = vpop.f32.mrf.mxu0
  %v2209 = vadd.f32 %v292, %v2208
  %v2210 = vpop.f32.mrf.mxu0
  %2211 = vmatprep.mubr.f32.mxu0 0.0
  %2212 = vmatmul.mubr.f32.gmra.mxu0 %v944
  %v2213 = vpop.f32.mrf.mxu0
  %v2214 = vadd.f32 %v292, %v2213
  %v2215 = vpop.f32.mrf.mxu0
  %2216 = vmatprep.mubr.f32.mxu0 0.0
  %2217 = vmatmul.mubr.f32.gmra.mxu0 %v947
  %v2218 = vpop.f32.mrf.mxu0
  %v2219 = vadd.f32 %v292, %v2218
  %v2220 = vpop.f32.mrf.mxu0
  %2221 = vmatprep.mubr.f32.mxu0 0.0
  %2222 = vmatmul.mubr.f32.gmra.mxu0 %v950
  %v2223 = vpop.f32.mrf.mxu0
  %v2224 = vadd.f32 %v292, %v2223
  %v2225 = vpop.f32.mrf.mxu0
  %2226 = vmatprep.mubr.f32.mxu0 0.0
  %2227 = vmatmul.mubr.f32.gmra.mxu0 %v953
  %v2228 = vpop.f32.mrf.mxu0
  %v2229 = vadd.f32 %v292, %v2228
  %v2230 = vpop.f32.mrf.mxu0
  %2231 = vmatprep.mubr.f32.mxu0 0.0
  %2232 = vmatmul.mubr.f32.gmra.mxu0 %v956
  %v2233 = vpop.f32.mrf.mxu0
  %v2234 = vadd.f32 %v292, %v2233
  %v2235 = vpop.f32.mrf.mxu0
  %2236 = vmatprep.mubr.f32.mxu0 0.0
  %2237 = vmatmul.mubr.f32.gmra.mxu0 %v959
  %v2238 = vpop.f32.mrf.mxu0
  %v2239 = vadd.f32 %v292, %v2238
  %v2240 = vpop.f32.mrf.mxu0
  %2241 = vmatprep.mubr.f32.mxu0 0.0
  %2242 = vmatmul.mubr.f32.gmra.mxu0 %v962
  %v2243 = vpop.f32.mrf.mxu0
  %v2244 = vadd.f32 %v292, %v2243
  %v2245 = vpop.f32.mrf.mxu0
  %2246 = vmatprep.mubr.f32.mxu0 0.0
  %2247 = vmatmul.mubr.f32.gmra.mxu0 %v965
  %v2248 = vpop.f32.mrf.mxu0
  %v2249 = vadd.f32 %v292, %v2248
  %v2250 = vpop.f32.mrf.mxu0
  %2251 = vmatprep.mubr.f32.mxu0 0.0
  %2252 = vmatmul.mubr.f32.gmra.mxu0 %v968
  %v2253 = vpop.f32.mrf.mxu0
  %v2254 = vadd.f32 %v292, %v2253
  %v2255 = vpop.f32.mrf.mxu0
  %2256 = vmatprep.mubr.f32.mxu0 0.0
  %2257 = vmatmul.mubr.f32.gmra.mxu0 %v971
  %v2258 = vpop.f32.mrf.mxu0
  %v2259 = vadd.f32 %v292, %v2258
  %v2260 = vpop.f32.mrf.mxu0
  %2261 = vmatprep.mubr.f32.mxu0 0.0
  %2262 = vmatmul.mubr.f32.gmra.mxu0 %v974
  %v2263 = vpop.f32.mrf.mxu0
  %v2264 = vadd.f32 %v292, %v2263
  %v2265 = vpop.f32.mrf.mxu0
  %2266 = vmatprep.mubr.f32.mxu0 0.0
  %2267 = vmatmul.mubr.f32.gmra.mxu0 %v977
  %v2268 = vpop.f32.mrf.mxu0
  %v2269 = vadd.f32 %v292, %v2268
  %v2270 = vpop.f32.mrf.mxu0
  %2271 = vmatprep.mubr.f32.mxu0 0.0
  %2272 = vmatmul.mubr.f32.gmra.mxu0 %v980
  %v2273 = vpop.f32.mrf.mxu0
  %v2274 = vadd.f32 %v292, %v2273
  %v2275 = vpop.f32.mrf.mxu0
  %2276 = vmatprep.mubr.f32.mxu0 0.0
  %2277 = vmatmul.mubr.f32.gmra.mxu0 %v983
  %v2278 = vpop.f32.mrf.mxu0
  %v2279 = vadd.f32 %v292, %v2278
  %v2280 = vpop.f32.mrf.mxu0
  %2281 = vmatprep.mubr.f32.mxu0 0.0
  %2282 = vmatmul.mubr.f32.gmra.mxu0 %v986
  %v2283 = vpop.f32.mrf.mxu0
  %v2284 = vadd.f32 %v292, %v2283
  %v2285 = vpop.f32.mrf.mxu0
  %2286 = vmatprep.mubr.f32.mxu0 0.0
  %2287 = vmatmul.mubr.f32.gmra.mxu0 %v989
  %v2288 = vpop.f32.mrf.mxu0
  %v2289 = vadd.f32 %v292, %v2288
  %v2290 = vpop.f32.mrf.mxu0
  %2291 = vmatprep.mubr.f32.mxu0 0.0
  %2292 = vmatmul.mubr.f32.gmra.mxu0 %v992
  %v2293 = vpop.f32.mrf.mxu0
  %v2294 = vadd.f32 %v292, %v2293
  %v2295 = vpop.f32.mrf.mxu0
  %2296 = vmatprep.mubr.f32.mxu0 0.0
  %2297 = vmatmul.mubr.f32.gmra.mxu0 %v995
  %v2298 = vpop.f32.mrf.mxu0
  %v2299 = vadd.f32 %v292, %v2298
  %v2300 = vpop.f32.mrf.mxu0
  %2301 = vmatprep.mubr.f32.mxu0 0.0
  %2302 = vmatmul.mubr.f32.gmra.mxu0 %v998
  %v2303 = vpop.f32.mrf.mxu0
  %v2304 = vadd.f32 %v292, %v2303
  %v2305 = vpop.f32.mrf.mxu0
  %2306 = vmatprep.mubr.f32.mxu0 0.0
  %2307 = vmatmul.mubr.f32.gmra.mxu0 %v1001
  %v2308 = vpop.f32.mrf.mxu0
  %v2309 = vadd.f32 %v292, %v2308
  %v2310 = vpop.f32.mrf.mxu0
  %2311 = vmatprep.mubr.f32.mxu0 0.0
  %2312 = vmatmul.mubr.f32.gmra.mxu0 %v1004
  %v2313 = vpop.f32.mrf.mxu0
  %v2314 = vadd.f32 %v292, %v2313
  %v2315 = vpop.f32.mrf.mxu0
  %2316 = vmatprep.mubr.f32.mxu0 0.0
  %2317 = vmatmul.mubr.f32.gmra.mxu0 %v1007
  %v2318 = vpop.f32.mrf.mxu0
  %v2319 = vadd.f32 %v292, %v2318
  %v2320 = vpop.f32.mrf.mxu0
  %2321 = vmatprep.mubr.f32.mxu0 0.0
  %2322 = vmatmul.mubr.f32.gmra.mxu0 %v1010
  %v2323 = vpop.f32.mrf.mxu0
  %v2324 = vadd.f32 %v292, %v2323
  %v2325 = vpop.f32.mrf.mxu0
  %2326 = vmatprep.mubr.f32.mxu0 0.0
  %2327 = vmatmul.mubr.f32.gmra.mxu0 %v1013
  %v2328 = vpop.f32.mrf.mxu0
  %v2329 = vadd.f32 %v292, %v2328
  %v2330 = vpop.f32.mrf.mxu0
  %2331 = vmatprep.mubr.f32.mxu0 0.0
  %2332 = vmatmul.mubr.f32.gmra.mxu0 %v1016
  %v2333 = vpop.f32.mrf.mxu0
  %v2334 = vadd.f32 %v292, %v2333
  %v2335 = vpop.f32.mrf.mxu0
  %2336 = vmatprep.mubr.f32.mxu0 0.0
  %2337 = vmatmul.mubr.f32.gmra.mxu0 %v1019
  %v2338 = vpop.f32.mrf.mxu0
  %v2339 = vadd.f32 %v292, %v2338
  %v2340 = vpop.f32.mrf.mxu0
  %2341 = vmatprep.mubr.f32.mxu0 0.0
  %2342 = vmatmul.mubr.f32.gmra.mxu0 %v1022
  %v2343 = vpop.f32.mrf.mxu0
  %v2344 = vadd.f32 %v292, %v2343
  %v2345 = vpop.f32.mrf.mxu0
  %2346 = vmatprep.mubr.f32.mxu0 0.0
  %2347 = vmatmul.mubr.f32.gmra.mxu0 %v1025
  %v2348 = vpop.f32.mrf.mxu0
  %v2349 = vadd.f32 %v292, %v2348
  %v2350 = vpop.f32.mrf.mxu0
  %2351 = vmatprep.mubr.f32.mxu0 0.0
  %2352 = vmatmul.mubr.f32.gmra.mxu0 %v1028
  %v2353 = vpop.f32.mrf.mxu0
  %v2354 = vadd.f32 %v292, %v2353
  %v2355 = vpop.f32.mrf.mxu0
  %2356 = vmatprep.mubr.f32.mxu0 0.0
  %2357 = vmatmul.mubr.f32.gmra.mxu0 %v1031
  %v2358 = vpop.f32.mrf.mxu0
  %v2359 = vadd.f32 %v292, %v2358
  %v2360 = vpop.f32.mrf.mxu0
  %2361 = vmatprep.mubr.f32.mxu0 0.0
  %2362 = vmatmul.mubr.f32.gmra.mxu0 %v1034
  %v2363 = vpop.f32.mrf.mxu0
  %v2364 = vadd.f32 %v292, %v2363
  %v2365 = vpop.f32.mrf.mxu0
  %2366 = vmatprep.mubr.f32.mxu0 0.0
  %2367 = vmatmul.mubr.f32.gmra.mxu0 %v1037
  %v2368 = vpop.f32.mrf.mxu0
  %v2369 = vadd.f32 %v292, %v2368
  %v2370 = vpop.f32.mrf.mxu0
  %2371 = vmatprep.mubr.f32.mxu0 0.0
  %2372 = vmatmul.mubr.f32.gmra.mxu0 %v1040
  %v2373 = vpop.f32.mrf.mxu0
  %v2374 = vadd.f32 %v292, %v2373
  %v2375 = vpop.f32.mrf.mxu0
  %2376 = vmatprep.mubr.f32.mxu0 0.0
  %2377 = vmatmul.mubr.f32.gmra.mxu0 %v1043
  %v2378 = vpop.f32.mrf.mxu0
  %v2379 = vadd.f32 %v292, %v2378
  %v2380 = vpop.f32.mrf.mxu0
  %2381 = vmatprep.mubr.f32.mxu0 0.0
  %2382 = vmatmul.mubr.f32.gmra.mxu0 %v1046
  %v2383 = vpop.f32.mrf.mxu0
  %v2384 = vadd.f32 %v292, %v2383
  %v2385 = vpop.f32.mrf.mxu0
  %2386 = vmatprep.mubr.f32.mxu0 0.0
  %2387 = vmatmul.mubr.f32.gmra.mxu0 %v1049
  %v2388 = vpop.f32.mrf.mxu0
  %v2389 = vadd.f32 %v292, %v2388
  %v2390 = vpop.f32.mrf.mxu0
  %2391 = vmatprep.mubr.f32.mxu0 0.0
  %2392 = vmatmul.mubr.f32.gmra.mxu0 %v1052
  %v2393 = vpop.f32.mrf.mxu0
  %v2394 = vadd.f32 %v292, %v2393
  %v2395 = vpop.f32.mrf.mxu0
  %2396 = vmatprep.mubr.f32.mxu0 0.0
  %2397 = vmatmul.mubr.f32.gmra.mxu0 %v1055
  %v2398 = vpop.f32.mrf.mxu0
  %v2399 = vadd.f32 %v292, %v2398
  %v2400 = vpop.f32.mrf.mxu0
  %2401 = vmatprep.mubr.f32.mxu0 0.0
  %2402 = vmatmul.mubr.f32.gmra.mxu0 %v1058
  %v2403 = vpop.f32.mrf.mxu0
  %v2404 = vadd.f32 %v292, %v2403
  %v2405 = vpop.f32.mrf.mxu0
  %2406 = vmatprep.mubr.f32.mxu0 0.0
  %2407 = vmatmul.mubr.f32.gmra.mxu0 %v1061
  %v2408 = vpop.f32.mrf.mxu0
  %v2409 = vadd.f32 %v292, %v2408
  %v2410 = vpop.f32.mrf.mxu0
  %2411 = vdwg.mxu0
  %v2412 = vmax.f32 %v1134, 0.0
  %v2413 = vmax.f32 %v1139, 0.0
  %v2414 = vmax.f32 %v1144, 0.0
  %v2415 = vmax.f32 %v1149, 0.0
  %v2416 = vmax.f32 %v1154, 0.0
  %v2417 = vmax.f32 %v1159, 0.0
  %v2418 = vmax.f32 %v1164, 0.0
  %v2419 = vmax.f32 %v1169, 0.0
  %v2420 = vmax.f32 %v1174, 0.0
  %v2421 = vmax.f32 %v1179, 0.0
  %v2422 = vmax.f32 %v1184, 0.0
  %v2423 = vmax.f32 %v1189, 0.0
  %v2424 = vmax.f32 %v1194, 0.0
  %v2425 = vmax.f32 %v1199, 0.0
  %v2426 = vmax.f32 %v1204, 0.0
  %v2427 = vmax.f32 %v1209, 0.0
  %v2428 = vmax.f32 %v1214, 0.0
  %v2429 = vmax.f32 %v1219, 0.0
  %v2430 = vmax.f32 %v1224, 0.0
  %v2431 = vmax.f32 %v1229, 0.0
  %v2432 = vmax.f32 %v1234, 0.0
  %v2433 = vmax.f32 %v1239, 0.0
  %v2434 = vmax.f32 %v1244, 0.0
  %v2435 = vmax.f32 %v1249, 0.0
  %v2436 = vmax.f32 %v1254, 0.0
  %v2437 = vmax.f32 %v1259, 0.0
  %v2438 = vmax.f32 %v1264, 0.0
  %v2439 = vmax.f32 %v1269, 0.0
  %v2440 = vmax.f32 %v1274, 0.0
  %v2441 = vmax.f32 %v1279, 0.0
  %v2442 = vmax.f32 %v1284, 0.0
  %v2443 = vmax.f32 %v1289, 0.0
  %v2444 = vmax.f32 %v1294, 0.0
  %v2445 = vmax.f32 %v1299, 0.0
  %v2446 = vmax.f32 %v1304, 0.0
  %v2447 = vmax.f32 %v1309, 0.0
  %v2448 = vmax.f32 %v1314, 0.0
  %v2449 = vmax.f32 %v1319, 0.0
  %v2450 = vmax.f32 %v1324, 0.0
  %v2451 = vmax.f32 %v1329, 0.0
  %v2452 = vmax.f32 %v1334, 0.0
  %v2453 = vmax.f32 %v1339, 0.0
  %v2454 = vmax.f32 %v1344, 0.0
  %v2455 = vmax.f32 %v1349, 0.0
  %v2456 = vmax.f32 %v1354, 0.0
  %v2457 = vmax.f32 %v1359, 0.0
  %v2458 = vmax.f32 %v1364, 0.0
  %v2459 = vmax.f32 %v1369, 0.0
  %v2460 = vmax.f32 %v1374, 0.0
  %v2461 = vmax.f32 %v1379, 0.0
  %v2462 = vmax.f32 %v1384, 0.0
  %v2463 = vmax.f32 %v1389, 0.0
  %v2464 = vmax.f32 %v1394, 0.0
  %v2465 = vmax.f32 %v1399, 0.0
  %v2466 = vmax.f32 %v1404, 0.0
  %v2467 = vmax.f32 %v1409, 0.0
  %v2468 = vmax.f32 %v1414, 0.0
  %v2469 = vmax.f32 %v1419, 0.0
  %v2470 = vmax.f32 %v1424, 0.0
  %v2471 = vmax.f32 %v1429, 0.0
  %v2472 = vmax.f32 %v1434, 0.0
  %v2473 = vmax.f32 %v1439, 0.0
  %v2474 = vmax.f32 %v1444, 0.0
  %v2475 = vmax.f32 %v1449, 0.0
  %v2476 = vmax.f32 %v1454, 0.0
  %v2477 = vmax.f32 %v1459, 0.0
  %v2478 = vmax.f32 %v1464, 0.0
  %v2479 = vmax.f32 %v1469, 0.0
  %v2480 = vmax.f32 %v1474, 0.0
  %v2481 = vmax.f32 %v1479, 0.0
  %v2482 = vmax.f32 %v1484, 0.0
  %v2483 = vmax.f32 %v1489, 0.0
  %v2484 = vmax.f32 %v1494, 0.0
  %v2485 = vmax.f32 %v1499, 0.0
  %v2486 = vmax.f32 %v1504, 0.0
  %v2487 = vmax.f32 %v1509, 0.0
  %v2488 = vmax.f32 %v1514, 0.0
  %v2489 = vmax.f32 %v1519, 0.0
  %v2490 = vmax.f32 %v1524, 0.0
  %v2491 = vmax.f32 %v1529, 0.0
  %v2492 = vmax.f32 %v1534, 0.0
  %v2493 = vmax.f32 %v1539, 0.0
  %v2494 = vmax.f32 %v1544, 0.0
  %v2495 = vmax.f32 %v1549, 0.0
  %v2496 = vmax.f32 %v1554, 0.0
  %v2497 = vmax.f32 %v1559, 0.0
  %v2498 = vmax.f32 %v1564, 0.0
  %v2499 = vmax.f32 %v1569, 0.0
  %v2500 = vmax.f32 %v1574, 0.0
  %v2501 = vmax.f32 %v1579, 0.0
  %v2502 = vmax.f32 %v1584, 0.0
  %v2503 = vmax.f32 %v1589, 0.0
  %v2504 = vmax.f32 %v1594, 0.0
  %v2505 = vmax.f32 %v1599, 0.0
  %v2506 = vmax.f32 %v1604, 0.0
  %v2507 = vmax.f32 %v1609, 0.0
  %v2508 = vmax.f32 %v1614, 0.0
  %v2509 = vmax.f32 %v1619, 0.0
  %v2510 = vmax.f32 %v1624, 0.0
  %v2511 = vmax.f32 %v1629, 0.0
  %v2512 = vmax.f32 %v1634, 0.0
  %v2513 = vmax.f32 %v1639, 0.0
  %v2514 = vmax.f32 %v1644, 0.0
  %v2515 = vmax.f32 %v1649, 0.0
  %v2516 = vmax.f32 %v1654, 0.0
  %v2517 = vmax.f32 %v1659, 0.0
  %v2518 = vmax.f32 %v1664, 0.0
  %v2519 = vmax.f32 %v1669, 0.0
  %v2520 = vmax.f32 %v1674, 0.0
  %v2521 = vmax.f32 %v1679, 0.0
  %v2522 = vmax.f32 %v1684, 0.0
  %v2523 = vmax.f32 %v1689, 0.0
  %v2524 = vmax.f32 %v1694, 0.0
  %v2525 = vmax.f32 %v1699, 0.0
  %v2526 = vmax.f32 %v1704, 0.0
  %v2527 = vmax.f32 %v1709, 0.0
  %v2528 = vmax.f32 %v1714, 0.0
  %v2529 = vmax.f32 %v1719, 0.0
  %v2530 = vmax.f32 %v1724, 0.0
  %v2531 = vmax.f32 %v1729, 0.0
  %v2532 = vmax.f32 %v1734, 0.0
  %v2533 = vmax.f32 %v1739, 0.0
  %v2534 = vmax.f32 %v1744, 0.0
  %v2535 = vmax.f32 %v1749, 0.0
  %v2536 = vmax.f32 %v1754, 0.0
  %v2537 = vmax.f32 %v1759, 0.0
  %v2538 = vmax.f32 %v1764, 0.0
  %v2539 = vmax.f32 %v1769, 0.0
  %v2540 = vmax.f32 %v1774, 0.0
  %v2541 = vmax.f32 %v1779, 0.0
  %v2542 = vmax.f32 %v1784, 0.0
  %v2543 = vmax.f32 %v1789, 0.0
  %v2544 = vmax.f32 %v1794, 0.0
  %v2545 = vmax.f32 %v1799, 0.0
  %v2546 = vmax.f32 %v1804, 0.0
  %v2547 = vmax.f32 %v1809, 0.0
  %v2548 = vmax.f32 %v1814, 0.0
  %v2549 = vmax.f32 %v1819, 0.0
  %v2550 = vmax.f32 %v1824, 0.0
  %v2551 = vmax.f32 %v1829, 0.0
  %v2552 = vmax.f32 %v1834, 0.0
  %v2553 = vmax.f32 %v1839, 0.0
  %v2554 = vmax.f32 %v1844, 0.0
  %v2555 = vmax.f32 %v1849, 0.0
  %v2556 = vmax.f32 %v1854, 0.0
  %v2557 = vmax.f32 %v1859, 0.0
  %v2558 = vmax.f32 %v1864, 0.0
  %v2559 = vmax.f32 %v1869, 0.0
  %v2560 = vmax.f32 %v1874, 0.0
  %v2561 = vmax.f32 %v1879, 0.0
  %v2562 = vmax.f32 %v1884, 0.0
  %v2563 = vmax.f32 %v1889, 0.0
  %v2564 = vmax.f32 %v1894, 0.0
  %v2565 = vmax.f32 %v1899, 0.0
  %v2566 = vmax.f32 %v1904, 0.0
  %v2567 = vmax.f32 %v1909, 0.0
  %v2568 = vmax.f32 %v1914, 0.0
  %v2569 = vmax.f32 %v1919, 0.0
  %v2570 = vmax.f32 %v1924, 0.0
  %v2571 = vmax.f32 %v1929, 0.0
  %v2572 = vmax.f32 %v1934, 0.0
  %v2573 = vmax.f32 %v1939, 0.0
  %v2574 = vmax.f32 %v1944, 0.0
  %v2575 = vmax.f32 %v1949, 0.0
  %v2576 = vmax.f32 %v1954, 0.0
  %v2577 = vmax.f32 %v1959, 0.0
  %v2578 = vmax.f32 %v1964, 0.0
  %v2579 = vmax.f32 %v1969, 0.0
  %v2580 = vmax.f32 %v1974, 0.0
  %v2581 = vmax.f32 %v1979, 0.0
  %v2582 = vmax.f32 %v1984, 0.0
  %v2583 = vmax.f32 %v1989, 0.0
  %v2584 = vmax.f32 %v1994, 0.0
  %v2585 = vmax.f32 %v1999, 0.0
  %v2586 = vmax.f32 %v2004, 0.0
  %v2587 = vmax.f32 %v2009, 0.0
  %v2588 = vmax.f32 %v2014, 0.0
  %v2589 = vmax.f32 %v2019, 0.0
  %v2590 = vmax.f32 %v2024, 0.0
  %v2591 = vmax.f32 %v2029, 0.0
  %v2592 = vmax.f32 %v2034, 0.0
  %v2593 = vmax.f32 %v2039, 0.0
  %v2594 = vmax.f32 %v2044, 0.0
  %v2595 = vmax.f32 %v2049, 0.0
  %v2596 = vmax.f32 %v2054, 0.0
  %v2597 = vmax.f32 %v2059, 0.0
  %v2598 = vmax.f32 %v2064, 0.0
  %v2599 = vmax.f32 %v2069, 0.0
  %v2600 = vmax.f32 %v2074, 0.0
  %v2601 = vmax.f32 %v2079, 0.0
  %v2602 = vmax.f32 %v2084, 0.0
  %v2603 = vmax.f32 %v2089, 0.0
  %v2604 = vmax.f32 %v2094, 0.0
  %v2605 = vmax.f32 %v2099, 0.0
  %v2606 = vmax.f32 %v2104, 0.0
  %v2607 = vmax.f32 %v2109, 0.0
  %v2608 = vmax.f32 %v2114, 0.0
  %v2609 = vmax.f32 %v2119, 0.0
  %v2610 = vmax.f32 %v2124, 0.0
  %v2611 = vmax.f32 %v2129, 0.0
  %v2612 = vmax.f32 %v2134, 0.0
  %v2613 = vmax.f32 %v2139, 0.0
  %v2614 = vmax.f32 %v2144, 0.0
  %v2615 = vmax.f32 %v2149, 0.0
  %v2616 = vmax.f32 %v2154, 0.0
  %v2617 = vmax.f32 %v2159, 0.0
  %v2618 = vmax.f32 %v2164, 0.0
  %v2619 = vmax.f32 %v2169, 0.0
  %v2620 = vmax.f32 %v2174, 0.0
  %v2621 = vmax.f32 %v2179, 0.0
  %v2622 = vmax.f32 %v2184, 0.0
  %v2623 = vmax.f32 %v2189, 0.0
  %v2624 = vmax.f32 %v2194, 0.0
  %v2625 = vmax.f32 %v2199, 0.0
  %v2626 = vmax.f32 %v2204, 0.0
  %v2627 = vmax.f32 %v2209, 0.0
  %v2628 = vmax.f32 %v2214, 0.0
  %v2629 = vmax.f32 %v2219, 0.0
  %v2630 = vmax.f32 %v2224, 0.0
  %v2631 = vmax.f32 %v2229, 0.0
  %v2632 = vmax.f32 %v2234, 0.0
  %v2633 = vmax.f32 %v2239, 0.0
  %v2634 = vmax.f32 %v2244, 0.0
  %v2635 = vmax.f32 %v2249, 0.0
  %v2636 = vmax.f32 %v2254, 0.0
  %v2637 = vmax.f32 %v2259, 0.0
  %v2638 = vmax.f32 %v2264, 0.0
  %v2639 = vmax.f32 %v2269, 0.0
  %v2640 = vmax.f32 %v2274, 0.0
  %v2641 = vmax.f32 %v2279, 0.0
  %v2642 = vmax.f32 %v2284, 0.0
  %v2643 = vmax.f32 %v2289, 0.0
  %v2644 = vmax.f32 %v2294, 0.0
  %v2645 = vmax.f32 %v2299, 0.0
  %v2646 = vmax.f32 %v2304, 0.0
  %v2647 = vmax.f32 %v2309, 0.0
  %v2648 = vmax.f32 %v2314, 0.0
  %v2649 = vmax.f32 %v2319, 0.0
  %v2650 = vmax.f32 %v2324, 0.0
  %v2651 = vmax.f32 %v2329, 0.0
  %v2652 = vmax.f32 %v2334, 0.0
  %v2653 = vmax.f32 %v2339, 0.0
  %v2654 = vmax.f32 %v2344, 0.0
  %v2655 = vmax.f32 %v2349, 0.0
  %v2656 = vmax.f32 %v2354, 0.0
  %v2657 = vmax.f32 %v2359, 0.0
  %v2658 = vmax.f32 %v2364, 0.0
  %v2659 = vmax.f32 %v2369, 0.0
  %v2660 = vmax.f32 %v2374, 0.0
  %v2661 = vmax.f32 %v2379, 0.0
  %v2662 = vmax.f32 %v2384, 0.0
  %v2663 = vmax.f32 %v2389, 0.0
  %v2664 = vmax.f32 %v2394, 0.0
  %v2665 = vmax.f32 %v2399, 0.0
  %v2666 = vmax.f32 %v2404, 0.0
  %v2667 = vmax.f32 %v2409, 0.0
  %v2668 = vld [vmem:[%s4] sm:$0xff]
  %v2669 = vld [vmem:[%s4 + $0x8] sm:$0xff]
  %v2670 = vld [vmem:[%s4 + $0x10] sm:$0xff]
  %v2671 = vld [vmem:[%s4 + $0x18] sm:$0xff]
  %v2672 = vld [vmem:[%s4 + $0x20] sm:$0xff]
  %v2673 = vld [vmem:[%s4 + $0x28] sm:$0xff]
  %v2674 = vld [vmem:[%s4 + $0x30] sm:$0xff]
  %v2675 = vld [vmem:[%s4 + $0x38] sm:$0xff]
  %v2676 = vld [vmem:[%s4 + $0x40] sm:$0xff]
  %v2677 = vld [vmem:[%s4 + $0x48] sm:$0xff]
  %v2678 = vld [vmem:[%s4 + $0x50] sm:$0xff]
  %v2679 = vld [vmem:[%s4 + $0x58] sm:$0xff]
  %v2680 = vld [vmem:[%s4 + $0x60] sm:$0xff]
  %v2681 = vld [vmem:[%s4 + $0x68] sm:$0xff]
  %v2682 = vld [vmem:[%s4 + $0x70] sm:$0xff]
  %v2683 = vld [vmem:[%s4 + $0x78] sm:$0xff]
  %v2684 = vld [vmem:[%s5] sm:$0x1]
  %v2686 = vlaneseq
  %v2687 = vshrl.u32 %v2686, 7
  %v2688 = vsub.s32 0, %v2687
  %v2689 = vrot.slane %v2684, %v2688
  %2691 = vmatprep.subr.mxu0 0.0
  %2692 = vmatpush1.msra.mxu0 %v2683
  %2693 = vmatprep.subr.mxu0 0.0
  %2694 = vmatpush1.msra.mxu0 %v2682
  %2695 = vmatprep.subr.mxu0 0.0
  %2696 = vmatpush1.msra.mxu0 %v2681
  %2697 = vmatprep.subr.mxu0 0.0
  %2698 = vmatpush1.msra.mxu0 %v2680
  %2699 = vmatprep.subr.mxu0 0.0
  %2700 = vmatpush1.msra.mxu0 %v2679
  %2701 = vmatprep.subr.mxu0 0.0
  %2702 = vmatpush1.msra.mxu0 %v2678
  %2703 = vmatprep.subr.mxu0 0.0
  %2704 = vmatpush1.msra.mxu0 %v2677
  %2705 = vmatprep.subr.mxu0 0.0
  %2706 = vmatpush1.msra.mxu0 %v2676
  %2707 = vmatprep.subr.mxu0 0.0
  %2708 = vmatpush1.msra.mxu0 %v2675
  %2709 = vmatprep.subr.mxu0 0.0
  %2710 = vmatpush1.msra.mxu0 %v2674
  %2711 = vmatprep.subr.mxu0 0.0
  %2712 = vmatpush1.msra.mxu0 %v2673
  %2713 = vmatprep.subr.mxu0 0.0
  %2714 = vmatpush1.msra.mxu0 %v2672
  %2715 = vmatprep.subr.mxu0 0.0
  %2716 = vmatpush1.msra.mxu0 %v2671
  %2717 = vmatprep.subr.mxu0 0.0
  %2718 = vmatpush1.msra.mxu0 %v2670
  %2719 = vmatprep.subr.mxu0 0.0
  %2720 = vmatpush1.msra.mxu0 %v2669
  %2721 = vmatprep.subr.mxu0 0.0
  %2722 = vmatpush1.msra.mxu0 %v2668
  %2723 = vmatprep.subr.mxu0 0.0
  %2724 = vmatpush2.msra.mxu0 0.0
  %2725 = vmatprep.subr.mxu0 0.0
  %2726 = vmatpush2.msra.mxu0 0.0
  %2727 = vmatprep.subr.mxu0 0.0
  %2728 = vmatpush2.msra.mxu0 0.0
  %2729 = vmatprep.subr.mxu0 0.0
  %2730 = vmatpush2.msra.mxu0 0.0
  %2731 = vmatprep.subr.mxu0 0.0
  %2732 = vmatpush2.msra.mxu0 0.0
  %2733 = vmatprep.subr.mxu0 0.0
  %2734 = vmatpush2.msra.mxu0 0.0
  %2735 = vmatprep.subr.mxu0 0.0
  %2736 = vmatpush2.msra.mxu0 0.0
  %2737 = vmatprep.subr.mxu0 0.0
  %2738 = vmatpush2.msra.mxu0 0.0
  %2739 = vmatprep.subr.mxu0 0.0
  %2740 = vmatpush2.msra.mxu0 0.0
  %2741 = vmatprep.subr.mxu0 0.0
  %2742 = vmatpush2.msra.mxu0 0.0
  %2743 = vmatprep.subr.mxu0 0.0
  %2744 = vmatpush2.msra.mxu0 0.0
  %2745 = vmatprep.subr.mxu0 0.0
  %2746 = vmatpush2.msra.mxu0 0.0
  %2747 = vmatprep.subr.mxu0 0.0
  %2748 = vmatpush2.msra.mxu0 0.0
  %2749 = vmatprep.subr.mxu0 0.0
  %2750 = vmatpush2.msra.mxu0 0.0
  %2751 = vmatprep.subr.mxu0 0.0
  %2752 = vmatpush2.msra.mxu0 0.0
  %2753 = vmatprep.subr.mxu0 0.0
  %2754 = vmatpush2.msra.mxu0 0.0
  %2755 = vmatprep.mubr.f32.mxu0 0.0
  %2756 = vmatmul.mubr.f32.gmra.mxu0 %v2412
  %v2757 = vpop.f32.mrf.mxu0
  %v2758 = vadd.f32 %v2689, %v2757
  %v2759 = vpop.f32.mrf.mxu0
  %2760 = vmatprep.mubr.f32.mxu0 0.0
  %2761 = vmatmul.mubr.f32.gmra.mxu0 %v2413
  %v2762 = vpop.f32.mrf.mxu0
  %v2763 = vadd.f32 %v2689, %v2762
  %v2764 = vpop.f32.mrf.mxu0
  %2765 = vmatprep.mubr.f32.mxu0 0.0
  %2766 = vmatmul.mubr.f32.gmra.mxu0 %v2414
  %v2767 = vpop.f32.mrf.mxu0
  %v2768 = vadd.f32 %v2689, %v2767
  %v2769 = vpop.f32.mrf.mxu0
  %2770 = vmatprep.mubr.f32.mxu0 0.0
  %2771 = vmatmul.mubr.f32.gmra.mxu0 %v2415
  %v2772 = vpop.f32.mrf.mxu0
  %v2773 = vadd.f32 %v2689, %v2772
  %v2774 = vpop.f32.mrf.mxu0
  %2775 = vmatprep.mubr.f32.mxu0 0.0
  %2776 = vmatmul.mubr.f32.gmra.mxu0 %v2416
  %v2777 = vpop.f32.mrf.mxu0
  %v2778 = vadd.f32 %v2689, %v2777
  %v2779 = vpop.f32.mrf.mxu0
  %2780 = vmatprep.mubr.f32.mxu0 0.0
  %2781 = vmatmul.mubr.f32.gmra.mxu0 %v2417
  %v2782 = vpop.f32.mrf.mxu0
  %v2783 = vadd.f32 %v2689, %v2782
  %v2784 = vpop.f32.mrf.mxu0
  %2785 = vmatprep.mubr.f32.mxu0 0.0
  %2786 = vmatmul.mubr.f32.gmra.mxu0 %v2418
  %v2787 = vpop.f32.mrf.mxu0
  %v2788 = vadd.f32 %v2689, %v2787
  %v2789 = vpop.f32.mrf.mxu0
  %2790 = vmatprep.mubr.f32.mxu0 0.0
  %2791 = vmatmul.mubr.f32.gmra.mxu0 %v2419
  %v2792 = vpop.f32.mrf.mxu0
  %v2793 = vadd.f32 %v2689, %v2792
  %v2794 = vpop.f32.mrf.mxu0
  %2795 = vmatprep.mubr.f32.mxu0 0.0
  %2796 = vmatmul.mubr.f32.gmra.mxu0 %v2420
  %v2797 = vpop.f32.mrf.mxu0
  %v2798 = vadd.f32 %v2689, %v2797
  %v2799 = vpop.f32.mrf.mxu0
  %2800 = vmatprep.mubr.f32.mxu0 0.0
  %2801 = vmatmul.mubr.f32.gmra.mxu0 %v2421
  %v2802 = vpop.f32.mrf.mxu0
  %v2803 = vadd.f32 %v2689, %v2802
  %v2804 = vpop.f32.mrf.mxu0
  %2805 = vmatprep.mubr.f32.mxu0 0.0
  %2806 = vmatmul.mubr.f32.gmra.mxu0 %v2422
  %v2807 = vpop.f32.mrf.mxu0
  %v2808 = vadd.f32 %v2689, %v2807
  %v2809 = vpop.f32.mrf.mxu0
  %2810 = vmatprep.mubr.f32.mxu0 0.0
  %2811 = vmatmul.mubr.f32.gmra.mxu0 %v2423
  %v2812 = vpop.f32.mrf.mxu0
  %v2813 = vadd.f32 %v2689, %v2812
  %v2814 = vpop.f32.mrf.mxu0
  %2815 = vmatprep.mubr.f32.mxu0 0.0
  %2816 = vmatmul.mubr.f32.gmra.mxu0 %v2424
  %v2817 = vpop.f32.mrf.mxu0
  %v2818 = vadd.f32 %v2689, %v2817
  %v2819 = vpop.f32.mrf.mxu0
  %2820 = vmatprep.mubr.f32.mxu0 0.0
  %2821 = vmatmul.mubr.f32.gmra.mxu0 %v2425
  %v2822 = vpop.f32.mrf.mxu0
  %v2823 = vadd.f32 %v2689, %v2822
  %v2824 = vpop.f32.mrf.mxu0
  %2825 = vmatprep.mubr.f32.mxu0 0.0
  %2826 = vmatmul.mubr.f32.gmra.mxu0 %v2426
  %v2827 = vpop.f32.mrf.mxu0
  %v2828 = vadd.f32 %v2689, %v2827
  %v2829 = vpop.f32.mrf.mxu0
  %2830 = vmatprep.mubr.f32.mxu0 0.0
  %2831 = vmatmul.mubr.f32.gmra.mxu0 %v2427
  %v2832 = vpop.f32.mrf.mxu0
  %v2833 = vadd.f32 %v2689, %v2832
  %v2834 = vpop.f32.mrf.mxu0
  %2835 = vmatprep.mubr.f32.mxu0 0.0
  %2836 = vmatmul.mubr.f32.gmra.mxu0 %v2428
  %v2837 = vpop.f32.mrf.mxu0
  %v2838 = vadd.f32 %v2689, %v2837
  %v2839 = vpop.f32.mrf.mxu0
  %2840 = vmatprep.mubr.f32.mxu0 0.0
  %2841 = vmatmul.mubr.f32.gmra.mxu0 %v2429
  %v2842 = vpop.f32.mrf.mxu0
  %v2843 = vadd.f32 %v2689, %v2842
  %v2844 = vpop.f32.mrf.mxu0
  %2845 = vmatprep.mubr.f32.mxu0 0.0
  %2846 = vmatmul.mubr.f32.gmra.mxu0 %v2430
  %v2847 = vpop.f32.mrf.mxu0
  %v2848 = vadd.f32 %v2689, %v2847
  %v2849 = vpop.f32.mrf.mxu0
  %2850 = vmatprep.mubr.f32.mxu0 0.0
  %2851 = vmatmul.mubr.f32.gmra.mxu0 %v2431
  %v2852 = vpop.f32.mrf.mxu0
  %v2853 = vadd.f32 %v2689, %v2852
  %v2854 = vpop.f32.mrf.mxu0
  %2855 = vmatprep.mubr.f32.mxu0 0.0
  %2856 = vmatmul.mubr.f32.gmra.mxu0 %v2432
  %v2857 = vpop.f32.mrf.mxu0
  %v2858 = vadd.f32 %v2689, %v2857
  %v2859 = vpop.f32.mrf.mxu0
  %2860 = vmatprep.mubr.f32.mxu0 0.0
  %2861 = vmatmul.mubr.f32.gmra.mxu0 %v2433
  %v2862 = vpop.f32.mrf.mxu0
  %v2863 = vadd.f32 %v2689, %v2862
  %v2864 = vpop.f32.mrf.mxu0
  %2865 = vmatprep.mubr.f32.mxu0 0.0
  %2866 = vmatmul.mubr.f32.gmra.mxu0 %v2434
  %v2867 = vpop.f32.mrf.mxu0
  %v2868 = vadd.f32 %v2689, %v2867
  %v2869 = vpop.f32.mrf.mxu0
  %2870 = vmatprep.mubr.f32.mxu0 0.0
  %2871 = vmatmul.mubr.f32.gmra.mxu0 %v2435
  %v2872 = vpop.f32.mrf.mxu0
  %v2873 = vadd.f32 %v2689, %v2872
  %v2874 = vpop.f32.mrf.mxu0
  %2875 = vmatprep.mubr.f32.mxu0 0.0
  %2876 = vmatmul.mubr.f32.gmra.mxu0 %v2436
  %v2877 = vpop.f32.mrf.mxu0
  %v2878 = vadd.f32 %v2689, %v2877
  %v2879 = vpop.f32.mrf.mxu0
  %2880 = vmatprep.mubr.f32.mxu0 0.0
  %2881 = vmatmul.mubr.f32.gmra.mxu0 %v2437
  %v2882 = vpop.f32.mrf.mxu0
  %v2883 = vadd.f32 %v2689, %v2882
  %v2884 = vpop.f32.mrf.mxu0
  %2885 = vmatprep.mubr.f32.mxu0 0.0
  %2886 = vmatmul.mubr.f32.gmra.mxu0 %v2438
  %v2887 = vpop.f32.mrf.mxu0
  %v2888 = vadd.f32 %v2689, %v2887
  %v2889 = vpop.f32.mrf.mxu0
  %2890 = vmatprep.mubr.f32.mxu0 0.0
  %2891 = vmatmul.mubr.f32.gmra.mxu0 %v2439
  %v2892 = vpop.f32.mrf.mxu0
  %v2893 = vadd.f32 %v2689, %v2892
  %v2894 = vpop.f32.mrf.mxu0
  %2895 = vmatprep.mubr.f32.mxu0 0.0
  %2896 = vmatmul.mubr.f32.gmra.mxu0 %v2440
  %v2897 = vpop.f32.mrf.mxu0
  %v2898 = vadd.f32 %v2689, %v2897
  %v2899 = vpop.f32.mrf.mxu0
  %2900 = vmatprep.mubr.f32.mxu0 0.0
  %2901 = vmatmul.mubr.f32.gmra.mxu0 %v2441
  %v2902 = vpop.f32.mrf.mxu0
  %v2903 = vadd.f32 %v2689, %v2902
  %v2904 = vpop.f32.mrf.mxu0
  %2905 = vmatprep.mubr.f32.mxu0 0.0
  %2906 = vmatmul.mubr.f32.gmra.mxu0 %v2442
  %v2907 = vpop.f32.mrf.mxu0
  %v2908 = vadd.f32 %v2689, %v2907
  %v2909 = vpop.f32.mrf.mxu0
  %2910 = vmatprep.mubr.f32.mxu0 0.0
  %2911 = vmatmul.mubr.f32.gmra.mxu0 %v2443
  %v2912 = vpop.f32.mrf.mxu0
  %v2913 = vadd.f32 %v2689, %v2912
  %v2914 = vpop.f32.mrf.mxu0
  %2915 = vmatprep.mubr.f32.mxu0 0.0
  %2916 = vmatmul.mubr.f32.gmra.mxu0 %v2444
  %v2917 = vpop.f32.mrf.mxu0
  %v2918 = vadd.f32 %v2689, %v2917
  %v2919 = vpop.f32.mrf.mxu0
  %2920 = vmatprep.mubr.f32.mxu0 0.0
  %2921 = vmatmul.mubr.f32.gmra.mxu0 %v2445
  %v2922 = vpop.f32.mrf.mxu0
  %v2923 = vadd.f32 %v2689, %v2922
  %v2924 = vpop.f32.mrf.mxu0
  %2925 = vmatprep.mubr.f32.mxu0 0.0
  %2926 = vmatmul.mubr.f32.gmra.mxu0 %v2446
  %v2927 = vpop.f32.mrf.mxu0
  %v2928 = vadd.f32 %v2689, %v2927
  %v2929 = vpop.f32.mrf.mxu0
  %2930 = vmatprep.mubr.f32.mxu0 0.0
  %2931 = vmatmul.mubr.f32.gmra.mxu0 %v2447
  %v2932 = vpop.f32.mrf.mxu0
  %v2933 = vadd.f32 %v2689, %v2932
  %v2934 = vpop.f32.mrf.mxu0
  %2935 = vmatprep.mubr.f32.mxu0 0.0
  %2936 = vmatmul.mubr.f32.gmra.mxu0 %v2448
  %v2937 = vpop.f32.mrf.mxu0
  %v2938 = vadd.f32 %v2689, %v2937
  %v2939 = vpop.f32.mrf.mxu0
  %2940 = vmatprep.mubr.f32.mxu0 0.0
  %2941 = vmatmul.mubr.f32.gmra.mxu0 %v2449
  %v2942 = vpop.f32.mrf.mxu0
  %v2943 = vadd.f32 %v2689, %v2942
  %v2944 = vpop.f32.mrf.mxu0
  %2945 = vmatprep.mubr.f32.mxu0 0.0
  %2946 = vmatmul.mubr.f32.gmra.mxu0 %v2450
  %v2947 = vpop.f32.mrf.mxu0
  %v2948 = vadd.f32 %v2689, %v2947
  %v2949 = vpop.f32.mrf.mxu0
  %2950 = vmatprep.mubr.f32.mxu0 0.0
  %2951 = vmatmul.mubr.f32.gmra.mxu0 %v2451
  %v2952 = vpop.f32.mrf.mxu0
  %v2953 = vadd.f32 %v2689, %v2952
  %v2954 = vpop.f32.mrf.mxu0
  %2955 = vmatprep.mubr.f32.mxu0 0.0
  %2956 = vmatmul.mubr.f32.gmra.mxu0 %v2452
  %v2957 = vpop.f32.mrf.mxu0
  %v2958 = vadd.f32 %v2689, %v2957
  %v2959 = vpop.f32.mrf.mxu0
  %2960 = vmatprep.mubr.f32.mxu0 0.0
  %2961 = vmatmul.mubr.f32.gmra.mxu0 %v2453
  %v2962 = vpop.f32.mrf.mxu0
  %v2963 = vadd.f32 %v2689, %v2962
  %v2964 = vpop.f32.mrf.mxu0
  %2965 = vmatprep.mubr.f32.mxu0 0.0
  %2966 = vmatmul.mubr.f32.gmra.mxu0 %v2454
  %v2967 = vpop.f32.mrf.mxu0
  %v2968 = vadd.f32 %v2689, %v2967
  %v2969 = vpop.f32.mrf.mxu0
  %2970 = vmatprep.mubr.f32.mxu0 0.0
  %2971 = vmatmul.mubr.f32.gmra.mxu0 %v2455
  %v2972 = vpop.f32.mrf.mxu0
  %v2973 = vadd.f32 %v2689, %v2972
  %v2974 = vpop.f32.mrf.mxu0
  %2975 = vmatprep.mubr.f32.mxu0 0.0
  %2976 = vmatmul.mubr.f32.gmra.mxu0 %v2456
  %v2977 = vpop.f32.mrf.mxu0
  %v2978 = vadd.f32 %v2689, %v2977
  %v2979 = vpop.f32.mrf.mxu0
  %2980 = vmatprep.mubr.f32.mxu0 0.0
  %2981 = vmatmul.mubr.f32.gmra.mxu0 %v2457
  %v2982 = vpop.f32.mrf.mxu0
  %v2983 = vadd.f32 %v2689, %v2982
  %v2984 = vpop.f32.mrf.mxu0
  %2985 = vmatprep.mubr.f32.mxu0 0.0
  %2986 = vmatmul.mubr.f32.gmra.mxu0 %v2458
  %v2987 = vpop.f32.mrf.mxu0
  %v2988 = vadd.f32 %v2689, %v2987
  %v2989 = vpop.f32.mrf.mxu0
  %2990 = vmatprep.mubr.f32.mxu0 0.0
  %2991 = vmatmul.mubr.f32.gmra.mxu0 %v2459
  %v2992 = vpop.f32.mrf.mxu0
  %v2993 = vadd.f32 %v2689, %v2992
  %v2994 = vpop.f32.mrf.mxu0
  %2995 = vmatprep.mubr.f32.mxu0 0.0
  %2996 = vmatmul.mubr.f32.gmra.mxu0 %v2460
  %v2997 = vpop.f32.mrf.mxu0
  %v2998 = vadd.f32 %v2689, %v2997
  %v2999 = vpop.f32.mrf.mxu0
  %3000 = vmatprep.mubr.f32.mxu0 0.0
  %3001 = vmatmul.mubr.f32.gmra.mxu0 %v2461
  %v3002 = vpop.f32.mrf.mxu0
  %v3003 = vadd.f32 %v2689, %v3002
  %v3004 = vpop.f32.mrf.mxu0
  %3005 = vmatprep.mubr.f32.mxu0 0.0
  %3006 = vmatmul.mubr.f32.gmra.mxu0 %v2462
  %v3007 = vpop.f32.mrf.mxu0
  %v3008 = vadd.f32 %v2689, %v3007
  %v3009 = vpop.f32.mrf.mxu0
  %3010 = vmatprep.mubr.f32.mxu0 0.0
  %3011 = vmatmul.mubr.f32.gmra.mxu0 %v2463
  %v3012 = vpop.f32.mrf.mxu0
  %v3013 = vadd.f32 %v2689, %v3012
  %v3014 = vpop.f32.mrf.mxu0
  %3015 = vmatprep.mubr.f32.mxu0 0.0
  %3016 = vmatmul.mubr.f32.gmra.mxu0 %v2464
  %v3017 = vpop.f32.mrf.mxu0
  %v3018 = vadd.f32 %v2689, %v3017
  %v3019 = vpop.f32.mrf.mxu0
  %3020 = vmatprep.mubr.f32.mxu0 0.0
  %3021 = vmatmul.mubr.f32.gmra.mxu0 %v2465
  %v3022 = vpop.f32.mrf.mxu0
  %v3023 = vadd.f32 %v2689, %v3022
  %v3024 = vpop.f32.mrf.mxu0
  %3025 = vmatprep.mubr.f32.mxu0 0.0
  %3026 = vmatmul.mubr.f32.gmra.mxu0 %v2466
  %v3027 = vpop.f32.mrf.mxu0
  %v3028 = vadd.f32 %v2689, %v3027
  %v3029 = vpop.f32.mrf.mxu0
  %3030 = vmatprep.mubr.f32.mxu0 0.0
  %3031 = vmatmul.mubr.f32.gmra.mxu0 %v2467
  %v3032 = vpop.f32.mrf.mxu0
  %v3033 = vadd.f32 %v2689, %v3032
  %v3034 = vpop.f32.mrf.mxu0
  %3035 = vmatprep.mubr.f32.mxu0 0.0
  %3036 = vmatmul.mubr.f32.gmra.mxu0 %v2468
  %v3037 = vpop.f32.mrf.mxu0
  %v3038 = vadd.f32 %v2689, %v3037
  %v3039 = vpop.f32.mrf.mxu0
  %3040 = vmatprep.mubr.f32.mxu0 0.0
  %3041 = vmatmul.mubr.f32.gmra.mxu0 %v2469
  %v3042 = vpop.f32.mrf.mxu0
  %v3043 = vadd.f32 %v2689, %v3042
  %v3044 = vpop.f32.mrf.mxu0
  %3045 = vmatprep.mubr.f32.mxu0 0.0
  %3046 = vmatmul.mubr.f32.gmra.mxu0 %v2470
  %v3047 = vpop.f32.mrf.mxu0
  %v3048 = vadd.f32 %v2689, %v3047
  %v3049 = vpop.f32.mrf.mxu0
  %3050 = vmatprep.mubr.f32.mxu0 0.0
  %3051 = vmatmul.mubr.f32.gmra.mxu0 %v2471
  %v3052 = vpop.f32.mrf.mxu0
  %v3053 = vadd.f32 %v2689, %v3052
  %v3054 = vpop.f32.mrf.mxu0
  %3055 = vmatprep.mubr.f32.mxu0 0.0
  %3056 = vmatmul.mubr.f32.gmra.mxu0 %v2472
  %v3057 = vpop.f32.mrf.mxu0
  %v3058 = vadd.f32 %v2689, %v3057
  %v3059 = vpop.f32.mrf.mxu0
  %3060 = vmatprep.mubr.f32.mxu0 0.0
  %3061 = vmatmul.mubr.f32.gmra.mxu0 %v2473
  %v3062 = vpop.f32.mrf.mxu0
  %v3063 = vadd.f32 %v2689, %v3062
  %v3064 = vpop.f32.mrf.mxu0
  %3065 = vmatprep.mubr.f32.mxu0 0.0
  %3066 = vmatmul.mubr.f32.gmra.mxu0 %v2474
  %v3067 = vpop.f32.mrf.mxu0
  %v3068 = vadd.f32 %v2689, %v3067
  %v3069 = vpop.f32.mrf.mxu0
  %3070 = vmatprep.mubr.f32.mxu0 0.0
  %3071 = vmatmul.mubr.f32.gmra.mxu0 %v2475
  %v3072 = vpop.f32.mrf.mxu0
  %v3073 = vadd.f32 %v2689, %v3072
  %v3074 = vpop.f32.mrf.mxu0
  %3075 = vmatprep.mubr.f32.mxu0 0.0
  %3076 = vmatmul.mubr.f32.gmra.mxu0 %v2476
  %v3077 = vpop.f32.mrf.mxu0
  %v3078 = vadd.f32 %v2689, %v3077
  %v3079 = vpop.f32.mrf.mxu0
  %3080 = vmatprep.mubr.f32.mxu0 0.0
  %3081 = vmatmul.mubr.f32.gmra.mxu0 %v2477
  %v3082 = vpop.f32.mrf.mxu0
  %v3083 = vadd.f32 %v2689, %v3082
  %v3084 = vpop.f32.mrf.mxu0
  %3085 = vmatprep.mubr.f32.mxu0 0.0
  %3086 = vmatmul.mubr.f32.gmra.mxu0 %v2478
  %v3087 = vpop.f32.mrf.mxu0
  %v3088 = vadd.f32 %v2689, %v3087
  %v3089 = vpop.f32.mrf.mxu0
  %3090 = vmatprep.mubr.f32.mxu0 0.0
  %3091 = vmatmul.mubr.f32.gmra.mxu0 %v2479
  %v3092 = vpop.f32.mrf.mxu0
  %v3093 = vadd.f32 %v2689, %v3092
  %v3094 = vpop.f32.mrf.mxu0
  %3095 = vmatprep.mubr.f32.mxu0 0.0
  %3096 = vmatmul.mubr.f32.gmra.mxu0 %v2480
  %v3097 = vpop.f32.mrf.mxu0
  %v3098 = vadd.f32 %v2689, %v3097
  %v3099 = vpop.f32.mrf.mxu0
  %3100 = vmatprep.mubr.f32.mxu0 0.0
  %3101 = vmatmul.mubr.f32.gmra.mxu0 %v2481
  %v3102 = vpop.f32.mrf.mxu0
  %v3103 = vadd.f32 %v2689, %v3102
  %v3104 = vpop.f32.mrf.mxu0
  %3105 = vmatprep.mubr.f32.mxu0 0.0
  %3106 = vmatmul.mubr.f32.gmra.mxu0 %v2482
  %v3107 = vpop.f32.mrf.mxu0
  %v3108 = vadd.f32 %v2689, %v3107
  %v3109 = vpop.f32.mrf.mxu0
  %3110 = vmatprep.mubr.f32.mxu0 0.0
  %3111 = vmatmul.mubr.f32.gmra.mxu0 %v2483
  %v3112 = vpop.f32.mrf.mxu0
  %v3113 = vadd.f32 %v2689, %v3112
  %v3114 = vpop.f32.mrf.mxu0
  %3115 = vmatprep.mubr.f32.mxu0 0.0
  %3116 = vmatmul.mubr.f32.gmra.mxu0 %v2484
  %v3117 = vpop.f32.mrf.mxu0
  %v3118 = vadd.f32 %v2689, %v3117
  %v3119 = vpop.f32.mrf.mxu0
  %3120 = vmatprep.mubr.f32.mxu0 0.0
  %3121 = vmatmul.mubr.f32.gmra.mxu0 %v2485
  %v3122 = vpop.f32.mrf.mxu0
  %v3123 = vadd.f32 %v2689, %v3122
  %v3124 = vpop.f32.mrf.mxu0
  %3125 = vmatprep.mubr.f32.mxu0 0.0
  %3126 = vmatmul.mubr.f32.gmra.mxu0 %v2486
  %v3127 = vpop.f32.mrf.mxu0
  %v3128 = vadd.f32 %v2689, %v3127
  %v3129 = vpop.f32.mrf.mxu0
  %3130 = vmatprep.mubr.f32.mxu0 0.0
  %3131 = vmatmul.mubr.f32.gmra.mxu0 %v2487
  %v3132 = vpop.f32.mrf.mxu0
  %v3133 = vadd.f32 %v2689, %v3132
  %v3134 = vpop.f32.mrf.mxu0
  %3135 = vmatprep.mubr.f32.mxu0 0.0
  %3136 = vmatmul.mubr.f32.gmra.mxu0 %v2488
  %v3137 = vpop.f32.mrf.mxu0
  %v3138 = vadd.f32 %v2689, %v3137
  %v3139 = vpop.f32.mrf.mxu0
  %3140 = vmatprep.mubr.f32.mxu0 0.0
  %3141 = vmatmul.mubr.f32.gmra.mxu0 %v2489
  %v3142 = vpop.f32.mrf.mxu0
  %v3143 = vadd.f32 %v2689, %v3142
  %v3144 = vpop.f32.mrf.mxu0
  %3145 = vmatprep.mubr.f32.mxu0 0.0
  %3146 = vmatmul.mubr.f32.gmra.mxu0 %v2490
  %v3147 = vpop.f32.mrf.mxu0
  %v3148 = vadd.f32 %v2689, %v3147
  %v3149 = vpop.f32.mrf.mxu0
  %3150 = vmatprep.mubr.f32.mxu0 0.0
  %3151 = vmatmul.mubr.f32.gmra.mxu0 %v2491
  %v3152 = vpop.f32.mrf.mxu0
  %v3153 = vadd.f32 %v2689, %v3152
  %v3154 = vpop.f32.mrf.mxu0
  %3155 = vmatprep.mubr.f32.mxu0 0.0
  %3156 = vmatmul.mubr.f32.gmra.mxu0 %v2492
  %v3157 = vpop.f32.mrf.mxu0
  %v3158 = vadd.f32 %v2689, %v3157
  %v3159 = vpop.f32.mrf.mxu0
  %3160 = vmatprep.mubr.f32.mxu0 0.0
  %3161 = vmatmul.mubr.f32.gmra.mxu0 %v2493
  %v3162 = vpop.f32.mrf.mxu0
  %v3163 = vadd.f32 %v2689, %v3162
  %v3164 = vpop.f32.mrf.mxu0
  %3165 = vmatprep.mubr.f32.mxu0 0.0
  %3166 = vmatmul.mubr.f32.gmra.mxu0 %v2494
  %v3167 = vpop.f32.mrf.mxu0
  %v3168 = vadd.f32 %v2689, %v3167
  %v3169 = vpop.f32.mrf.mxu0
  %3170 = vmatprep.mubr.f32.mxu0 0.0
  %3171 = vmatmul.mubr.f32.gmra.mxu0 %v2495
  %v3172 = vpop.f32.mrf.mxu0
  %v3173 = vadd.f32 %v2689, %v3172
  %v3174 = vpop.f32.mrf.mxu0
  %3175 = vmatprep.mubr.f32.mxu0 0.0
  %3176 = vmatmul.mubr.f32.gmra.mxu0 %v2496
  %v3177 = vpop.f32.mrf.mxu0
  %v3178 = vadd.f32 %v2689, %v3177
  %v3179 = vpop.f32.mrf.mxu0
  %3180 = vmatprep.mubr.f32.mxu0 0.0
  %3181 = vmatmul.mubr.f32.gmra.mxu0 %v2497
  %v3182 = vpop.f32.mrf.mxu0
  %v3183 = vadd.f32 %v2689, %v3182
  %v3184 = vpop.f32.mrf.mxu0
  %3185 = vmatprep.mubr.f32.mxu0 0.0
  %3186 = vmatmul.mubr.f32.gmra.mxu0 %v2498
  %v3187 = vpop.f32.mrf.mxu0
  %v3188 = vadd.f32 %v2689, %v3187
  %v3189 = vpop.f32.mrf.mxu0
  %3190 = vmatprep.mubr.f32.mxu0 0.0
  %3191 = vmatmul.mubr.f32.gmra.mxu0 %v2499
  %v3192 = vpop.f32.mrf.mxu0
  %v3193 = vadd.f32 %v2689, %v3192
  %v3194 = vpop.f32.mrf.mxu0
  %3195 = vmatprep.mubr.f32.mxu0 0.0
  %3196 = vmatmul.mubr.f32.gmra.mxu0 %v2500
  %v3197 = vpop.f32.mrf.mxu0
  %v3198 = vadd.f32 %v2689, %v3197
  %v3199 = vpop.f32.mrf.mxu0
  %3200 = vmatprep.mubr.f32.mxu0 0.0
  %3201 = vmatmul.mubr.f32.gmra.mxu0 %v2501
  %v3202 = vpop.f32.mrf.mxu0
  %v3203 = vadd.f32 %v2689, %v3202
  %v3204 = vpop.f32.mrf.mxu0
  %3205 = vmatprep.mubr.f32.mxu0 0.0
  %3206 = vmatmul.mubr.f32.gmra.mxu0 %v2502
  %v3207 = vpop.f32.mrf.mxu0
  %v3208 = vadd.f32 %v2689, %v3207
  %v3209 = vpop.f32.mrf.mxu0
  %3210 = vmatprep.mubr.f32.mxu0 0.0
  %3211 = vmatmul.mubr.f32.gmra.mxu0 %v2503
  %v3212 = vpop.f32.mrf.mxu0
  %v3213 = vadd.f32 %v2689, %v3212
  %v3214 = vpop.f32.mrf.mxu0
  %3215 = vmatprep.mubr.f32.mxu0 0.0
  %3216 = vmatmul.mubr.f32.gmra.mxu0 %v2504
  %v3217 = vpop.f32.mrf.mxu0
  %v3218 = vadd.f32 %v2689, %v3217
  %v3219 = vpop.f32.mrf.mxu0
  %3220 = vmatprep.mubr.f32.mxu0 0.0
  %3221 = vmatmul.mubr.f32.gmra.mxu0 %v2505
  %v3222 = vpop.f32.mrf.mxu0
  %v3223 = vadd.f32 %v2689, %v3222
  %v3224 = vpop.f32.mrf.mxu0
  %3225 = vmatprep.mubr.f32.mxu0 0.0
  %3226 = vmatmul.mubr.f32.gmra.mxu0 %v2506
  %v3227 = vpop.f32.mrf.mxu0
  %v3228 = vadd.f32 %v2689, %v3227
  %v3229 = vpop.f32.mrf.mxu0
  %3230 = vmatprep.mubr.f32.mxu0 0.0
  %3231 = vmatmul.mubr.f32.gmra.mxu0 %v2507
  %v3232 = vpop.f32.mrf.mxu0
  %v3233 = vadd.f32 %v2689, %v3232
  %v3234 = vpop.f32.mrf.mxu0
  %3235 = vmatprep.mubr.f32.mxu0 0.0
  %3236 = vmatmul.mubr.f32.gmra.mxu0 %v2508
  %v3237 = vpop.f32.mrf.mxu0
  %v3238 = vadd.f32 %v2689, %v3237
  %v3239 = vpop.f32.mrf.mxu0
  %3240 = vmatprep.mubr.f32.mxu0 0.0
  %3241 = vmatmul.mubr.f32.gmra.mxu0 %v2509
  %v3242 = vpop.f32.mrf.mxu0
  %v3243 = vadd.f32 %v2689, %v3242
  %v3244 = vpop.f32.mrf.mxu0
  %3245 = vmatprep.mubr.f32.mxu0 0.0
  %3246 = vmatmul.mubr.f32.gmra.mxu0 %v2510
  %v3247 = vpop.f32.mrf.mxu0
  %v3248 = vadd.f32 %v2689, %v3247
  %v3249 = vpop.f32.mrf.mxu0
  %3250 = vmatprep.mubr.f32.mxu0 0.0
  %3251 = vmatmul.mubr.f32.gmra.mxu0 %v2511
  %v3252 = vpop.f32.mrf.mxu0
  %v3253 = vadd.f32 %v2689, %v3252
  %v3254 = vpop.f32.mrf.mxu0
  %3255 = vmatprep.mubr.f32.mxu0 0.0
  %3256 = vmatmul.mubr.f32.gmra.mxu0 %v2512
  %v3257 = vpop.f32.mrf.mxu0
  %v3258 = vadd.f32 %v2689, %v3257
  %v3259 = vpop.f32.mrf.mxu0
  %3260 = vmatprep.mubr.f32.mxu0 0.0
  %3261 = vmatmul.mubr.f32.gmra.mxu0 %v2513
  %v3262 = vpop.f32.mrf.mxu0
  %v3263 = vadd.f32 %v2689, %v3262
  %v3264 = vpop.f32.mrf.mxu0
  %3265 = vmatprep.mubr.f32.mxu0 0.0
  %3266 = vmatmul.mubr.f32.gmra.mxu0 %v2514
  %v3267 = vpop.f32.mrf.mxu0
  %v3268 = vadd.f32 %v2689, %v3267
  %v3269 = vpop.f32.mrf.mxu0
  %3270 = vmatprep.mubr.f32.mxu0 0.0
  %3271 = vmatmul.mubr.f32.gmra.mxu0 %v2515
  %v3272 = vpop.f32.mrf.mxu0
  %v3273 = vadd.f32 %v2689, %v3272
  %v3274 = vpop.f32.mrf.mxu0
  %3275 = vmatprep.mubr.f32.mxu0 0.0
  %3276 = vmatmul.mubr.f32.gmra.mxu0 %v2516
  %v3277 = vpop.f32.mrf.mxu0
  %v3278 = vadd.f32 %v2689, %v3277
  %v3279 = vpop.f32.mrf.mxu0
  %3280 = vmatprep.mubr.f32.mxu0 0.0
  %3281 = vmatmul.mubr.f32.gmra.mxu0 %v2517
  %v3282 = vpop.f32.mrf.mxu0
  %v3283 = vadd.f32 %v2689, %v3282
  %v3284 = vpop.f32.mrf.mxu0
  %3285 = vmatprep.mubr.f32.mxu0 0.0
  %3286 = vmatmul.mubr.f32.gmra.mxu0 %v2518
  %v3287 = vpop.f32.mrf.mxu0
  %v3288 = vadd.f32 %v2689, %v3287
  %v3289 = vpop.f32.mrf.mxu0
  %3290 = vmatprep.mubr.f32.mxu0 0.0
  %3291 = vmatmul.mubr.f32.gmra.mxu0 %v2519
  %v3292 = vpop.f32.mrf.mxu0
  %v3293 = vadd.f32 %v2689, %v3292
  %v3294 = vpop.f32.mrf.mxu0
  %3295 = vmatprep.mubr.f32.mxu0 0.0
  %3296 = vmatmul.mubr.f32.gmra.mxu0 %v2520
  %v3297 = vpop.f32.mrf.mxu0
  %v3298 = vadd.f32 %v2689, %v3297
  %v3299 = vpop.f32.mrf.mxu0
  %3300 = vmatprep.mubr.f32.mxu0 0.0
  %3301 = vmatmul.mubr.f32.gmra.mxu0 %v2521
  %v3302 = vpop.f32.mrf.mxu0
  %v3303 = vadd.f32 %v2689, %v3302
  %v3304 = vpop.f32.mrf.mxu0
  %3305 = vmatprep.mubr.f32.mxu0 0.0
  %3306 = vmatmul.mubr.f32.gmra.mxu0 %v2522
  %v3307 = vpop.f32.mrf.mxu0
  %v3308 = vadd.f32 %v2689, %v3307
  %v3309 = vpop.f32.mrf.mxu0
  %3310 = vmatprep.mubr.f32.mxu0 0.0
  %3311 = vmatmul.mubr.f32.gmra.mxu0 %v2523
  %v3312 = vpop.f32.mrf.mxu0
  %v3313 = vadd.f32 %v2689, %v3312
  %v3314 = vpop.f32.mrf.mxu0
  %3315 = vmatprep.mubr.f32.mxu0 0.0
  %3316 = vmatmul.mubr.f32.gmra.mxu0 %v2524
  %v3317 = vpop.f32.mrf.mxu0
  %v3318 = vadd.f32 %v2689, %v3317
  %v3319 = vpop.f32.mrf.mxu0
  %3320 = vmatprep.mubr.f32.mxu0 0.0
  %3321 = vmatmul.mubr.f32.gmra.mxu0 %v2525
  %v3322 = vpop.f32.mrf.mxu0
  %v3323 = vadd.f32 %v2689, %v3322
  %v3324 = vpop.f32.mrf.mxu0
  %3325 = vmatprep.mubr.f32.mxu0 0.0
  %3326 = vmatmul.mubr.f32.gmra.mxu0 %v2526
  %v3327 = vpop.f32.mrf.mxu0
  %v3328 = vadd.f32 %v2689, %v3327
  %v3329 = vpop.f32.mrf.mxu0
  %3330 = vmatprep.mubr.f32.mxu0 0.0
  %3331 = vmatmul.mubr.f32.gmra.mxu0 %v2527
  %v3332 = vpop.f32.mrf.mxu0
  %v3333 = vadd.f32 %v2689, %v3332
  %v3334 = vpop.f32.mrf.mxu0
  %3335 = vmatprep.mubr.f32.mxu0 0.0
  %3336 = vmatmul.mubr.f32.gmra.mxu0 %v2528
  %v3337 = vpop.f32.mrf.mxu0
  %v3338 = vadd.f32 %v2689, %v3337
  %v3339 = vpop.f32.mrf.mxu0
  %3340 = vmatprep.mubr.f32.mxu0 0.0
  %3341 = vmatmul.mubr.f32.gmra.mxu0 %v2529
  %v3342 = vpop.f32.mrf.mxu0
  %v3343 = vadd.f32 %v2689, %v3342
  %v3344 = vpop.f32.mrf.mxu0
  %3345 = vmatprep.mubr.f32.mxu0 0.0
  %3346 = vmatmul.mubr.f32.gmra.mxu0 %v2530
  %v3347 = vpop.f32.mrf.mxu0
  %v3348 = vadd.f32 %v2689, %v3347
  %v3349 = vpop.f32.mrf.mxu0
  %3350 = vmatprep.mubr.f32.mxu0 0.0
  %3351 = vmatmul.mubr.f32.gmra.mxu0 %v2531
  %v3352 = vpop.f32.mrf.mxu0
  %v3353 = vadd.f32 %v2689, %v3352
  %v3354 = vpop.f32.mrf.mxu0
  %3355 = vmatprep.mubr.f32.mxu0 0.0
  %3356 = vmatmul.mubr.f32.gmra.mxu0 %v2532
  %v3357 = vpop.f32.mrf.mxu0
  %v3358 = vadd.f32 %v2689, %v3357
  %v3359 = vpop.f32.mrf.mxu0
  %3360 = vmatprep.mubr.f32.mxu0 0.0
  %3361 = vmatmul.mubr.f32.gmra.mxu0 %v2533
  %v3362 = vpop.f32.mrf.mxu0
  %v3363 = vadd.f32 %v2689, %v3362
  %v3364 = vpop.f32.mrf.mxu0
  %3365 = vmatprep.mubr.f32.mxu0 0.0
  %3366 = vmatmul.mubr.f32.gmra.mxu0 %v2534
  %v3367 = vpop.f32.mrf.mxu0
  %v3368 = vadd.f32 %v2689, %v3367
  %v3369 = vpop.f32.mrf.mxu0
  %3370 = vmatprep.mubr.f32.mxu0 0.0
  %3371 = vmatmul.mubr.f32.gmra.mxu0 %v2535
  %v3372 = vpop.f32.mrf.mxu0
  %v3373 = vadd.f32 %v2689, %v3372
  %v3374 = vpop.f32.mrf.mxu0
  %3375 = vmatprep.mubr.f32.mxu0 0.0
  %3376 = vmatmul.mubr.f32.gmra.mxu0 %v2536
  %v3377 = vpop.f32.mrf.mxu0
  %v3378 = vadd.f32 %v2689, %v3377
  %v3379 = vpop.f32.mrf.mxu0
  %3380 = vmatprep.mubr.f32.mxu0 0.0
  %3381 = vmatmul.mubr.f32.gmra.mxu0 %v2537
  %v3382 = vpop.f32.mrf.mxu0
  %v3383 = vadd.f32 %v2689, %v3382
  %v3384 = vpop.f32.mrf.mxu0
  %3385 = vmatprep.mubr.f32.mxu0 0.0
  %3386 = vmatmul.mubr.f32.gmra.mxu0 %v2538
  %v3387 = vpop.f32.mrf.mxu0
  %v3388 = vadd.f32 %v2689, %v3387
  %v3389 = vpop.f32.mrf.mxu0
  %3390 = vmatprep.mubr.f32.mxu0 0.0
  %3391 = vmatmul.mubr.f32.gmra.mxu0 %v2539
  %v3392 = vpop.f32.mrf.mxu0
  %v3393 = vadd.f32 %v2689, %v3392
  %v3394 = vpop.f32.mrf.mxu0
  %3395 = vmatprep.mubr.f32.mxu0 0.0
  %3396 = vmatmul.mubr.f32.gmra.mxu0 %v2540
  %v3397 = vpop.f32.mrf.mxu0
  %v3398 = vadd.f32 %v2689, %v3397
  %v3399 = vpop.f32.mrf.mxu0
  %3400 = vmatprep.mubr.f32.mxu0 0.0
  %3401 = vmatmul.mubr.f32.gmra.mxu0 %v2541
  %v3402 = vpop.f32.mrf.mxu0
  %v3403 = vadd.f32 %v2689, %v3402
  %v3404 = vpop.f32.mrf.mxu0
  %3405 = vmatprep.mubr.f32.mxu0 0.0
  %3406 = vmatmul.mubr.f32.gmra.mxu0 %v2542
  %v3407 = vpop.f32.mrf.mxu0
  %v3408 = vadd.f32 %v2689, %v3407
  %v3409 = vpop.f32.mrf.mxu0
  %3410 = vmatprep.mubr.f32.mxu0 0.0
  %3411 = vmatmul.mubr.f32.gmra.mxu0 %v2543
  %v3412 = vpop.f32.mrf.mxu0
  %v3413 = vadd.f32 %v2689, %v3412
  %v3414 = vpop.f32.mrf.mxu0
  %3415 = vmatprep.mubr.f32.mxu0 0.0
  %3416 = vmatmul.mubr.f32.gmra.mxu0 %v2544
  %v3417 = vpop.f32.mrf.mxu0
  %v3418 = vadd.f32 %v2689, %v3417
  %v3419 = vpop.f32.mrf.mxu0
  %3420 = vmatprep.mubr.f32.mxu0 0.0
  %3421 = vmatmul.mubr.f32.gmra.mxu0 %v2545
  %v3422 = vpop.f32.mrf.mxu0
  %v3423 = vadd.f32 %v2689, %v3422
  %v3424 = vpop.f32.mrf.mxu0
  %3425 = vmatprep.mubr.f32.mxu0 0.0
  %3426 = vmatmul.mubr.f32.gmra.mxu0 %v2546
  %v3427 = vpop.f32.mrf.mxu0
  %v3428 = vadd.f32 %v2689, %v3427
  %v3429 = vpop.f32.mrf.mxu0
  %3430 = vmatprep.mubr.f32.mxu0 0.0
  %3431 = vmatmul.mubr.f32.gmra.mxu0 %v2547
  %v3432 = vpop.f32.mrf.mxu0
  %v3433 = vadd.f32 %v2689, %v3432
  %v3434 = vpop.f32.mrf.mxu0
  %3435 = vmatprep.mubr.f32.mxu0 0.0
  %3436 = vmatmul.mubr.f32.gmra.mxu0 %v2548
  %v3437 = vpop.f32.mrf.mxu0
  %v3438 = vadd.f32 %v2689, %v3437
  %v3439 = vpop.f32.mrf.mxu0
  %3440 = vmatprep.mubr.f32.mxu0 0.0
  %3441 = vmatmul.mubr.f32.gmra.mxu0 %v2549
  %v3442 = vpop.f32.mrf.mxu0
  %v3443 = vadd.f32 %v2689, %v3442
  %v3444 = vpop.f32.mrf.mxu0
  %3445 = vmatprep.mubr.f32.mxu0 0.0
  %3446 = vmatmul.mubr.f32.gmra.mxu0 %v2550
  %v3447 = vpop.f32.mrf.mxu0
  %v3448 = vadd.f32 %v2689, %v3447
  %v3449 = vpop.f32.mrf.mxu0
  %3450 = vmatprep.mubr.f32.mxu0 0.0
  %3451 = vmatmul.mubr.f32.gmra.mxu0 %v2551
  %v3452 = vpop.f32.mrf.mxu0
  %v3453 = vadd.f32 %v2689, %v3452
  %v3454 = vpop.f32.mrf.mxu0
  %3455 = vmatprep.mubr.f32.mxu0 0.0
  %3456 = vmatmul.mubr.f32.gmra.mxu0 %v2552
  %v3457 = vpop.f32.mrf.mxu0
  %v3458 = vadd.f32 %v2689, %v3457
  %v3459 = vpop.f32.mrf.mxu0
  %3460 = vmatprep.mubr.f32.mxu0 0.0
  %3461 = vmatmul.mubr.f32.gmra.mxu0 %v2553
  %v3462 = vpop.f32.mrf.mxu0
  %v3463 = vadd.f32 %v2689, %v3462
  %v3464 = vpop.f32.mrf.mxu0
  %3465 = vmatprep.mubr.f32.mxu0 0.0
  %3466 = vmatmul.mubr.f32.gmra.mxu0 %v2554
  %v3467 = vpop.f32.mrf.mxu0
  %v3468 = vadd.f32 %v2689, %v3467
  %v3469 = vpop.f32.mrf.mxu0
  %3470 = vmatprep.mubr.f32.mxu0 0.0
  %3471 = vmatmul.mubr.f32.gmra.mxu0 %v2555
  %v3472 = vpop.f32.mrf.mxu0
  %v3473 = vadd.f32 %v2689, %v3472
  %v3474 = vpop.f32.mrf.mxu0
  %3475 = vmatprep.mubr.f32.mxu0 0.0
  %3476 = vmatmul.mubr.f32.gmra.mxu0 %v2556
  %v3477 = vpop.f32.mrf.mxu0
  %v3478 = vadd.f32 %v2689, %v3477
  %v3479 = vpop.f32.mrf.mxu0
  %3480 = vmatprep.mubr.f32.mxu0 0.0
  %3481 = vmatmul.mubr.f32.gmra.mxu0 %v2557
  %v3482 = vpop.f32.mrf.mxu0
  %v3483 = vadd.f32 %v2689, %v3482
  %v3484 = vpop.f32.mrf.mxu0
  %3485 = vmatprep.mubr.f32.mxu0 0.0
  %3486 = vmatmul.mubr.f32.gmra.mxu0 %v2558
  %v3487 = vpop.f32.mrf.mxu0
  %v3488 = vadd.f32 %v2689, %v3487
  %v3489 = vpop.f32.mrf.mxu0
  %3490 = vmatprep.mubr.f32.mxu0 0.0
  %3491 = vmatmul.mubr.f32.gmra.mxu0 %v2559
  %v3492 = vpop.f32.mrf.mxu0
  %v3493 = vadd.f32 %v2689, %v3492
  %v3494 = vpop.f32.mrf.mxu0
  %3495 = vmatprep.mubr.f32.mxu0 0.0
  %3496 = vmatmul.mubr.f32.gmra.mxu0 %v2560
  %v3497 = vpop.f32.mrf.mxu0
  %v3498 = vadd.f32 %v2689, %v3497
  %v3499 = vpop.f32.mrf.mxu0
  %3500 = vmatprep.mubr.f32.mxu0 0.0
  %3501 = vmatmul.mubr.f32.gmra.mxu0 %v2561
  %v3502 = vpop.f32.mrf.mxu0
  %v3503 = vadd.f32 %v2689, %v3502
  %v3504 = vpop.f32.mrf.mxu0
  %3505 = vmatprep.mubr.f32.mxu0 0.0
  %3506 = vmatmul.mubr.f32.gmra.mxu0 %v2562
  %v3507 = vpop.f32.mrf.mxu0
  %v3508 = vadd.f32 %v2689, %v3507
  %v3509 = vpop.f32.mrf.mxu0
  %3510 = vmatprep.mubr.f32.mxu0 0.0
  %3511 = vmatmul.mubr.f32.gmra.mxu0 %v2563
  %v3512 = vpop.f32.mrf.mxu0
  %v3513 = vadd.f32 %v2689, %v3512
  %v3514 = vpop.f32.mrf.mxu0
  %3515 = vmatprep.mubr.f32.mxu0 0.0
  %3516 = vmatmul.mubr.f32.gmra.mxu0 %v2564
  %v3517 = vpop.f32.mrf.mxu0
  %v3518 = vadd.f32 %v2689, %v3517
  %v3519 = vpop.f32.mrf.mxu0
  %3520 = vmatprep.mubr.f32.mxu0 0.0
  %3521 = vmatmul.mubr.f32.gmra.mxu0 %v2565
  %v3522 = vpop.f32.mrf.mxu0
  %v3523 = vadd.f32 %v2689, %v3522
  %v3524 = vpop.f32.mrf.mxu0
  %3525 = vmatprep.mubr.f32.mxu0 0.0
  %3526 = vmatmul.mubr.f32.gmra.mxu0 %v2566
  %v3527 = vpop.f32.mrf.mxu0
  %v3528 = vadd.f32 %v2689, %v3527
  %v3529 = vpop.f32.mrf.mxu0
  %3530 = vmatprep.mubr.f32.mxu0 0.0
  %3531 = vmatmul.mubr.f32.gmra.mxu0 %v2567
  %v3532 = vpop.f32.mrf.mxu0
  %v3533 = vadd.f32 %v2689, %v3532
  %v3534 = vpop.f32.mrf.mxu0
  %3535 = vmatprep.mubr.f32.mxu0 0.0
  %3536 = vmatmul.mubr.f32.gmra.mxu0 %v2568
  %v3537 = vpop.f32.mrf.mxu0
  %v3538 = vadd.f32 %v2689, %v3537
  %v3539 = vpop.f32.mrf.mxu0
  %3540 = vmatprep.mubr.f32.mxu0 0.0
  %3541 = vmatmul.mubr.f32.gmra.mxu0 %v2569
  %v3542 = vpop.f32.mrf.mxu0
  %v3543 = vadd.f32 %v2689, %v3542
  %v3544 = vpop.f32.mrf.mxu0
  %3545 = vmatprep.mubr.f32.mxu0 0.0
  %3546 = vmatmul.mubr.f32.gmra.mxu0 %v2570
  %v3547 = vpop.f32.mrf.mxu0
  %v3548 = vadd.f32 %v2689, %v3547
  %v3549 = vpop.f32.mrf.mxu0
  %3550 = vmatprep.mubr.f32.mxu0 0.0
  %3551 = vmatmul.mubr.f32.gmra.mxu0 %v2571
  %v3552 = vpop.f32.mrf.mxu0
  %v3553 = vadd.f32 %v2689, %v3552
  %v3554 = vpop.f32.mrf.mxu0
  %3555 = vmatprep.mubr.f32.mxu0 0.0
  %3556 = vmatmul.mubr.f32.gmra.mxu0 %v2572
  %v3557 = vpop.f32.mrf.mxu0
  %v3558 = vadd.f32 %v2689, %v3557
  %v3559 = vpop.f32.mrf.mxu0
  %3560 = vmatprep.mubr.f32.mxu0 0.0
  %3561 = vmatmul.mubr.f32.gmra.mxu0 %v2573
  %v3562 = vpop.f32.mrf.mxu0
  %v3563 = vadd.f32 %v2689, %v3562
  %v3564 = vpop.f32.mrf.mxu0
  %3565 = vmatprep.mubr.f32.mxu0 0.0
  %3566 = vmatmul.mubr.f32.gmra.mxu0 %v2574
  %v3567 = vpop.f32.mrf.mxu0
  %v3568 = vadd.f32 %v2689, %v3567
  %v3569 = vpop.f32.mrf.mxu0
  %3570 = vmatprep.mubr.f32.mxu0 0.0
  %3571 = vmatmul.mubr.f32.gmra.mxu0 %v2575
  %v3572 = vpop.f32.mrf.mxu0
  %v3573 = vadd.f32 %v2689, %v3572
  %v3574 = vpop.f32.mrf.mxu0
  %3575 = vmatprep.mubr.f32.mxu0 0.0
  %3576 = vmatmul.mubr.f32.gmra.mxu0 %v2576
  %v3577 = vpop.f32.mrf.mxu0
  %v3578 = vadd.f32 %v2689, %v3577
  %v3579 = vpop.f32.mrf.mxu0
  %3580 = vmatprep.mubr.f32.mxu0 0.0
  %3581 = vmatmul.mubr.f32.gmra.mxu0 %v2577
  %v3582 = vpop.f32.mrf.mxu0
  %v3583 = vadd.f32 %v2689, %v3582
  %v3584 = vpop.f32.mrf.mxu0
  %3585 = vmatprep.mubr.f32.mxu0 0.0
  %3586 = vmatmul.mubr.f32.gmra.mxu0 %v2578
  %v3587 = vpop.f32.mrf.mxu0
  %v3588 = vadd.f32 %v2689, %v3587
  %v3589 = vpop.f32.mrf.mxu0
  %3590 = vmatprep.mubr.f32.mxu0 0.0
  %3591 = vmatmul.mubr.f32.gmra.mxu0 %v2579
  %v3592 = vpop.f32.mrf.mxu0
  %v3593 = vadd.f32 %v2689, %v3592
  %v3594 = vpop.f32.mrf.mxu0
  %3595 = vmatprep.mubr.f32.mxu0 0.0
  %3596 = vmatmul.mubr.f32.gmra.mxu0 %v2580
  %v3597 = vpop.f32.mrf.mxu0
  %v3598 = vadd.f32 %v2689, %v3597
  %v3599 = vpop.f32.mrf.mxu0
  %3600 = vmatprep.mubr.f32.mxu0 0.0
  %3601 = vmatmul.mubr.f32.gmra.mxu0 %v2581
  %v3602 = vpop.f32.mrf.mxu0
  %v3603 = vadd.f32 %v2689, %v3602
  %v3604 = vpop.f32.mrf.mxu0
  %3605 = vmatprep.mubr.f32.mxu0 0.0
  %3606 = vmatmul.mubr.f32.gmra.mxu0 %v2582
  %v3607 = vpop.f32.mrf.mxu0
  %v3608 = vadd.f32 %v2689, %v3607
  %v3609 = vpop.f32.mrf.mxu0
  %3610 = vmatprep.mubr.f32.mxu0 0.0
  %3611 = vmatmul.mubr.f32.gmra.mxu0 %v2583
  %v3612 = vpop.f32.mrf.mxu0
  %v3613 = vadd.f32 %v2689, %v3612
  %v3614 = vpop.f32.mrf.mxu0
  %3615 = vmatprep.mubr.f32.mxu0 0.0
  %3616 = vmatmul.mubr.f32.gmra.mxu0 %v2584
  %v3617 = vpop.f32.mrf.mxu0
  %v3618 = vadd.f32 %v2689, %v3617
  %v3619 = vpop.f32.mrf.mxu0
  %3620 = vmatprep.mubr.f32.mxu0 0.0
  %3621 = vmatmul.mubr.f32.gmra.mxu0 %v2585
  %v3622 = vpop.f32.mrf.mxu0
  %v3623 = vadd.f32 %v2689, %v3622
  %v3624 = vpop.f32.mrf.mxu0
  %3625 = vmatprep.mubr.f32.mxu0 0.0
  %3626 = vmatmul.mubr.f32.gmra.mxu0 %v2586
  %v3627 = vpop.f32.mrf.mxu0
  %v3628 = vadd.f32 %v2689, %v3627
  %v3629 = vpop.f32.mrf.mxu0
  %3630 = vmatprep.mubr.f32.mxu0 0.0
  %3631 = vmatmul.mubr.f32.gmra.mxu0 %v2587
  %v3632 = vpop.f32.mrf.mxu0
  %v3633 = vadd.f32 %v2689, %v3632
  %v3634 = vpop.f32.mrf.mxu0
  %3635 = vmatprep.mubr.f32.mxu0 0.0
  %3636 = vmatmul.mubr.f32.gmra.mxu0 %v2588
  %v3637 = vpop.f32.mrf.mxu0
  %v3638 = vadd.f32 %v2689, %v3637
  %v3639 = vpop.f32.mrf.mxu0
  %3640 = vmatprep.mubr.f32.mxu0 0.0
  %3641 = vmatmul.mubr.f32.gmra.mxu0 %v2589
  %v3642 = vpop.f32.mrf.mxu0
  %v3643 = vadd.f32 %v2689, %v3642
  %v3644 = vpop.f32.mrf.mxu0
  %3645 = vmatprep.mubr.f32.mxu0 0.0
  %3646 = vmatmul.mubr.f32.gmra.mxu0 %v2590
  %v3647 = vpop.f32.mrf.mxu0
  %v3648 = vadd.f32 %v2689, %v3647
  %v3649 = vpop.f32.mrf.mxu0
  %3650 = vmatprep.mubr.f32.mxu0 0.0
  %3651 = vmatmul.mubr.f32.gmra.mxu0 %v2591
  %v3652 = vpop.f32.mrf.mxu0
  %v3653 = vadd.f32 %v2689, %v3652
  %v3654 = vpop.f32.mrf.mxu0
  %3655 = vmatprep.mubr.f32.mxu0 0.0
  %3656 = vmatmul.mubr.f32.gmra.mxu0 %v2592
  %v3657 = vpop.f32.mrf.mxu0
  %v3658 = vadd.f32 %v2689, %v3657
  %v3659 = vpop.f32.mrf.mxu0
  %3660 = vmatprep.mubr.f32.mxu0 0.0
  %3661 = vmatmul.mubr.f32.gmra.mxu0 %v2593
  %v3662 = vpop.f32.mrf.mxu0
  %v3663 = vadd.f32 %v2689, %v3662
  %v3664 = vpop.f32.mrf.mxu0
  %3665 = vmatprep.mubr.f32.mxu0 0.0
  %3666 = vmatmul.mubr.f32.gmra.mxu0 %v2594
  %v3667 = vpop.f32.mrf.mxu0
  %v3668 = vadd.f32 %v2689, %v3667
  %v3669 = vpop.f32.mrf.mxu0
  %3670 = vmatprep.mubr.f32.mxu0 0.0
  %3671 = vmatmul.mubr.f32.gmra.mxu0 %v2595
  %v3672 = vpop.f32.mrf.mxu0
  %v3673 = vadd.f32 %v2689, %v3672
  %v3674 = vpop.f32.mrf.mxu0
  %3675 = vmatprep.mubr.f32.mxu0 0.0
  %3676 = vmatmul.mubr.f32.gmra.mxu0 %v2596
  %v3677 = vpop.f32.mrf.mxu0
  %v3678 = vadd.f32 %v2689, %v3677
  %v3679 = vpop.f32.mrf.mxu0
  %3680 = vmatprep.mubr.f32.mxu0 0.0
  %3681 = vmatmul.mubr.f32.gmra.mxu0 %v2597
  %v3682 = vpop.f32.mrf.mxu0
  %v3683 = vadd.f32 %v2689, %v3682
  %v3684 = vpop.f32.mrf.mxu0
  %3685 = vmatprep.mubr.f32.mxu0 0.0
  %3686 = vmatmul.mubr.f32.gmra.mxu0 %v2598
  %v3687 = vpop.f32.mrf.mxu0
  %v3688 = vadd.f32 %v2689, %v3687
  %v3689 = vpop.f32.mrf.mxu0
  %3690 = vmatprep.mubr.f32.mxu0 0.0
  %3691 = vmatmul.mubr.f32.gmra.mxu0 %v2599
  %v3692 = vpop.f32.mrf.mxu0
  %v3693 = vadd.f32 %v2689, %v3692
  %v3694 = vpop.f32.mrf.mxu0
  %3695 = vmatprep.mubr.f32.mxu0 0.0
  %3696 = vmatmul.mubr.f32.gmra.mxu0 %v2600
  %v3697 = vpop.f32.mrf.mxu0
  %v3698 = vadd.f32 %v2689, %v3697
  %v3699 = vpop.f32.mrf.mxu0
  %3700 = vmatprep.mubr.f32.mxu0 0.0
  %3701 = vmatmul.mubr.f32.gmra.mxu0 %v2601
  %v3702 = vpop.f32.mrf.mxu0
  %v3703 = vadd.f32 %v2689, %v3702
  %v3704 = vpop.f32.mrf.mxu0
  %3705 = vmatprep.mubr.f32.mxu0 0.0
  %3706 = vmatmul.mubr.f32.gmra.mxu0 %v2602
  %v3707 = vpop.f32.mrf.mxu0
  %v3708 = vadd.f32 %v2689, %v3707
  %v3709 = vpop.f32.mrf.mxu0
  %3710 = vmatprep.mubr.f32.mxu0 0.0
  %3711 = vmatmul.mubr.f32.gmra.mxu0 %v2603
  %v3712 = vpop.f32.mrf.mxu0
  %v3713 = vadd.f32 %v2689, %v3712
  %v3714 = vpop.f32.mrf.mxu0
  %3715 = vmatprep.mubr.f32.mxu0 0.0
  %3716 = vmatmul.mubr.f32.gmra.mxu0 %v2604
  %v3717 = vpop.f32.mrf.mxu0
  %v3718 = vadd.f32 %v2689, %v3717
  %v3719 = vpop.f32.mrf.mxu0
  %3720 = vmatprep.mubr.f32.mxu0 0.0
  %3721 = vmatmul.mubr.f32.gmra.mxu0 %v2605
  %v3722 = vpop.f32.mrf.mxu0
  %v3723 = vadd.f32 %v2689, %v3722
  %v3724 = vpop.f32.mrf.mxu0
  %3725 = vmatprep.mubr.f32.mxu0 0.0
  %3726 = vmatmul.mubr.f32.gmra.mxu0 %v2606
  %v3727 = vpop.f32.mrf.mxu0
  %v3728 = vadd.f32 %v2689, %v3727
  %v3729 = vpop.f32.mrf.mxu0
  %3730 = vmatprep.mubr.f32.mxu0 0.0
  %3731 = vmatmul.mubr.f32.gmra.mxu0 %v2607
  %v3732 = vpop.f32.mrf.mxu0
  %v3733 = vadd.f32 %v2689, %v3732
  %v3734 = vpop.f32.mrf.mxu0
  %3735 = vmatprep.mubr.f32.mxu0 0.0
  %3736 = vmatmul.mubr.f32.gmra.mxu0 %v2608
  %v3737 = vpop.f32.mrf.mxu0
  %v3738 = vadd.f32 %v2689, %v3737
  %v3739 = vpop.f32.mrf.mxu0
  %3740 = vmatprep.mubr.f32.mxu0 0.0
  %3741 = vmatmul.mubr.f32.gmra.mxu0 %v2609
  %v3742 = vpop.f32.mrf.mxu0
  %v3743 = vadd.f32 %v2689, %v3742
  %v3744 = vpop.f32.mrf.mxu0
  %3745 = vmatprep.mubr.f32.mxu0 0.0
  %3746 = vmatmul.mubr.f32.gmra.mxu0 %v2610
  %v3747 = vpop.f32.mrf.mxu0
  %v3748 = vadd.f32 %v2689, %v3747
  %v3749 = vpop.f32.mrf.mxu0
  %3750 = vmatprep.mubr.f32.mxu0 0.0
  %3751 = vmatmul.mubr.f32.gmra.mxu0 %v2611
  %v3752 = vpop.f32.mrf.mxu0
  %v3753 = vadd.f32 %v2689, %v3752
  %v3754 = vpop.f32.mrf.mxu0
  %3755 = vmatprep.mubr.f32.mxu0 0.0
  %3756 = vmatmul.mubr.f32.gmra.mxu0 %v2612
  %v3757 = vpop.f32.mrf.mxu0
  %v3758 = vadd.f32 %v2689, %v3757
  %v3759 = vpop.f32.mrf.mxu0
  %3760 = vmatprep.mubr.f32.mxu0 0.0
  %3761 = vmatmul.mubr.f32.gmra.mxu0 %v2613
  %v3762 = vpop.f32.mrf.mxu0
  %v3763 = vadd.f32 %v2689, %v3762
  %v3764 = vpop.f32.mrf.mxu0
  %3765 = vmatprep.mubr.f32.mxu0 0.0
  %3766 = vmatmul.mubr.f32.gmra.mxu0 %v2614
  %v3767 = vpop.f32.mrf.mxu0
  %v3768 = vadd.f32 %v2689, %v3767
  %v3769 = vpop.f32.mrf.mxu0
  %3770 = vmatprep.mubr.f32.mxu0 0.0
  %3771 = vmatmul.mubr.f32.gmra.mxu0 %v2615
  %v3772 = vpop.f32.mrf.mxu0
  %v3773 = vadd.f32 %v2689, %v3772
  %v3774 = vpop.f32.mrf.mxu0
  %3775 = vmatprep.mubr.f32.mxu0 0.0
  %3776 = vmatmul.mubr.f32.gmra.mxu0 %v2616
  %v3777 = vpop.f32.mrf.mxu0
  %v3778 = vadd.f32 %v2689, %v3777
  %v3779 = vpop.f32.mrf.mxu0
  %3780 = vmatprep.mubr.f32.mxu0 0.0
  %3781 = vmatmul.mubr.f32.gmra.mxu0 %v2617
  %v3782 = vpop.f32.mrf.mxu0
  %v3783 = vadd.f32 %v2689, %v3782
  %v3784 = vpop.f32.mrf.mxu0
  %3785 = vmatprep.mubr.f32.mxu0 0.0
  %3786 = vmatmul.mubr.f32.gmra.mxu0 %v2618
  %v3787 = vpop.f32.mrf.mxu0
  %v3788 = vadd.f32 %v2689, %v3787
  %v3789 = vpop.f32.mrf.mxu0
  %3790 = vmatprep.mubr.f32.mxu0 0.0
  %3791 = vmatmul.mubr.f32.gmra.mxu0 %v2619
  %v3792 = vpop.f32.mrf.mxu0
  %v3793 = vadd.f32 %v2689, %v3792
  %v3794 = vpop.f32.mrf.mxu0
  %3795 = vmatprep.mubr.f32.mxu0 0.0
  %3796 = vmatmul.mubr.f32.gmra.mxu0 %v2620
  %v3797 = vpop.f32.mrf.mxu0
  %v3798 = vadd.f32 %v2689, %v3797
  %v3799 = vpop.f32.mrf.mxu0
  %3800 = vmatprep.mubr.f32.mxu0 0.0
  %3801 = vmatmul.mubr.f32.gmra.mxu0 %v2621
  %v3802 = vpop.f32.mrf.mxu0
  %v3803 = vadd.f32 %v2689, %v3802
  %v3804 = vpop.f32.mrf.mxu0
  %3805 = vmatprep.mubr.f32.mxu0 0.0
  %3806 = vmatmul.mubr.f32.gmra.mxu0 %v2622
  %v3807 = vpop.f32.mrf.mxu0
  %v3808 = vadd.f32 %v2689, %v3807
  %v3809 = vpop.f32.mrf.mxu0
  %3810 = vmatprep.mubr.f32.mxu0 0.0
  %3811 = vmatmul.mubr.f32.gmra.mxu0 %v2623
  %v3812 = vpop.f32.mrf.mxu0
  %v3813 = vadd.f32 %v2689, %v3812
  %v3814 = vpop.f32.mrf.mxu0
  %3815 = vmatprep.mubr.f32.mxu0 0.0
  %3816 = vmatmul.mubr.f32.gmra.mxu0 %v2624
  %v3817 = vpop.f32.mrf.mxu0
  %v3818 = vadd.f32 %v2689, %v3817
  %v3819 = vpop.f32.mrf.mxu0
  %3820 = vmatprep.mubr.f32.mxu0 0.0
  %3821 = vmatmul.mubr.f32.gmra.mxu0 %v2625
  %v3822 = vpop.f32.mrf.mxu0
  %v3823 = vadd.f32 %v2689, %v3822
  %v3824 = vpop.f32.mrf.mxu0
  %3825 = vmatprep.mubr.f32.mxu0 0.0
  %3826 = vmatmul.mubr.f32.gmra.mxu0 %v2626
  %v3827 = vpop.f32.mrf.mxu0
  %v3828 = vadd.f32 %v2689, %v3827
  %v3829 = vpop.f32.mrf.mxu0
  %3830 = vmatprep.mubr.f32.mxu0 0.0
  %3831 = vmatmul.mubr.f32.gmra.mxu0 %v2627
  %v3832 = vpop.f32.mrf.mxu0
  %v3833 = vadd.f32 %v2689, %v3832
  %v3834 = vpop.f32.mrf.mxu0
  %3835 = vmatprep.mubr.f32.mxu0 0.0
  %3836 = vmatmul.mubr.f32.gmra.mxu0 %v2628
  %v3837 = vpop.f32.mrf.mxu0
  %v3838 = vadd.f32 %v2689, %v3837
  %v3839 = vpop.f32.mrf.mxu0
  %3840 = vmatprep.mubr.f32.mxu0 0.0
  %3841 = vmatmul.mubr.f32.gmra.mxu0 %v2629
  %v3842 = vpop.f32.mrf.mxu0
  %v3843 = vadd.f32 %v2689, %v3842
  %v3844 = vpop.f32.mrf.mxu0
  %3845 = vmatprep.mubr.f32.mxu0 0.0
  %3846 = vmatmul.mubr.f32.gmra.mxu0 %v2630
  %v3847 = vpop.f32.mrf.mxu0
  %v3848 = vadd.f32 %v2689, %v3847
  %v3849 = vpop.f32.mrf.mxu0
  %3850 = vmatprep.mubr.f32.mxu0 0.0
  %3851 = vmatmul.mubr.f32.gmra.mxu0 %v2631
  %v3852 = vpop.f32.mrf.mxu0
  %v3853 = vadd.f32 %v2689, %v3852
  %v3854 = vpop.f32.mrf.mxu0
  %3855 = vmatprep.mubr.f32.mxu0 0.0
  %3856 = vmatmul.mubr.f32.gmra.mxu0 %v2632
  %v3857 = vpop.f32.mrf.mxu0
  %v3858 = vadd.f32 %v2689, %v3857
  %v3859 = vpop.f32.mrf.mxu0
  %3860 = vmatprep.mubr.f32.mxu0 0.0
  %3861 = vmatmul.mubr.f32.gmra.mxu0 %v2633
  %v3862 = vpop.f32.mrf.mxu0
  %v3863 = vadd.f32 %v2689, %v3862
  %v3864 = vpop.f32.mrf.mxu0
  %3865 = vmatprep.mubr.f32.mxu0 0.0
  %3866 = vmatmul.mubr.f32.gmra.mxu0 %v2634
  %v3867 = vpop.f32.mrf.mxu0
  %v3868 = vadd.f32 %v2689, %v3867
  %v3869 = vpop.f32.mrf.mxu0
  %3870 = vmatprep.mubr.f32.mxu0 0.0
  %3871 = vmatmul.mubr.f32.gmra.mxu0 %v2635
  %v3872 = vpop.f32.mrf.mxu0
  %v3873 = vadd.f32 %v2689, %v3872
  %v3874 = vpop.f32.mrf.mxu0
  %3875 = vmatprep.mubr.f32.mxu0 0.0
  %3876 = vmatmul.mubr.f32.gmra.mxu0 %v2636
  %v3877 = vpop.f32.mrf.mxu0
  %v3878 = vadd.f32 %v2689, %v3877
  %v3879 = vpop.f32.mrf.mxu0
  %3880 = vmatprep.mubr.f32.mxu0 0.0
  %3881 = vmatmul.mubr.f32.gmra.mxu0 %v2637
  %v3882 = vpop.f32.mrf.mxu0
  %v3883 = vadd.f32 %v2689, %v3882
  %v3884 = vpop.f32.mrf.mxu0
  %3885 = vmatprep.mubr.f32.mxu0 0.0
  %3886 = vmatmul.mubr.f32.gmra.mxu0 %v2638
  %v3887 = vpop.f32.mrf.mxu0
  %v3888 = vadd.f32 %v2689, %v3887
  %v3889 = vpop.f32.mrf.mxu0
  %3890 = vmatprep.mubr.f32.mxu0 0.0
  %3891 = vmatmul.mubr.f32.gmra.mxu0 %v2639
  %v3892 = vpop.f32.mrf.mxu0
  %v3893 = vadd.f32 %v2689, %v3892
  %v3894 = vpop.f32.mrf.mxu0
  %3895 = vmatprep.mubr.f32.mxu0 0.0
  %3896 = vmatmul.mubr.f32.gmra.mxu0 %v2640
  %v3897 = vpop.f32.mrf.mxu0
  %v3898 = vadd.f32 %v2689, %v3897
  %v3899 = vpop.f32.mrf.mxu0
  %3900 = vmatprep.mubr.f32.mxu0 0.0
  %3901 = vmatmul.mubr.f32.gmra.mxu0 %v2641
  %v3902 = vpop.f32.mrf.mxu0
  %v3903 = vadd.f32 %v2689, %v3902
  %v3904 = vpop.f32.mrf.mxu0
  %3905 = vmatprep.mubr.f32.mxu0 0.0
  %3906 = vmatmul.mubr.f32.gmra.mxu0 %v2642
  %v3907 = vpop.f32.mrf.mxu0
  %v3908 = vadd.f32 %v2689, %v3907
  %v3909 = vpop.f32.mrf.mxu0
  %3910 = vmatprep.mubr.f32.mxu0 0.0
  %3911 = vmatmul.mubr.f32.gmra.mxu0 %v2643
  %v3912 = vpop.f32.mrf.mxu0
  %v3913 = vadd.f32 %v2689, %v3912
  %v3914 = vpop.f32.mrf.mxu0
  %3915 = vmatprep.mubr.f32.mxu0 0.0
  %3916 = vmatmul.mubr.f32.gmra.mxu0 %v2644
  %v3917 = vpop.f32.mrf.mxu0
  %v3918 = vadd.f32 %v2689, %v3917
  %v3919 = vpop.f32.mrf.mxu0
  %3920 = vmatprep.mubr.f32.mxu0 0.0
  %3921 = vmatmul.mubr.f32.gmra.mxu0 %v2645
  %v3922 = vpop.f32.mrf.mxu0
  %v3923 = vadd.f32 %v2689, %v3922
  %v3924 = vpop.f32.mrf.mxu0
  %3925 = vmatprep.mubr.f32.mxu0 0.0
  %3926 = vmatmul.mubr.f32.gmra.mxu0 %v2646
  %v3927 = vpop.f32.mrf.mxu0
  %v3928 = vadd.f32 %v2689, %v3927
  %v3929 = vpop.f32.mrf.mxu0
  %3930 = vmatprep.mubr.f32.mxu0 0.0
  %3931 = vmatmul.mubr.f32.gmra.mxu0 %v2647
  %v3932 = vpop.f32.mrf.mxu0
  %v3933 = vadd.f32 %v2689, %v3932
  %v3934 = vpop.f32.mrf.mxu0
  %3935 = vmatprep.mubr.f32.mxu0 0.0
  %3936 = vmatmul.mubr.f32.gmra.mxu0 %v2648
  %v3937 = vpop.f32.mrf.mxu0
  %v3938 = vadd.f32 %v2689, %v3937
  %v3939 = vpop.f32.mrf.mxu0
  %3940 = vmatprep.mubr.f32.mxu0 0.0
  %3941 = vmatmul.mubr.f32.gmra.mxu0 %v2649
  %v3942 = vpop.f32.mrf.mxu0
  %v3943 = vadd.f32 %v2689, %v3942
  %v3944 = vpop.f32.mrf.mxu0
  %3945 = vmatprep.mubr.f32.mxu0 0.0
  %3946 = vmatmul.mubr.f32.gmra.mxu0 %v2650
  %v3947 = vpop.f32.mrf.mxu0
  %v3948 = vadd.f32 %v2689, %v3947
  %v3949 = vpop.f32.mrf.mxu0
  %3950 = vmatprep.mubr.f32.mxu0 0.0
  %3951 = vmatmul.mubr.f32.gmra.mxu0 %v2651
  %v3952 = vpop.f32.mrf.mxu0
  %v3953 = vadd.f32 %v2689, %v3952
  %v3954 = vpop.f32.mrf.mxu0
  %3955 = vmatprep.mubr.f32.mxu0 0.0
  %3956 = vmatmul.mubr.f32.gmra.mxu0 %v2652
  %v3957 = vpop.f32.mrf.mxu0
  %v3958 = vadd.f32 %v2689, %v3957
  %v3959 = vpop.f32.mrf.mxu0
  %3960 = vmatprep.mubr.f32.mxu0 0.0
  %3961 = vmatmul.mubr.f32.gmra.mxu0 %v2653
  %v3962 = vpop.f32.mrf.mxu0
  %v3963 = vadd.f32 %v2689, %v3962
  %v3964 = vpop.f32.mrf.mxu0
  %3965 = vmatprep.mubr.f32.mxu0 0.0
  %3966 = vmatmul.mubr.f32.gmra.mxu0 %v2654
  %v3967 = vpop.f32.mrf.mxu0
  %v3968 = vadd.f32 %v2689, %v3967
  %v3969 = vpop.f32.mrf.mxu0
  %3970 = vmatprep.mubr.f32.mxu0 0.0
  %3971 = vmatmul.mubr.f32.gmra.mxu0 %v2655
  %v3972 = vpop.f32.mrf.mxu0
  %v3973 = vadd.f32 %v2689, %v3972
  %v3974 = vpop.f32.mrf.mxu0
  %3975 = vmatprep.mubr.f32.mxu0 0.0
  %3976 = vmatmul.mubr.f32.gmra.mxu0 %v2656
  %v3977 = vpop.f32.mrf.mxu0
  %v3978 = vadd.f32 %v2689, %v3977
  %v3979 = vpop.f32.mrf.mxu0
  %3980 = vmatprep.mubr.f32.mxu0 0.0
  %3981 = vmatmul.mubr.f32.gmra.mxu0 %v2657
  %v3982 = vpop.f32.mrf.mxu0
  %v3983 = vadd.f32 %v2689, %v3982
  %v3984 = vpop.f32.mrf.mxu0
  %3985 = vmatprep.mubr.f32.mxu0 0.0
  %3986 = vmatmul.mubr.f32.gmra.mxu0 %v2658
  %v3987 = vpop.f32.mrf.mxu0
  %v3988 = vadd.f32 %v2689, %v3987
  %v3989 = vpop.f32.mrf.mxu0
  %3990 = vmatprep.mubr.f32.mxu0 0.0
  %3991 = vmatmul.mubr.f32.gmra.mxu0 %v2659
  %v3992 = vpop.f32.mrf.mxu0
  %v3993 = vadd.f32 %v2689, %v3992
  %v3994 = vpop.f32.mrf.mxu0
  %3995 = vmatprep.mubr.f32.mxu0 0.0
  %3996 = vmatmul.mubr.f32.gmra.mxu0 %v2660
  %v3997 = vpop.f32.mrf.mxu0
  %v3998 = vadd.f32 %v2689, %v3997
  %v3999 = vpop.f32.mrf.mxu0
  %4000 = vmatprep.mubr.f32.mxu0 0.0
  %4001 = vmatmul.mubr.f32.gmra.mxu0 %v2661
  %v4002 = vpop.f32.mrf.mxu0
  %v4003 = vadd.f32 %v2689, %v4002
  %v4004 = vpop.f32.mrf.mxu0
  %4005 = vmatprep.mubr.f32.mxu0 0.0
  %4006 = vmatmul.mubr.f32.gmra.mxu0 %v2662
  %v4007 = vpop.f32.mrf.mxu0
  %v4008 = vadd.f32 %v2689, %v4007
  %v4009 = vpop.f32.mrf.mxu0
  %4010 = vmatprep.mubr.f32.mxu0 0.0
  %4011 = vmatmul.mubr.f32.gmra.mxu0 %v2663
  %v4012 = vpop.f32.mrf.mxu0
  %v4013 = vadd.f32 %v2689, %v4012
  %v4014 = vpop.f32.mrf.mxu0
  %4015 = vmatprep.mubr.f32.mxu0 0.0
  %4016 = vmatmul.mubr.f32.gmra.mxu0 %v2664
  %v4017 = vpop.f32.mrf.mxu0
  %v4018 = vadd.f32 %v2689, %v4017
  %v4019 = vpop.f32.mrf.mxu0
  %4020 = vmatprep.mubr.f32.mxu0 0.0
  %4021 = vmatmul.mubr.f32.gmra.mxu0 %v2665
  %v4022 = vpop.f32.mrf.mxu0
  %v4023 = vadd.f32 %v2689, %v4022
  %v4024 = vpop.f32.mrf.mxu0
  %4025 = vmatprep.mubr.f32.mxu0 0.0
  %4026 = vmatmul.mubr.f32.gmra.mxu0 %v2666
  %v4027 = vpop.f32.mrf.mxu0
  %v4028 = vadd.f32 %v2689, %v4027
  %v4029 = vpop.f32.mrf.mxu0
  %4030 = vmatprep.mubr.f32.mxu0 0.0
  %4031 = vmatmul.mubr.f32.gmra.mxu0 %v2667
  %v4032 = vpop.f32.mrf.mxu0
  %v4033 = vadd.f32 %v2689, %v4032
  %v4034 = vpop.f32.mrf.mxu0
  %4035 = vdwg.mxu0
  %v4036 = vmax.f32 %v2758, 0.0
  %v4037 = vmax.f32 %v2763, 0.0
  %v4038 = vmax.f32 %v2768, 0.0
  %v4039 = vmax.f32 %v2773, 0.0
  %v4040 = vmax.f32 %v2778, 0.0
  %v4041 = vmax.f32 %v2783, 0.0
  %v4042 = vmax.f32 %v2788, 0.0
  %v4043 = vmax.f32 %v2793, 0.0
  %v4044 = vmax.f32 %v2798, 0.0
  %v4045 = vmax.f32 %v2803, 0.0
  %v4046 = vmax.f32 %v2808, 0.0
  %v4047 = vmax.f32 %v2813, 0.0
  %v4048 = vmax.f32 %v2818, 0.0
  %v4049 = vmax.f32 %v2823, 0.0
  %v4050 = vmax.f32 %v2828, 0.0
  %v4051 = vmax.f32 %v2833, 0.0
  %v4052 = vmax.f32 %v2838, 0.0
  %v4053 = vmax.f32 %v2843, 0.0
  %v4054 = vmax.f32 %v2848, 0.0
  %v4055 = vmax.f32 %v2853, 0.0
  %v4056 = vmax.f32 %v2858, 0.0
  %v4057 = vmax.f32 %v2863, 0.0
  %v4058 = vmax.f32 %v2868, 0.0
  %v4059 = vmax.f32 %v2873, 0.0
  %v4060 = vmax.f32 %v2878, 0.0
  %v4061 = vmax.f32 %v2883, 0.0
  %v4062 = vmax.f32 %v2888, 0.0
  %v4063 = vmax.f32 %v2893, 0.0
  %v4064 = vmax.f32 %v2898, 0.0
  %v4065 = vmax.f32 %v2903, 0.0
  %v4066 = vmax.f32 %v2908, 0.0
  %v4067 = vmax.f32 %v2913, 0.0
  %v4068 = vmax.f32 %v2918, 0.0
  %v4069 = vmax.f32 %v2923, 0.0
  %v4070 = vmax.f32 %v2928, 0.0
  %v4071 = vmax.f32 %v2933, 0.0
  %v4072 = vmax.f32 %v2938, 0.0
  %v4073 = vmax.f32 %v2943, 0.0
  %v4074 = vmax.f32 %v2948, 0.0
  %v4075 = vmax.f32 %v2953, 0.0
  %v4076 = vmax.f32 %v2958, 0.0
  %v4077 = vmax.f32 %v2963, 0.0
  %v4078 = vmax.f32 %v2968, 0.0
  %v4079 = vmax.f32 %v2973, 0.0
  %v4080 = vmax.f32 %v2978, 0.0
  %v4081 = vmax.f32 %v2983, 0.0
  %v4082 = vmax.f32 %v2988, 0.0
  %v4083 = vmax.f32 %v2993, 0.0
  %v4084 = vmax.f32 %v2998, 0.0
  %v4085 = vmax.f32 %v3003, 0.0
  %v4086 = vmax.f32 %v3008, 0.0
  %v4087 = vmax.f32 %v3013, 0.0
  %v4088 = vmax.f32 %v3018, 0.0
  %v4089 = vmax.f32 %v3023, 0.0
  %v4090 = vmax.f32 %v3028, 0.0
  %v4091 = vmax.f32 %v3033, 0.0
  %v4092 = vmax.f32 %v3038, 0.0
  %v4093 = vmax.f32 %v3043, 0.0
  %v4094 = vmax.f32 %v3048, 0.0
  %v4095 = vmax.f32 %v3053, 0.0
  %v4096 = vmax.f32 %v3058, 0.0
  %v4097 = vmax.f32 %v3063, 0.0
  %v4098 = vmax.f32 %v3068, 0.0
  %v4099 = vmax.f32 %v3073, 0.0
  %v4100 = vmax.f32 %v3078, 0.0
  %v4101 = vmax.f32 %v3083, 0.0
  %v4102 = vmax.f32 %v3088, 0.0
  %v4103 = vmax.f32 %v3093, 0.0
  %v4104 = vmax.f32 %v3098, 0.0
  %v4105 = vmax.f32 %v3103, 0.0
  %v4106 = vmax.f32 %v3108, 0.0
  %v4107 = vmax.f32 %v3113, 0.0
  %v4108 = vmax.f32 %v3118, 0.0
  %v4109 = vmax.f32 %v3123, 0.0
  %v4110 = vmax.f32 %v3128, 0.0
  %v4111 = vmax.f32 %v3133, 0.0
  %v4112 = vmax.f32 %v3138, 0.0
  %v4113 = vmax.f32 %v3143, 0.0
  %v4114 = vmax.f32 %v3148, 0.0
  %v4115 = vmax.f32 %v3153, 0.0
  %v4116 = vmax.f32 %v3158, 0.0
  %v4117 = vmax.f32 %v3163, 0.0
  %v4118 = vmax.f32 %v3168, 0.0
  %v4119 = vmax.f32 %v3173, 0.0
  %v4120 = vmax.f32 %v3178, 0.0
  %v4121 = vmax.f32 %v3183, 0.0
  %v4122 = vmax.f32 %v3188, 0.0
  %v4123 = vmax.f32 %v3193, 0.0
  %v4124 = vmax.f32 %v3198, 0.0
  %v4125 = vmax.f32 %v3203, 0.0
  %v4126 = vmax.f32 %v3208, 0.0
  %v4127 = vmax.f32 %v3213, 0.0
  %v4128 = vmax.f32 %v3218, 0.0
  %v4129 = vmax.f32 %v3223, 0.0
  %v4130 = vmax.f32 %v3228, 0.0
  %v4131 = vmax.f32 %v3233, 0.0
  %v4132 = vmax.f32 %v3238, 0.0
  %v4133 = vmax.f32 %v3243, 0.0
  %v4134 = vmax.f32 %v3248, 0.0
  %v4135 = vmax.f32 %v3253, 0.0
  %v4136 = vmax.f32 %v3258, 0.0
  %v4137 = vmax.f32 %v3263, 0.0
  %v4138 = vmax.f32 %v3268, 0.0
  %v4139 = vmax.f32 %v3273, 0.0
  %v4140 = vmax.f32 %v3278, 0.0
  %v4141 = vmax.f32 %v3283, 0.0
  %v4142 = vmax.f32 %v3288, 0.0
  %v4143 = vmax.f32 %v3293, 0.0
  %v4144 = vmax.f32 %v3298, 0.0
  %v4145 = vmax.f32 %v3303, 0.0
  %v4146 = vmax.f32 %v3308, 0.0
  %v4147 = vmax.f32 %v3313, 0.0
  %v4148 = vmax.f32 %v3318, 0.0
  %v4149 = vmax.f32 %v3323, 0.0
  %v4150 = vmax.f32 %v3328, 0.0
  %v4151 = vmax.f32 %v3333, 0.0
  %v4152 = vmax.f32 %v3338, 0.0
  %v4153 = vmax.f32 %v3343, 0.0
  %v4154 = vmax.f32 %v3348, 0.0
  %v4155 = vmax.f32 %v3353, 0.0
  %v4156 = vmax.f32 %v3358, 0.0
  %v4157 = vmax.f32 %v3363, 0.0
  %v4158 = vmax.f32 %v3368, 0.0
  %v4159 = vmax.f32 %v3373, 0.0
  %v4160 = vmax.f32 %v3378, 0.0
  %v4161 = vmax.f32 %v3383, 0.0
  %v4162 = vmax.f32 %v3388, 0.0
  %v4163 = vmax.f32 %v3393, 0.0
  %v4164 = vmax.f32 %v3398, 0.0
  %v4165 = vmax.f32 %v3403, 0.0
  %v4166 = vmax.f32 %v3408, 0.0
  %v4167 = vmax.f32 %v3413, 0.0
  %v4168 = vmax.f32 %v3418, 0.0
  %v4169 = vmax.f32 %v3423, 0.0
  %v4170 = vmax.f32 %v3428, 0.0
  %v4171 = vmax.f32 %v3433, 0.0
  %v4172 = vmax.f32 %v3438, 0.0
  %v4173 = vmax.f32 %v3443, 0.0
  %v4174 = vmax.f32 %v3448, 0.0
  %v4175 = vmax.f32 %v3453, 0.0
  %v4176 = vmax.f32 %v3458, 0.0
  %v4177 = vmax.f32 %v3463, 0.0
  %v4178 = vmax.f32 %v3468, 0.0
  %v4179 = vmax.f32 %v3473, 0.0
  %v4180 = vmax.f32 %v3478, 0.0
  %v4181 = vmax.f32 %v3483, 0.0
  %v4182 = vmax.f32 %v3488, 0.0
  %v4183 = vmax.f32 %v3493, 0.0
  %v4184 = vmax.f32 %v3498, 0.0
  %v4185 = vmax.f32 %v3503, 0.0
  %v4186 = vmax.f32 %v3508, 0.0
  %v4187 = vmax.f32 %v3513, 0.0
  %v4188 = vmax.f32 %v3518, 0.0
  %v4189 = vmax.f32 %v3523, 0.0
  %v4190 = vmax.f32 %v3528, 0.0
  %v4191 = vmax.f32 %v3533, 0.0
  %v4192 = vmax.f32 %v3538, 0.0
  %v4193 = vmax.f32 %v3543, 0.0
  %v4194 = vmax.f32 %v3548, 0.0
  %v4195 = vmax.f32 %v3553, 0.0
  %v4196 = vmax.f32 %v3558, 0.0
  %v4197 = vmax.f32 %v3563, 0.0
  %v4198 = vmax.f32 %v3568, 0.0
  %v4199 = vmax.f32 %v3573, 0.0
  %v4200 = vmax.f32 %v3578, 0.0
  %v4201 = vmax.f32 %v3583, 0.0
  %v4202 = vmax.f32 %v3588, 0.0
  %v4203 = vmax.f32 %v3593, 0.0
  %v4204 = vmax.f32 %v3598, 0.0
  %v4205 = vmax.f32 %v3603, 0.0
  %v4206 = vmax.f32 %v3608, 0.0
  %v4207 = vmax.f32 %v3613, 0.0
  %v4208 = vmax.f32 %v3618, 0.0
  %v4209 = vmax.f32 %v3623, 0.0
  %v4210 = vmax.f32 %v3628, 0.0
  %v4211 = vmax.f32 %v3633, 0.0
  %v4212 = vmax.f32 %v3638, 0.0
  %v4213 = vmax.f32 %v3643, 0.0
  %v4214 = vmax.f32 %v3648, 0.0
  %v4215 = vmax.f32 %v3653, 0.0
  %v4216 = vmax.f32 %v3658, 0.0
  %v4217 = vmax.f32 %v3663, 0.0
  %v4218 = vmax.f32 %v3668, 0.0
  %v4219 = vmax.f32 %v3673, 0.0
  %v4220 = vmax.f32 %v3678, 0.0
  %v4221 = vmax.f32 %v3683, 0.0
  %v4222 = vmax.f32 %v3688, 0.0
  %v4223 = vmax.f32 %v3693, 0.0
  %v4224 = vmax.f32 %v3698, 0.0
  %v4225 = vmax.f32 %v3703, 0.0
  %v4226 = vmax.f32 %v3708, 0.0
  %v4227 = vmax.f32 %v3713, 0.0
  %v4228 = vmax.f32 %v3718, 0.0
  %v4229 = vmax.f32 %v3723, 0.0
  %v4230 = vmax.f32 %v3728, 0.0
  %v4231 = vmax.f32 %v3733, 0.0
  %v4232 = vmax.f32 %v3738, 0.0
  %v4233 = vmax.f32 %v3743, 0.0
  %v4234 = vmax.f32 %v3748, 0.0
  %v4235 = vmax.f32 %v3753, 0.0
  %v4236 = vmax.f32 %v3758, 0.0
  %v4237 = vmax.f32 %v3763, 0.0
  %v4238 = vmax.f32 %v3768, 0.0
  %v4239 = vmax.f32 %v3773, 0.0
  %v4240 = vmax.f32 %v3778, 0.0
  %v4241 = vmax.f32 %v3783, 0.0
  %v4242 = vmax.f32 %v3788, 0.0
  %v4243 = vmax.f32 %v3793, 0.0
  %v4244 = vmax.f32 %v3798, 0.0
  %v4245 = vmax.f32 %v3803, 0.0
  %v4246 = vmax.f32 %v3808, 0.0
  %v4247 = vmax.f32 %v3813, 0.0
  %v4248 = vmax.f32 %v3818, 0.0
  %v4249 = vmax.f32 %v3823, 0.0
  %v4250 = vmax.f32 %v3828, 0.0
  %v4251 = vmax.f32 %v3833, 0.0
  %v4252 = vmax.f32 %v3838, 0.0
  %v4253 = vmax.f32 %v3843, 0.0
  %v4254 = vmax.f32 %v3848, 0.0
  %v4255 = vmax.f32 %v3853, 0.0
  %v4256 = vmax.f32 %v3858, 0.0
  %v4257 = vmax.f32 %v3863, 0.0
  %v4258 = vmax.f32 %v3868, 0.0
  %v4259 = vmax.f32 %v3873, 0.0
  %v4260 = vmax.f32 %v3878, 0.0
  %v4261 = vmax.f32 %v3883, 0.0
  %v4262 = vmax.f32 %v3888, 0.0
  %v4263 = vmax.f32 %v3893, 0.0
  %v4264 = vmax.f32 %v3898, 0.0
  %v4265 = vmax.f32 %v3903, 0.0
  %v4266 = vmax.f32 %v3908, 0.0
  %v4267 = vmax.f32 %v3913, 0.0
  %v4268 = vmax.f32 %v3918, 0.0
  %v4269 = vmax.f32 %v3923, 0.0
  %v4270 = vmax.f32 %v3928, 0.0
  %v4271 = vmax.f32 %v3933, 0.0
  %v4272 = vmax.f32 %v3938, 0.0
  %v4273 = vmax.f32 %v3943, 0.0
  %v4274 = vmax.f32 %v3948, 0.0
  %v4275 = vmax.f32 %v3953, 0.0
  %v4276 = vmax.f32 %v3958, 0.0
  %v4277 = vmax.f32 %v3963, 0.0
  %v4278 = vmax.f32 %v3968, 0.0
  %v4279 = vmax.f32 %v3973, 0.0
  %v4280 = vmax.f32 %v3978, 0.0
  %v4281 = vmax.f32 %v3983, 0.0
  %v4282 = vmax.f32 %v3988, 0.0
  %v4283 = vmax.f32 %v3993, 0.0
  %v4284 = vmax.f32 %v3998, 0.0
  %v4285 = vmax.f32 %v4003, 0.0
  %v4286 = vmax.f32 %v4008, 0.0
  %v4287 = vmax.f32 %v4013, 0.0
  %v4288 = vmax.f32 %v4018, 0.0
  %v4289 = vmax.f32 %v4023, 0.0
  %v4290 = vmax.f32 %v4028, 0.0
  %v4291 = vmax.f32 %v4033, 0.0
  %v4292 = vld [vmem:[%s6] sm:$0xff]
  %v4293 = vld [vmem:[%s6 + $0x8] sm:$0xff]
  %v4294 = vmul.f32 %v4036, %v4292
  %v4295 = vmul.f32 %v4037, %v4293
  %v4296 = vmul.f32 %v4038, %v4292
  %v4297 = vmul.f32 %v4039, %v4293
  %v4298 = vmul.f32 %v4040, %v4292
  %v4299 = vmul.f32 %v4041, %v4293
  %v4300 = vmul.f32 %v4042, %v4292
  %v4301 = vmul.f32 %v4043, %v4293
  %v4302 = vmul.f32 %v4044, %v4292
  %v4303 = vmul.f32 %v4045, %v4293
  %v4304 = vmul.f32 %v4046, %v4292
  %v4305 = vmul.f32 %v4047, %v4293
  %v4306 = vmul.f32 %v4048, %v4292
  %v4307 = vmul.f32 %v4049, %v4293
  %v4308 = vmul.f32 %v4050, %v4292
  %v4309 = vmul.f32 %v4051, %v4293
  %v4310 = vmul.f32 %v4052, %v4292
  %v4311 = vmul.f32 %v4053, %v4293
  %v4312 = vmul.f32 %v4054, %v4292
  %v4313 = vmul.f32 %v4055, %v4293
  %v4314 = vmul.f32 %v4056, %v4292
  %v4315 = vmul.f32 %v4057, %v4293
  %v4316 = vmul.f32 %v4058, %v4292
  %v4317 = vmul.f32 %v4059, %v4293
  %v4318 = vmul.f32 %v4060, %v4292
  %v4319 = vmul.f32 %v4061, %v4293
  %v4320 = vmul.f32 %v4062, %v4292
  %v4321 = vmul.f32 %v4063, %v4293
  %v4322 = vmul.f32 %v4064, %v4292
  %v4323 = vmul.f32 %v4065, %v4293
  %v4324 = vmul.f32 %v4066, %v4292
  %v4325 = vmul.f32 %v4067, %v4293
  %v4326 = vmul.f32 %v4068, %v4292
  %v4327 = vmul.f32 %v4069, %v4293
  %v4328 = vmul.f32 %v4070, %v4292
  %v4329 = vmul.f32 %v4071, %v4293
  %v4330 = vmul.f32 %v4072, %v4292
  %v4331 = vmul.f32 %v4073, %v4293
  %v4332 = vmul.f32 %v4074, %v4292
  %v4333 = vmul.f32 %v4075, %v4293
  %v4334 = vmul.f32 %v4076, %v4292
  %v4335 = vmul.f32 %v4077, %v4293
  %v4336 = vmul.f32 %v4078, %v4292
  %v4337 = vmul.f32 %v4079, %v4293
  %v4338 = vmul.f32 %v4080, %v4292
  %v4339 = vmul.f32 %v4081, %v4293
  %v4340 = vmul.f32 %v4082, %v4292
  %v4341 = vmul.f32 %v4083, %v4293
  %v4342 = vmul.f32 %v4084, %v4292
  %v4343 = vmul.f32 %v4085, %v4293
  %v4344 = vmul.f32 %v4086, %v4292
  %v4345 = vmul.f32 %v4087, %v4293
  %v4346 = vmul.f32 %v4088, %v4292
  %v4347 = vmul.f32 %v4089, %v4293
  %v4348 = vmul.f32 %v4090, %v4292
  %v4349 = vmul.f32 %v4091, %v4293
  %v4350 = vmul.f32 %v4092, %v4292
  %v4351 = vmul.f32 %v4093, %v4293
  %v4352 = vmul.f32 %v4094, %v4292
  %v4353 = vmul.f32 %v4095, %v4293
  %v4354 = vmul.f32 %v4096, %v4292
  %v4355 = vmul.f32 %v4097, %v4293
  %v4356 = vmul.f32 %v4098, %v4292
  %v4357 = vmul.f32 %v4099, %v4293
  %v4358 = vmul.f32 %v4100, %v4292
  %v4359 = vmul.f32 %v4101, %v4293
  %v4360 = vmul.f32 %v4102, %v4292
  %v4361 = vmul.f32 %v4103, %v4293
  %v4362 = vmul.f32 %v4104, %v4292
  %v4363 = vmul.f32 %v4105, %v4293
  %v4364 = vmul.f32 %v4106, %v4292
  %v4365 = vmul.f32 %v4107, %v4293
  %v4366 = vmul.f32 %v4108, %v4292
  %v4367 = vmul.f32 %v4109, %v4293
  %v4368 = vmul.f32 %v4110, %v4292
  %v4369 = vmul.f32 %v4111, %v4293
  %v4370 = vmul.f32 %v4112, %v4292
  %v4371 = vmul.f32 %v4113, %v4293
  %v4372 = vmul.f32 %v4114, %v4292
  %v4373 = vmul.f32 %v4115, %v4293
  %v4374 = vmul.f32 %v4116, %v4292
  %v4375 = vmul.f32 %v4117, %v4293
  %v4376 = vmul.f32 %v4118, %v4292
  %v4377 = vmul.f32 %v4119, %v4293
  %v4378 = vmul.f32 %v4120, %v4292
  %v4379 = vmul.f32 %v4121, %v4293
  %v4380 = vmul.f32 %v4122, %v4292
  %v4381 = vmul.f32 %v4123, %v4293
  %v4382 = vmul.f32 %v4124, %v4292
  %v4383 = vmul.f32 %v4125, %v4293
  %v4384 = vmul.f32 %v4126, %v4292
  %v4385 = vmul.f32 %v4127, %v4293
  %v4386 = vmul.f32 %v4128, %v4292
  %v4387 = vmul.f32 %v4129, %v4293
  %v4388 = vmul.f32 %v4130, %v4292
  %v4389 = vmul.f32 %v4131, %v4293
  %v4390 = vmul.f32 %v4132, %v4292
  %v4391 = vmul.f32 %v4133, %v4293
  %v4392 = vmul.f32 %v4134, %v4292
  %v4393 = vmul.f32 %v4135, %v4293
  %v4394 = vmul.f32 %v4136, %v4292
  %v4395 = vmul.f32 %v4137, %v4293
  %v4396 = vmul.f32 %v4138, %v4292
  %v4397 = vmul.f32 %v4139, %v4293
  %v4398 = vmul.f32 %v4140, %v4292
  %v4399 = vmul.f32 %v4141, %v4293
  %v4400 = vmul.f32 %v4142, %v4292
  %v4401 = vmul.f32 %v4143, %v4293
  %v4402 = vmul.f32 %v4144, %v4292
  %v4403 = vmul.f32 %v4145, %v4293
  %v4404 = vmul.f32 %v4146, %v4292
  %v4405 = vmul.f32 %v4147, %v4293
  %v4406 = vmul.f32 %v4148, %v4292
  %v4407 = vmul.f32 %v4149, %v4293
  %v4408 = vmul.f32 %v4150, %v4292
  %v4409 = vmul.f32 %v4151, %v4293
  %v4410 = vmul.f32 %v4152, %v4292
  %v4411 = vmul.f32 %v4153, %v4293
  %v4412 = vmul.f32 %v4154, %v4292
  %v4413 = vmul.f32 %v4155, %v4293
  %v4414 = vmul.f32 %v4156, %v4292
  %v4415 = vmul.f32 %v4157, %v4293
  %v4416 = vmul.f32 %v4158, %v4292
  %v4417 = vmul.f32 %v4159, %v4293
  %v4418 = vmul.f32 %v4160, %v4292
  %v4419 = vmul.f32 %v4161, %v4293
  %v4420 = vmul.f32 %v4162, %v4292
  %v4421 = vmul.f32 %v4163, %v4293
  %v4422 = vmul.f32 %v4164, %v4292
  %v4423 = vmul.f32 %v4165, %v4293
  %v4424 = vmul.f32 %v4166, %v4292
  %v4425 = vmul.f32 %v4167, %v4293
  %v4426 = vmul.f32 %v4168, %v4292
  %v4427 = vmul.f32 %v4169, %v4293
  %v4428 = vmul.f32 %v4170, %v4292
  %v4429 = vmul.f32 %v4171, %v4293
  %v4430 = vmul.f32 %v4172, %v4292
  %v4431 = vmul.f32 %v4173, %v4293
  %v4432 = vmul.f32 %v4174, %v4292
  %v4433 = vmul.f32 %v4175, %v4293
  %v4434 = vmul.f32 %v4176, %v4292
  %v4435 = vmul.f32 %v4177, %v4293
  %v4436 = vmul.f32 %v4178, %v4292
  %v4437 = vmul.f32 %v4179, %v4293
  %v4438 = vmul.f32 %v4180, %v4292
  %v4439 = vmul.f32 %v4181, %v4293
  %v4440 = vmul.f32 %v4182, %v4292
  %v4441 = vmul.f32 %v4183, %v4293
  %v4442 = vmul.f32 %v4184, %v4292
  %v4443 = vmul.f32 %v4185, %v4293
  %v4444 = vmul.f32 %v4186, %v4292
  %v4445 = vmul.f32 %v4187, %v4293
  %v4446 = vmul.f32 %v4188, %v4292
  %v4447 = vmul.f32 %v4189, %v4293
  %v4448 = vmul.f32 %v4190, %v4292
  %v4449 = vmul.f32 %v4191, %v4293
  %v4450 = vmul.f32 %v4192, %v4292
  %v4451 = vmul.f32 %v4193, %v4293
  %v4452 = vmul.f32 %v4194, %v4292
  %v4453 = vmul.f32 %v4195, %v4293
  %v4454 = vmul.f32 %v4196, %v4292
  %v4455 = vmul.f32 %v4197, %v4293
  %v4456 = vmul.f32 %v4198, %v4292
  %v4457 = vmul.f32 %v4199, %v4293
  %v4458 = vmul.f32 %v4200, %v4292
  %v4459 = vmul.f32 %v4201, %v4293
  %v4460 = vmul.f32 %v4202, %v4292
  %v4461 = vmul.f32 %v4203, %v4293
  %v4462 = vmul.f32 %v4204, %v4292
  %v4463 = vmul.f32 %v4205, %v4293
  %v4464 = vmul.f32 %v4206, %v4292
  %v4465 = vmul.f32 %v4207, %v4293
  %v4466 = vmul.f32 %v4208, %v4292
  %v4467 = vmul.f32 %v4209, %v4293
  %v4468 = vmul.f32 %v4210, %v4292
  %v4469 = vmul.f32 %v4211, %v4293
  %v4470 = vmul.f32 %v4212, %v4292
  %v4471 = vmul.f32 %v4213, %v4293
  %v4472 = vmul.f32 %v4214, %v4292
  %v4473 = vmul.f32 %v4215, %v4293
  %v4474 = vmul.f32 %v4216, %v4292
  %v4475 = vmul.f32 %v4217, %v4293
  %v4476 = vmul.f32 %v4218, %v4292
  %v4477 = vmul.f32 %v4219, %v4293
  %v4478 = vmul.f32 %v4220, %v4292
  %v4479 = vmul.f32 %v4221, %v4293
  %v4480 = vmul.f32 %v4222, %v4292
  %v4481 = vmul.f32 %v4223, %v4293
  %v4482 = vmul.f32 %v4224, %v4292
  %v4483 = vmul.f32 %v4225, %v4293
  %v4484 = vmul.f32 %v4226, %v4292
  %v4485 = vmul.f32 %v4227, %v4293
  %v4486 = vmul.f32 %v4228, %v4292
  %v4487 = vmul.f32 %v4229, %v4293
  %v4488 = vmul.f32 %v4230, %v4292
  %v4489 = vmul.f32 %v4231, %v4293
  %v4490 = vmul.f32 %v4232, %v4292
  %v4491 = vmul.f32 %v4233, %v4293
  %v4492 = vmul.f32 %v4234, %v4292
  %v4493 = vmul.f32 %v4235, %v4293
  %v4494 = vmul.f32 %v4236, %v4292
  %v4495 = vmul.f32 %v4237, %v4293
  %v4496 = vmul.f32 %v4238, %v4292
  %v4497 = vmul.f32 %v4239, %v4293
  %v4498 = vmul.f32 %v4240, %v4292
  %v4499 = vmul.f32 %v4241, %v4293
  %v4500 = vmul.f32 %v4242, %v4292
  %v4501 = vmul.f32 %v4243, %v4293
  %v4502 = vmul.f32 %v4244, %v4292
  %v4503 = vmul.f32 %v4245, %v4293
  %v4504 = vmul.f32 %v4246, %v4292
  %v4505 = vmul.f32 %v4247, %v4293
  %v4506 = vmul.f32 %v4248, %v4292
  %v4507 = vmul.f32 %v4249, %v4293
  %v4508 = vmul.f32 %v4250, %v4292
  %v4509 = vmul.f32 %v4251, %v4293
  %v4510 = vmul.f32 %v4252, %v4292
  %v4511 = vmul.f32 %v4253, %v4293
  %v4512 = vmul.f32 %v4254, %v4292
  %v4513 = vmul.f32 %v4255, %v4293
  %v4514 = vmul.f32 %v4256, %v4292
  %v4515 = vmul.f32 %v4257, %v4293
  %v4516 = vmul.f32 %v4258, %v4292
  %v4517 = vmul.f32 %v4259, %v4293
  %v4518 = vmul.f32 %v4260, %v4292
  %v4519 = vmul.f32 %v4261, %v4293
  %v4520 = vmul.f32 %v4262, %v4292
  %v4521 = vmul.f32 %v4263, %v4293
  %v4522 = vmul.f32 %v4264, %v4292
  %v4523 = vmul.f32 %v4265, %v4293
  %v4524 = vmul.f32 %v4266, %v4292
  %v4525 = vmul.f32 %v4267, %v4293
  %v4526 = vmul.f32 %v4268, %v4292
  %v4527 = vmul.f32 %v4269, %v4293
  %v4528 = vmul.f32 %v4270, %v4292
  %v4529 = vmul.f32 %v4271, %v4293
  %v4530 = vmul.f32 %v4272, %v4292
  %v4531 = vmul.f32 %v4273, %v4293
  %v4532 = vmul.f32 %v4274, %v4292
  %v4533 = vmul.f32 %v4275, %v4293
  %v4534 = vmul.f32 %v4276, %v4292
  %v4535 = vmul.f32 %v4277, %v4293
  %v4536 = vmul.f32 %v4278, %v4292
  %v4537 = vmul.f32 %v4279, %v4293
  %v4538 = vmul.f32 %v4280, %v4292
  %v4539 = vmul.f32 %v4281, %v4293
  %v4540 = vmul.f32 %v4282, %v4292
  %v4541 = vmul.f32 %v4283, %v4293
  %v4542 = vmul.f32 %v4284, %v4292
  %v4543 = vmul.f32 %v4285, %v4293
  %v4544 = vmul.f32 %v4286, %v4292
  %v4545 = vmul.f32 %v4287, %v4293
  %v4546 = vmul.f32 %v4288, %v4292
  %v4547 = vmul.f32 %v4289, %v4293
  %v4548 = vmul.f32 %v4290, %v4292
  %v4549 = vmul.f32 %v4291, %v4293
  %4550 = vadd.xlane.f32.xlu0 %v4294
  %v4551 = vpop.xlane.xlu0 %4550
  %4552 = vadd.xlane.f32.xlu0 %v4295
  %v4553 = vpop.xlane.xlu0 %4552
  %4554 = vadd.xlane.f32.xlu0 %v4296
  %v4555 = vpop.xlane.xlu0 %4554
  %4556 = vadd.xlane.f32.xlu0 %v4297
  %v4557 = vpop.xlane.xlu0 %4556
  %4558 = vadd.xlane.f32.xlu0 %v4298
  %v4559 = vpop.xlane.xlu0 %4558
  %4560 = vadd.xlane.f32.xlu0 %v4299
  %v4561 = vpop.xlane.xlu0 %4560
  %4562 = vadd.xlane.f32.xlu0 %v4300
  %v4563 = vpop.xlane.xlu0 %4562
  %4564 = vadd.xlane.f32.xlu0 %v4301
  %v4565 = vpop.xlane.xlu0 %4564
  %4566 = vadd.xlane.f32.xlu0 %v4302
  %v4567 = vpop.xlane.xlu0 %4566
  %4568 = vadd.xlane.f32.xlu0 %v4303
  %v4569 = vpop.xlane.xlu0 %4568
  %4570 = vadd.xlane.f32.xlu0 %v4304
  %v4571 = vpop.xlane.xlu0 %4570
  %4572 = vadd.xlane.f32.xlu0 %v4305
  %v4573 = vpop.xlane.xlu0 %4572
  %4574 = vadd.xlane.f32.xlu0 %v4306
  %v4575 = vpop.xlane.xlu0 %4574
  %4576 = vadd.xlane.f32.xlu0 %v4307
  %v4577 = vpop.xlane.xlu0 %4576
  %4578 = vadd.xlane.f32.xlu0 %v4308
  %v4579 = vpop.xlane.xlu0 %4578
  %4580 = vadd.xlane.f32.xlu0 %v4309
  %v4581 = vpop.xlane.xlu0 %4580
  %4582 = vadd.xlane.f32.xlu0 %v4310
  %v4583 = vpop.xlane.xlu0 %4582
  %4584 = vadd.xlane.f32.xlu0 %v4311
  %v4585 = vpop.xlane.xlu0 %4584
  %4586 = vadd.xlane.f32.xlu0 %v4312
  %v4587 = vpop.xlane.xlu0 %4586
  %4588 = vadd.xlane.f32.xlu0 %v4313
  %v4589 = vpop.xlane.xlu0 %4588
  %4590 = vadd.xlane.f32.xlu0 %v4314
  %v4591 = vpop.xlane.xlu0 %4590
  %4592 = vadd.xlane.f32.xlu0 %v4315
  %v4593 = vpop.xlane.xlu0 %4592
  %4594 = vadd.xlane.f32.xlu0 %v4316
  %v4595 = vpop.xlane.xlu0 %4594
  %4596 = vadd.xlane.f32.xlu0 %v4317
  %v4597 = vpop.xlane.xlu0 %4596
  %4598 = vadd.xlane.f32.xlu0 %v4318
  %v4599 = vpop.xlane.xlu0 %4598
  %4600 = vadd.xlane.f32.xlu0 %v4319
  %v4601 = vpop.xlane.xlu0 %4600
  %4602 = vadd.xlane.f32.xlu0 %v4320
  %v4603 = vpop.xlane.xlu0 %4602
  %4604 = vadd.xlane.f32.xlu0 %v4321
  %v4605 = vpop.xlane.xlu0 %4604
  %4606 = vadd.xlane.f32.xlu0 %v4322
  %v4607 = vpop.xlane.xlu0 %4606
  %4608 = vadd.xlane.f32.xlu0 %v4323
  %v4609 = vpop.xlane.xlu0 %4608
  %4610 = vadd.xlane.f32.xlu0 %v4324
  %v4611 = vpop.xlane.xlu0 %4610
  %4612 = vadd.xlane.f32.xlu0 %v4325
  %v4613 = vpop.xlane.xlu0 %4612
  %4614 = vadd.xlane.f32.xlu0 %v4326
  %v4615 = vpop.xlane.xlu0 %4614
  %4616 = vadd.xlane.f32.xlu0 %v4327
  %v4617 = vpop.xlane.xlu0 %4616
  %4618 = vadd.xlane.f32.xlu0 %v4328
  %v4619 = vpop.xlane.xlu0 %4618
  %4620 = vadd.xlane.f32.xlu0 %v4329
  %v4621 = vpop.xlane.xlu0 %4620
  %4622 = vadd.xlane.f32.xlu0 %v4330
  %v4623 = vpop.xlane.xlu0 %4622
  %4624 = vadd.xlane.f32.xlu0 %v4331
  %v4625 = vpop.xlane.xlu0 %4624
  %4626 = vadd.xlane.f32.xlu0 %v4332
  %v4627 = vpop.xlane.xlu0 %4626
  %4628 = vadd.xlane.f32.xlu0 %v4333
  %v4629 = vpop.xlane.xlu0 %4628
  %4630 = vadd.xlane.f32.xlu0 %v4334
  %v4631 = vpop.xlane.xlu0 %4630
  %4632 = vadd.xlane.f32.xlu0 %v4335
  %v4633 = vpop.xlane.xlu0 %4632
  %4634 = vadd.xlane.f32.xlu0 %v4336
  %v4635 = vpop.xlane.xlu0 %4634
  %4636 = vadd.xlane.f32.xlu0 %v4337
  %v4637 = vpop.xlane.xlu0 %4636
  %4638 = vadd.xlane.f32.xlu0 %v4338
  %v4639 = vpop.xlane.xlu0 %4638
  %4640 = vadd.xlane.f32.xlu0 %v4339
  %v4641 = vpop.xlane.xlu0 %4640
  %4642 = vadd.xlane.f32.xlu0 %v4340
  %v4643 = vpop.xlane.xlu0 %4642
  %4644 = vadd.xlane.f32.xlu0 %v4341
  %v4645 = vpop.xlane.xlu0 %4644
  %4646 = vadd.xlane.f32.xlu0 %v4342
  %v4647 = vpop.xlane.xlu0 %4646
  %4648 = vadd.xlane.f32.xlu0 %v4343
  %v4649 = vpop.xlane.xlu0 %4648
  %4650 = vadd.xlane.f32.xlu0 %v4344
  %v4651 = vpop.xlane.xlu0 %4650
  %4652 = vadd.xlane.f32.xlu0 %v4345
  %v4653 = vpop.xlane.xlu0 %4652
  %4654 = vadd.xlane.f32.xlu0 %v4346
  %v4655 = vpop.xlane.xlu0 %4654
  %4656 = vadd.xlane.f32.xlu0 %v4347
  %v4657 = vpop.xlane.xlu0 %4656
  %4658 = vadd.xlane.f32.xlu0 %v4348
  %v4659 = vpop.xlane.xlu0 %4658
  %4660 = vadd.xlane.f32.xlu0 %v4349
  %v4661 = vpop.xlane.xlu0 %4660
  %4662 = vadd.xlane.f32.xlu0 %v4350
  %v4663 = vpop.xlane.xlu0 %4662
  %4664 = vadd.xlane.f32.xlu0 %v4351
  %v4665 = vpop.xlane.xlu0 %4664
  %4666 = vadd.xlane.f32.xlu0 %v4352
  %v4667 = vpop.xlane.xlu0 %4666
  %4668 = vadd.xlane.f32.xlu0 %v4353
  %v4669 = vpop.xlane.xlu0 %4668
  %4670 = vadd.xlane.f32.xlu0 %v4354
  %v4671 = vpop.xlane.xlu0 %4670
  %4672 = vadd.xlane.f32.xlu0 %v4355
  %v4673 = vpop.xlane.xlu0 %4672
  %4674 = vadd.xlane.f32.xlu0 %v4356
  %v4675 = vpop.xlane.xlu0 %4674
  %4676 = vadd.xlane.f32.xlu0 %v4357
  %v4677 = vpop.xlane.xlu0 %4676
  %4678 = vadd.xlane.f32.xlu0 %v4358
  %v4679 = vpop.xlane.xlu0 %4678
  %4680 = vadd.xlane.f32.xlu0 %v4359
  %v4681 = vpop.xlane.xlu0 %4680
  %4682 = vadd.xlane.f32.xlu0 %v4360
  %v4683 = vpop.xlane.xlu0 %4682
  %4684 = vadd.xlane.f32.xlu0 %v4361
  %v4685 = vpop.xlane.xlu0 %4684
  %4686 = vadd.xlane.f32.xlu0 %v4362
  %v4687 = vpop.xlane.xlu0 %4686
  %4688 = vadd.xlane.f32.xlu0 %v4363
  %v4689 = vpop.xlane.xlu0 %4688
  %4690 = vadd.xlane.f32.xlu0 %v4364
  %v4691 = vpop.xlane.xlu0 %4690
  %4692 = vadd.xlane.f32.xlu0 %v4365
  %v4693 = vpop.xlane.xlu0 %4692
  %4694 = vadd.xlane.f32.xlu0 %v4366
  %v4695 = vpop.xlane.xlu0 %4694
  %4696 = vadd.xlane.f32.xlu0 %v4367
  %v4697 = vpop.xlane.xlu0 %4696
  %4698 = vadd.xlane.f32.xlu0 %v4368
  %v4699 = vpop.xlane.xlu0 %4698
  %4700 = vadd.xlane.f32.xlu0 %v4369
  %v4701 = vpop.xlane.xlu0 %4700
  %4702 = vadd.xlane.f32.xlu0 %v4370
  %v4703 = vpop.xlane.xlu0 %4702
  %4704 = vadd.xlane.f32.xlu0 %v4371
  %v4705 = vpop.xlane.xlu0 %4704
  %4706 = vadd.xlane.f32.xlu0 %v4372
  %v4707 = vpop.xlane.xlu0 %4706
  %4708 = vadd.xlane.f32.xlu0 %v4373
  %v4709 = vpop.xlane.xlu0 %4708
  %4710 = vadd.xlane.f32.xlu0 %v4374
  %v4711 = vpop.xlane.xlu0 %4710
  %4712 = vadd.xlane.f32.xlu0 %v4375
  %v4713 = vpop.xlane.xlu0 %4712
  %4714 = vadd.xlane.f32.xlu0 %v4376
  %v4715 = vpop.xlane.xlu0 %4714
  %4716 = vadd.xlane.f32.xlu0 %v4377
  %v4717 = vpop.xlane.xlu0 %4716
  %4718 = vadd.xlane.f32.xlu0 %v4378
  %v4719 = vpop.xlane.xlu0 %4718
  %4720 = vadd.xlane.f32.xlu0 %v4379
  %v4721 = vpop.xlane.xlu0 %4720
  %4722 = vadd.xlane.f32.xlu0 %v4380
  %v4723 = vpop.xlane.xlu0 %4722
  %4724 = vadd.xlane.f32.xlu0 %v4381
  %v4725 = vpop.xlane.xlu0 %4724
  %4726 = vadd.xlane.f32.xlu0 %v4382
  %v4727 = vpop.xlane.xlu0 %4726
  %4728 = vadd.xlane.f32.xlu0 %v4383
  %v4729 = vpop.xlane.xlu0 %4728
  %4730 = vadd.xlane.f32.xlu0 %v4384
  %v4731 = vpop.xlane.xlu0 %4730
  %4732 = vadd.xlane.f32.xlu0 %v4385
  %v4733 = vpop.xlane.xlu0 %4732
  %4734 = vadd.xlane.f32.xlu0 %v4386
  %v4735 = vpop.xlane.xlu0 %4734
  %4736 = vadd.xlane.f32.xlu0 %v4387
  %v4737 = vpop.xlane.xlu0 %4736
  %4738 = vadd.xlane.f32.xlu0 %v4388
  %v4739 = vpop.xlane.xlu0 %4738
  %4740 = vadd.xlane.f32.xlu0 %v4389
  %v4741 = vpop.xlane.xlu0 %4740
  %4742 = vadd.xlane.f32.xlu0 %v4390
  %v4743 = vpop.xlane.xlu0 %4742
  %4744 = vadd.xlane.f32.xlu0 %v4391
  %v4745 = vpop.xlane.xlu0 %4744
  %4746 = vadd.xlane.f32.xlu0 %v4392
  %v4747 = vpop.xlane.xlu0 %4746
  %4748 = vadd.xlane.f32.xlu0 %v4393
  %v4749 = vpop.xlane.xlu0 %4748
  %4750 = vadd.xlane.f32.xlu0 %v4394
  %v4751 = vpop.xlane.xlu0 %4750
  %4752 = vadd.xlane.f32.xlu0 %v4395
  %v4753 = vpop.xlane.xlu0 %4752
  %4754 = vadd.xlane.f32.xlu0 %v4396
  %v4755 = vpop.xlane.xlu0 %4754
  %4756 = vadd.xlane.f32.xlu0 %v4397
  %v4757 = vpop.xlane.xlu0 %4756
  %4758 = vadd.xlane.f32.xlu0 %v4398
  %v4759 = vpop.xlane.xlu0 %4758
  %4760 = vadd.xlane.f32.xlu0 %v4399
  %v4761 = vpop.xlane.xlu0 %4760
  %4762 = vadd.xlane.f32.xlu0 %v4400
  %v4763 = vpop.xlane.xlu0 %4762
  %4764 = vadd.xlane.f32.xlu0 %v4401
  %v4765 = vpop.xlane.xlu0 %4764
  %4766 = vadd.xlane.f32.xlu0 %v4402
  %v4767 = vpop.xlane.xlu0 %4766
  %4768 = vadd.xlane.f32.xlu0 %v4403
  %v4769 = vpop.xlane.xlu0 %4768
  %4770 = vadd.xlane.f32.xlu0 %v4404
  %v4771 = vpop.xlane.xlu0 %4770
  %4772 = vadd.xlane.f32.xlu0 %v4405
  %v4773 = vpop.xlane.xlu0 %4772
  %4774 = vadd.xlane.f32.xlu0 %v4406
  %v4775 = vpop.xlane.xlu0 %4774
  %4776 = vadd.xlane.f32.xlu0 %v4407
  %v4777 = vpop.xlane.xlu0 %4776
  %4778 = vadd.xlane.f32.xlu0 %v4408
  %v4779 = vpop.xlane.xlu0 %4778
  %4780 = vadd.xlane.f32.xlu0 %v4409
  %v4781 = vpop.xlane.xlu0 %4780
  %4782 = vadd.xlane.f32.xlu0 %v4410
  %v4783 = vpop.xlane.xlu0 %4782
  %4784 = vadd.xlane.f32.xlu0 %v4411
  %v4785 = vpop.xlane.xlu0 %4784
  %4786 = vadd.xlane.f32.xlu0 %v4412
  %v4787 = vpop.xlane.xlu0 %4786
  %4788 = vadd.xlane.f32.xlu0 %v4413
  %v4789 = vpop.xlane.xlu0 %4788
  %4790 = vadd.xlane.f32.xlu0 %v4414
  %v4791 = vpop.xlane.xlu0 %4790
  %4792 = vadd.xlane.f32.xlu0 %v4415
  %v4793 = vpop.xlane.xlu0 %4792
  %4794 = vadd.xlane.f32.xlu0 %v4416
  %v4795 = vpop.xlane.xlu0 %4794
  %4796 = vadd.xlane.f32.xlu0 %v4417
  %v4797 = vpop.xlane.xlu0 %4796
  %4798 = vadd.xlane.f32.xlu0 %v4418
  %v4799 = vpop.xlane.xlu0 %4798
  %4800 = vadd.xlane.f32.xlu0 %v4419
  %v4801 = vpop.xlane.xlu0 %4800
  %4802 = vadd.xlane.f32.xlu0 %v4420
  %v4803 = vpop.xlane.xlu0 %4802
  %4804 = vadd.xlane.f32.xlu0 %v4421
  %v4805 = vpop.xlane.xlu0 %4804
  %4806 = vadd.xlane.f32.xlu0 %v4422
  %v4807 = vpop.xlane.xlu0 %4806
  %4808 = vadd.xlane.f32.xlu0 %v4423
  %v4809 = vpop.xlane.xlu0 %4808
  %4810 = vadd.xlane.f32.xlu0 %v4424
  %v4811 = vpop.xlane.xlu0 %4810
  %4812 = vadd.xlane.f32.xlu0 %v4425
  %v4813 = vpop.xlane.xlu0 %4812
  %4814 = vadd.xlane.f32.xlu0 %v4426
  %v4815 = vpop.xlane.xlu0 %4814
  %4816 = vadd.xlane.f32.xlu0 %v4427
  %v4817 = vpop.xlane.xlu0 %4816
  %4818 = vadd.xlane.f32.xlu0 %v4428
  %v4819 = vpop.xlane.xlu0 %4818
  %4820 = vadd.xlane.f32.xlu0 %v4429
  %v4821 = vpop.xlane.xlu0 %4820
  %4822 = vadd.xlane.f32.xlu0 %v4430
  %v4823 = vpop.xlane.xlu0 %4822
  %4824 = vadd.xlane.f32.xlu0 %v4431
  %v4825 = vpop.xlane.xlu0 %4824
  %4826 = vadd.xlane.f32.xlu0 %v4432
  %v4827 = vpop.xlane.xlu0 %4826
  %4828 = vadd.xlane.f32.xlu0 %v4433
  %v4829 = vpop.xlane.xlu0 %4828
  %4830 = vadd.xlane.f32.xlu0 %v4434
  %v4831 = vpop.xlane.xlu0 %4830
  %4832 = vadd.xlane.f32.xlu0 %v4435
  %v4833 = vpop.xlane.xlu0 %4832
  %4834 = vadd.xlane.f32.xlu0 %v4436
  %v4835 = vpop.xlane.xlu0 %4834
  %4836 = vadd.xlane.f32.xlu0 %v4437
  %v4837 = vpop.xlane.xlu0 %4836
  %4838 = vadd.xlane.f32.xlu0 %v4438
  %v4839 = vpop.xlane.xlu0 %4838
  %4840 = vadd.xlane.f32.xlu0 %v4439
  %v4841 = vpop.xlane.xlu0 %4840
  %4842 = vadd.xlane.f32.xlu0 %v4440
  %v4843 = vpop.xlane.xlu0 %4842
  %4844 = vadd.xlane.f32.xlu0 %v4441
  %v4845 = vpop.xlane.xlu0 %4844
  %4846 = vadd.xlane.f32.xlu0 %v4442
  %v4847 = vpop.xlane.xlu0 %4846
  %4848 = vadd.xlane.f32.xlu0 %v4443
  %v4849 = vpop.xlane.xlu0 %4848
  %4850 = vadd.xlane.f32.xlu0 %v4444
  %v4851 = vpop.xlane.xlu0 %4850
  %4852 = vadd.xlane.f32.xlu0 %v4445
  %v4853 = vpop.xlane.xlu0 %4852
  %4854 = vadd.xlane.f32.xlu0 %v4446
  %v4855 = vpop.xlane.xlu0 %4854
  %4856 = vadd.xlane.f32.xlu0 %v4447
  %v4857 = vpop.xlane.xlu0 %4856
  %4858 = vadd.xlane.f32.xlu0 %v4448
  %v4859 = vpop.xlane.xlu0 %4858
  %4860 = vadd.xlane.f32.xlu0 %v4449
  %v4861 = vpop.xlane.xlu0 %4860
  %4862 = vadd.xlane.f32.xlu0 %v4450
  %v4863 = vpop.xlane.xlu0 %4862
  %4864 = vadd.xlane.f32.xlu0 %v4451
  %v4865 = vpop.xlane.xlu0 %4864
  %4866 = vadd.xlane.f32.xlu0 %v4452
  %v4867 = vpop.xlane.xlu0 %4866
  %4868 = vadd.xlane.f32.xlu0 %v4453
  %v4869 = vpop.xlane.xlu0 %4868
  %4870 = vadd.xlane.f32.xlu0 %v4454
  %v4871 = vpop.xlane.xlu0 %4870
  %4872 = vadd.xlane.f32.xlu0 %v4455
  %v4873 = vpop.xlane.xlu0 %4872
  %4874 = vadd.xlane.f32.xlu0 %v4456
  %v4875 = vpop.xlane.xlu0 %4874
  %4876 = vadd.xlane.f32.xlu0 %v4457
  %v4877 = vpop.xlane.xlu0 %4876
  %4878 = vadd.xlane.f32.xlu0 %v4458
  %v4879 = vpop.xlane.xlu0 %4878
  %4880 = vadd.xlane.f32.xlu0 %v4459
  %v4881 = vpop.xlane.xlu0 %4880
  %4882 = vadd.xlane.f32.xlu0 %v4460
  %v4883 = vpop.xlane.xlu0 %4882
  %4884 = vadd.xlane.f32.xlu0 %v4461
  %v4885 = vpop.xlane.xlu0 %4884
  %4886 = vadd.xlane.f32.xlu0 %v4462
  %v4887 = vpop.xlane.xlu0 %4886
  %4888 = vadd.xlane.f32.xlu0 %v4463
  %v4889 = vpop.xlane.xlu0 %4888
  %4890 = vadd.xlane.f32.xlu0 %v4464
  %v4891 = vpop.xlane.xlu0 %4890
  %4892 = vadd.xlane.f32.xlu0 %v4465
  %v4893 = vpop.xlane.xlu0 %4892
  %4894 = vadd.xlane.f32.xlu0 %v4466
  %v4895 = vpop.xlane.xlu0 %4894
  %4896 = vadd.xlane.f32.xlu0 %v4467
  %v4897 = vpop.xlane.xlu0 %4896
  %4898 = vadd.xlane.f32.xlu0 %v4468
  %v4899 = vpop.xlane.xlu0 %4898
  %4900 = vadd.xlane.f32.xlu0 %v4469
  %v4901 = vpop.xlane.xlu0 %4900
  %4902 = vadd.xlane.f32.xlu0 %v4470
  %v4903 = vpop.xlane.xlu0 %4902
  %4904 = vadd.xlane.f32.xlu0 %v4471
  %v4905 = vpop.xlane.xlu0 %4904
  %4906 = vadd.xlane.f32.xlu0 %v4472
  %v4907 = vpop.xlane.xlu0 %4906
  %4908 = vadd.xlane.f32.xlu0 %v4473
  %v4909 = vpop.xlane.xlu0 %4908
  %4910 = vadd.xlane.f32.xlu0 %v4474
  %v4911 = vpop.xlane.xlu0 %4910
  %4912 = vadd.xlane.f32.xlu0 %v4475
  %v4913 = vpop.xlane.xlu0 %4912
  %4914 = vadd.xlane.f32.xlu0 %v4476
  %v4915 = vpop.xlane.xlu0 %4914
  %4916 = vadd.xlane.f32.xlu0 %v4477
  %v4917 = vpop.xlane.xlu0 %4916
  %4918 = vadd.xlane.f32.xlu0 %v4478
  %v4919 = vpop.xlane.xlu0 %4918
  %4920 = vadd.xlane.f32.xlu0 %v4479
  %v4921 = vpop.xlane.xlu0 %4920
  %4922 = vadd.xlane.f32.xlu0 %v4480
  %v4923 = vpop.xlane.xlu0 %4922
  %4924 = vadd.xlane.f32.xlu0 %v4481
  %v4925 = vpop.xlane.xlu0 %4924
  %4926 = vadd.xlane.f32.xlu0 %v4482
  %v4927 = vpop.xlane.xlu0 %4926
  %4928 = vadd.xlane.f32.xlu0 %v4483
  %v4929 = vpop.xlane.xlu0 %4928
  %4930 = vadd.xlane.f32.xlu0 %v4484
  %v4931 = vpop.xlane.xlu0 %4930
  %4932 = vadd.xlane.f32.xlu0 %v4485
  %v4933 = vpop.xlane.xlu0 %4932
  %4934 = vadd.xlane.f32.xlu0 %v4486
  %v4935 = vpop.xlane.xlu0 %4934
  %4936 = vadd.xlane.f32.xlu0 %v4487
  %v4937 = vpop.xlane.xlu0 %4936
  %4938 = vadd.xlane.f32.xlu0 %v4488
  %v4939 = vpop.xlane.xlu0 %4938
  %4940 = vadd.xlane.f32.xlu0 %v4489
  %v4941 = vpop.xlane.xlu0 %4940
  %4942 = vadd.xlane.f32.xlu0 %v4490
  %v4943 = vpop.xlane.xlu0 %4942
  %4944 = vadd.xlane.f32.xlu0 %v4491
  %v4945 = vpop.xlane.xlu0 %4944
  %4946 = vadd.xlane.f32.xlu0 %v4492
  %v4947 = vpop.xlane.xlu0 %4946
  %4948 = vadd.xlane.f32.xlu0 %v4493
  %v4949 = vpop.xlane.xlu0 %4948
  %4950 = vadd.xlane.f32.xlu0 %v4494
  %v4951 = vpop.xlane.xlu0 %4950
  %4952 = vadd.xlane.f32.xlu0 %v4495
  %v4953 = vpop.xlane.xlu0 %4952
  %4954 = vadd.xlane.f32.xlu0 %v4496
  %v4955 = vpop.xlane.xlu0 %4954
  %4956 = vadd.xlane.f32.xlu0 %v4497
  %v4957 = vpop.xlane.xlu0 %4956
  %4958 = vadd.xlane.f32.xlu0 %v4498
  %v4959 = vpop.xlane.xlu0 %4958
  %4960 = vadd.xlane.f32.xlu0 %v4499
  %v4961 = vpop.xlane.xlu0 %4960
  %4962 = vadd.xlane.f32.xlu0 %v4500
  %v4963 = vpop.xlane.xlu0 %4962
  %4964 = vadd.xlane.f32.xlu0 %v4501
  %v4965 = vpop.xlane.xlu0 %4964
  %4966 = vadd.xlane.f32.xlu0 %v4502
  %v4967 = vpop.xlane.xlu0 %4966
  %4968 = vadd.xlane.f32.xlu0 %v4503
  %v4969 = vpop.xlane.xlu0 %4968
  %4970 = vadd.xlane.f32.xlu0 %v4504
  %v4971 = vpop.xlane.xlu0 %4970
  %4972 = vadd.xlane.f32.xlu0 %v4505
  %v4973 = vpop.xlane.xlu0 %4972
  %4974 = vadd.xlane.f32.xlu0 %v4506
  %v4975 = vpop.xlane.xlu0 %4974
  %4976 = vadd.xlane.f32.xlu0 %v4507
  %v4977 = vpop.xlane.xlu0 %4976
  %4978 = vadd.xlane.f32.xlu0 %v4508
  %v4979 = vpop.xlane.xlu0 %4978
  %4980 = vadd.xlane.f32.xlu0 %v4509
  %v4981 = vpop.xlane.xlu0 %4980
  %4982 = vadd.xlane.f32.xlu0 %v4510
  %v4983 = vpop.xlane.xlu0 %4982
  %4984 = vadd.xlane.f32.xlu0 %v4511
  %v4985 = vpop.xlane.xlu0 %4984
  %4986 = vadd.xlane.f32.xlu0 %v4512
  %v4987 = vpop.xlane.xlu0 %4986
  %4988 = vadd.xlane.f32.xlu0 %v4513
  %v4989 = vpop.xlane.xlu0 %4988
  %4990 = vadd.xlane.f32.xlu0 %v4514
  %v4991 = vpop.xlane.xlu0 %4990
  %4992 = vadd.xlane.f32.xlu0 %v4515
  %v4993 = vpop.xlane.xlu0 %4992
  %4994 = vadd.xlane.f32.xlu0 %v4516
  %v4995 = vpop.xlane.xlu0 %4994
  %4996 = vadd.xlane.f32.xlu0 %v4517
  %v4997 = vpop.xlane.xlu0 %4996
  %4998 = vadd.xlane.f32.xlu0 %v4518
  %v4999 = vpop.xlane.xlu0 %4998
  %5000 = vadd.xlane.f32.xlu0 %v4519
  %v5001 = vpop.xlane.xlu0 %5000
  %5002 = vadd.xlane.f32.xlu0 %v4520
  %v5003 = vpop.xlane.xlu0 %5002
  %5004 = vadd.xlane.f32.xlu0 %v4521
  %v5005 = vpop.xlane.xlu0 %5004
  %5006 = vadd.xlane.f32.xlu0 %v4522
  %v5007 = vpop.xlane.xlu0 %5006
  %5008 = vadd.xlane.f32.xlu0 %v4523
  %v5009 = vpop.xlane.xlu0 %5008
  %5010 = vadd.xlane.f32.xlu0 %v4524
  %v5011 = vpop.xlane.xlu0 %5010
  %5012 = vadd.xlane.f32.xlu0 %v4525
  %v5013 = vpop.xlane.xlu0 %5012
  %5014 = vadd.xlane.f32.xlu0 %v4526
  %v5015 = vpop.xlane.xlu0 %5014
  %5016 = vadd.xlane.f32.xlu0 %v4527
  %v5017 = vpop.xlane.xlu0 %5016
  %5018 = vadd.xlane.f32.xlu0 %v4528
  %v5019 = vpop.xlane.xlu0 %5018
  %5020 = vadd.xlane.f32.xlu0 %v4529
  %v5021 = vpop.xlane.xlu0 %5020
  %5022 = vadd.xlane.f32.xlu0 %v4530
  %v5023 = vpop.xlane.xlu0 %5022
  %5024 = vadd.xlane.f32.xlu0 %v4531
  %v5025 = vpop.xlane.xlu0 %5024
  %5026 = vadd.xlane.f32.xlu0 %v4532
  %v5027 = vpop.xlane.xlu0 %5026
  %5028 = vadd.xlane.f32.xlu0 %v4533
  %v5029 = vpop.xlane.xlu0 %5028
  %5030 = vadd.xlane.f32.xlu0 %v4534
  %v5031 = vpop.xlane.xlu0 %5030
  %5032 = vadd.xlane.f32.xlu0 %v4535
  %v5033 = vpop.xlane.xlu0 %5032
  %5034 = vadd.xlane.f32.xlu0 %v4536
  %v5035 = vpop.xlane.xlu0 %5034
  %5036 = vadd.xlane.f32.xlu0 %v4537
  %v5037 = vpop.xlane.xlu0 %5036
  %5038 = vadd.xlane.f32.xlu0 %v4538
  %v5039 = vpop.xlane.xlu0 %5038
  %5040 = vadd.xlane.f32.xlu0 %v4539
  %v5041 = vpop.xlane.xlu0 %5040
  %5042 = vadd.xlane.f32.xlu0 %v4540
  %v5043 = vpop.xlane.xlu0 %5042
  %5044 = vadd.xlane.f32.xlu0 %v4541
  %v5045 = vpop.xlane.xlu0 %5044
  %5046 = vadd.xlane.f32.xlu0 %v4542
  %v5047 = vpop.xlane.xlu0 %5046
  %5048 = vadd.xlane.f32.xlu0 %v4543
  %v5049 = vpop.xlane.xlu0 %5048
  %5050 = vadd.xlane.f32.xlu0 %v4544
  %v5051 = vpop.xlane.xlu0 %5050
  %5052 = vadd.xlane.f32.xlu0 %v4545
  %v5053 = vpop.xlane.xlu0 %5052
  %5054 = vadd.xlane.f32.xlu0 %v4546
  %v5055 = vpop.xlane.xlu0 %5054
  %5056 = vadd.xlane.f32.xlu0 %v4547
  %v5057 = vpop.xlane.xlu0 %5056
  %5058 = vadd.xlane.f32.xlu0 %v4548
  %v5059 = vpop.xlane.xlu0 %5058
  %5060 = vadd.xlane.f32.xlu0 %v4549
  %v5061 = vpop.xlane.xlu0 %5060
  %v5318 = vlaneseq
  %v5319 = vand.u32 %v5318, 127
  %v5320 = vlaneseq
  %v5321 = vshrl.u32 %v5320, 7
  %v5322 = vsub.s32 %v5319, %v5321
  %v5323 = vrot.slane %v4551, %v5322
  %v5324 = vadd.s32 %v5319, 4294967288
  %v5325 = vlaneseq
  %v5326 = vshrl.u32 %v5325, 7
  %v5327 = vsub.s32 %v5324, %v5326
  %v5328 = vrot.slane %v4553, %v5327
  %vm5329 = vcmask 130112
  %v5330 = vsel %vm5329, %v5328, %v5323
  %v5331 = vlaneseq
  %v5332 = vshrl.u32 %v5331, 7
  %v5333 = vsub.s32 %v5319, %v5332
  %v5334 = vrot.slane %v4555, %v5333
  %v5335 = vlaneseq
  %v5336 = vshrl.u32 %v5335, 7
  %v5337 = vsub.s32 %v5324, %v5336
  %v5338 = vrot.slane %v4557, %v5337
  %v5339 = vsel %vm5329, %v5338, %v5334
  %v5340 = vlaneseq
  %v5341 = vshrl.u32 %v5340, 7
  %v5342 = vsub.s32 %v5319, %v5341
  %v5343 = vrot.slane %v4559, %v5342
  %v5344 = vlaneseq
  %v5345 = vshrl.u32 %v5344, 7
  %v5346 = vsub.s32 %v5324, %v5345
  %v5347 = vrot.slane %v4561, %v5346
  %v5348 = vsel %vm5329, %v5347, %v5343
  %v5349 = vlaneseq
  %v5350 = vshrl.u32 %v5349, 7
  %v5351 = vsub.s32 %v5319, %v5350
  %v5352 = vrot.slane %v4563, %v5351
  %v5353 = vlaneseq
  %v5354 = vshrl.u32 %v5353, 7
  %v5355 = vsub.s32 %v5324, %v5354
  %v5356 = vrot.slane %v4565, %v5355
  %v5357 = vsel %vm5329, %v5356, %v5352
  %v5358 = vlaneseq
  %v5359 = vshrl.u32 %v5358, 7
  %v5360 = vsub.s32 %v5319, %v5359
  %v5361 = vrot.slane %v4567, %v5360
  %v5362 = vlaneseq
  %v5363 = vshrl.u32 %v5362, 7
  %v5364 = vsub.s32 %v5324, %v5363
  %v5365 = vrot.slane %v4569, %v5364
  %v5366 = vsel %vm5329, %v5365, %v5361
  %v5367 = vlaneseq
  %v5368 = vshrl.u32 %v5367, 7
  %v5369 = vsub.s32 %v5319, %v5368
  %v5370 = vrot.slane %v4571, %v5369
  %v5371 = vlaneseq
  %v5372 = vshrl.u32 %v5371, 7
  %v5373 = vsub.s32 %v5324, %v5372
  %v5374 = vrot.slane %v4573, %v5373
  %v5375 = vsel %vm5329, %v5374, %v5370
  %v5376 = vlaneseq
  %v5377 = vshrl.u32 %v5376, 7
  %v5378 = vsub.s32 %v5319, %v5377
  %v5379 = vrot.slane %v4575, %v5378
  %v5380 = vlaneseq
  %v5381 = vshrl.u32 %v5380, 7
  %v5382 = vsub.s32 %v5324, %v5381
  %v5383 = vrot.slane %v4577, %v5382
  %v5384 = vsel %vm5329, %v5383, %v5379
  %v5385 = vlaneseq
  %v5386 = vshrl.u32 %v5385, 7
  %v5387 = vsub.s32 %v5319, %v5386
  %v5388 = vrot.slane %v4579, %v5387
  %v5389 = vlaneseq
  %v5390 = vshrl.u32 %v5389, 7
  %v5391 = vsub.s32 %v5324, %v5390
  %v5392 = vrot.slane %v4581, %v5391
  %v5393 = vsel %vm5329, %v5392, %v5388
  %v5394 = vlaneseq
  %v5395 = vshrl.u32 %v5394, 7
  %v5396 = vsub.s32 %v5319, %v5395
  %v5397 = vrot.slane %v4583, %v5396
  %v5398 = vlaneseq
  %v5399 = vshrl.u32 %v5398, 7
  %v5400 = vsub.s32 %v5324, %v5399
  %v5401 = vrot.slane %v4585, %v5400
  %v5402 = vsel %vm5329, %v5401, %v5397
  %v5403 = vlaneseq
  %v5404 = vshrl.u32 %v5403, 7
  %v5405 = vsub.s32 %v5319, %v5404
  %v5406 = vrot.slane %v4587, %v5405
  %v5407 = vlaneseq
  %v5408 = vshrl.u32 %v5407, 7
  %v5409 = vsub.s32 %v5324, %v5408
  %v5410 = vrot.slane %v4589, %v5409
  %v5411 = vsel %vm5329, %v5410, %v5406
  %v5412 = vlaneseq
  %v5413 = vshrl.u32 %v5412, 7
  %v5414 = vsub.s32 %v5319, %v5413
  %v5415 = vrot.slane %v4591, %v5414
  %v5416 = vlaneseq
  %v5417 = vshrl.u32 %v5416, 7
  %v5418 = vsub.s32 %v5324, %v5417
  %v5419 = vrot.slane %v4593, %v5418
  %v5420 = vsel %vm5329, %v5419, %v5415
  %v5421 = vlaneseq
  %v5422 = vshrl.u32 %v5421, 7
  %v5423 = vsub.s32 %v5319, %v5422
  %v5424 = vrot.slane %v4595, %v5423
  %v5425 = vlaneseq
  %v5426 = vshrl.u32 %v5425, 7
  %v5427 = vsub.s32 %v5324, %v5426
  %v5428 = vrot.slane %v4597, %v5427
  %v5429 = vsel %vm5329, %v5428, %v5424
  %v5430 = vlaneseq
  %v5431 = vshrl.u32 %v5430, 7
  %v5432 = vsub.s32 %v5319, %v5431
  %v5433 = vrot.slane %v4599, %v5432
  %v5434 = vlaneseq
  %v5435 = vshrl.u32 %v5434, 7
  %v5436 = vsub.s32 %v5324, %v5435
  %v5437 = vrot.slane %v4601, %v5436
  %v5438 = vsel %vm5329, %v5437, %v5433
  %v5439 = vlaneseq
  %v5440 = vshrl.u32 %v5439, 7
  %v5441 = vsub.s32 %v5319, %v5440
  %v5442 = vrot.slane %v4603, %v5441
  %v5443 = vlaneseq
  %v5444 = vshrl.u32 %v5443, 7
  %v5445 = vsub.s32 %v5324, %v5444
  %v5446 = vrot.slane %v4605, %v5445
  %v5447 = vsel %vm5329, %v5446, %v5442
  %v5448 = vlaneseq
  %v5449 = vshrl.u32 %v5448, 7
  %v5450 = vsub.s32 %v5319, %v5449
  %v5451 = vrot.slane %v4607, %v5450
  %v5452 = vlaneseq
  %v5453 = vshrl.u32 %v5452, 7
  %v5454 = vsub.s32 %v5324, %v5453
  %v5455 = vrot.slane %v4609, %v5454
  %v5456 = vsel %vm5329, %v5455, %v5451
  %v5457 = vlaneseq
  %v5458 = vshrl.u32 %v5457, 7
  %v5459 = vsub.s32 %v5319, %v5458
  %v5460 = vrot.slane %v4611, %v5459
  %v5461 = vlaneseq
  %v5462 = vshrl.u32 %v5461, 7
  %v5463 = vsub.s32 %v5324, %v5462
  %v5464 = vrot.slane %v4613, %v5463
  %v5465 = vsel %vm5329, %v5464, %v5460
  %v5466 = vlaneseq
  %v5467 = vshrl.u32 %v5466, 7
  %v5468 = vsub.s32 %v5319, %v5467
  %v5469 = vrot.slane %v4615, %v5468
  %v5470 = vlaneseq
  %v5471 = vshrl.u32 %v5470, 7
  %v5472 = vsub.s32 %v5324, %v5471
  %v5473 = vrot.slane %v4617, %v5472
  %v5474 = vsel %vm5329, %v5473, %v5469
  %v5475 = vlaneseq
  %v5476 = vshrl.u32 %v5475, 7
  %v5477 = vsub.s32 %v5319, %v5476
  %v5478 = vrot.slane %v4619, %v5477
  %v5479 = vlaneseq
  %v5480 = vshrl.u32 %v5479, 7
  %v5481 = vsub.s32 %v5324, %v5480
  %v5482 = vrot.slane %v4621, %v5481
  %v5483 = vsel %vm5329, %v5482, %v5478
  %v5484 = vlaneseq
  %v5485 = vshrl.u32 %v5484, 7
  %v5486 = vsub.s32 %v5319, %v5485
  %v5487 = vrot.slane %v4623, %v5486
  %v5488 = vlaneseq
  %v5489 = vshrl.u32 %v5488, 7
  %v5490 = vsub.s32 %v5324, %v5489
  %v5491 = vrot.slane %v4625, %v5490
  %v5492 = vsel %vm5329, %v5491, %v5487
  %v5493 = vlaneseq
  %v5494 = vshrl.u32 %v5493, 7
  %v5495 = vsub.s32 %v5319, %v5494
  %v5496 = vrot.slane %v4627, %v5495
  %v5497 = vlaneseq
  %v5498 = vshrl.u32 %v5497, 7
  %v5499 = vsub.s32 %v5324, %v5498
  %v5500 = vrot.slane %v4629, %v5499
  %v5501 = vsel %vm5329, %v5500, %v5496
  %v5502 = vlaneseq
  %v5503 = vshrl.u32 %v5502, 7
  %v5504 = vsub.s32 %v5319, %v5503
  %v5505 = vrot.slane %v4631, %v5504
  %v5506 = vlaneseq
  %v5507 = vshrl.u32 %v5506, 7
  %v5508 = vsub.s32 %v5324, %v5507
  %v5509 = vrot.slane %v4633, %v5508
  %v5510 = vsel %vm5329, %v5509, %v5505
  %v5511 = vlaneseq
  %v5512 = vshrl.u32 %v5511, 7
  %v5513 = vsub.s32 %v5319, %v5512
  %v5514 = vrot.slane %v4635, %v5513
  %v5515 = vlaneseq
  %v5516 = vshrl.u32 %v5515, 7
  %v5517 = vsub.s32 %v5324, %v5516
  %v5518 = vrot.slane %v4637, %v5517
  %v5519 = vsel %vm5329, %v5518, %v5514
  %v5520 = vlaneseq
  %v5521 = vshrl.u32 %v5520, 7
  %v5522 = vsub.s32 %v5319, %v5521
  %v5523 = vrot.slane %v4639, %v5522
  %v5524 = vlaneseq
  %v5525 = vshrl.u32 %v5524, 7
  %v5526 = vsub.s32 %v5324, %v5525
  %v5527 = vrot.slane %v4641, %v5526
  %v5528 = vsel %vm5329, %v5527, %v5523
  %v5529 = vlaneseq
  %v5530 = vshrl.u32 %v5529, 7
  %v5531 = vsub.s32 %v5319, %v5530
  %v5532 = vrot.slane %v4643, %v5531
  %v5533 = vlaneseq
  %v5534 = vshrl.u32 %v5533, 7
  %v5535 = vsub.s32 %v5324, %v5534
  %v5536 = vrot.slane %v4645, %v5535
  %v5537 = vsel %vm5329, %v5536, %v5532
  %v5538 = vlaneseq
  %v5539 = vshrl.u32 %v5538, 7
  %v5540 = vsub.s32 %v5319, %v5539
  %v5541 = vrot.slane %v4647, %v5540
  %v5542 = vlaneseq
  %v5543 = vshrl.u32 %v5542, 7
  %v5544 = vsub.s32 %v5324, %v5543
  %v5545 = vrot.slane %v4649, %v5544
  %v5546 = vsel %vm5329, %v5545, %v5541
  %v5547 = vlaneseq
  %v5548 = vshrl.u32 %v5547, 7
  %v5549 = vsub.s32 %v5319, %v5548
  %v5550 = vrot.slane %v4651, %v5549
  %v5551 = vlaneseq
  %v5552 = vshrl.u32 %v5551, 7
  %v5553 = vsub.s32 %v5324, %v5552
  %v5554 = vrot.slane %v4653, %v5553
  %v5555 = vsel %vm5329, %v5554, %v5550
  %v5556 = vlaneseq
  %v5557 = vshrl.u32 %v5556, 7
  %v5558 = vsub.s32 %v5319, %v5557
  %v5559 = vrot.slane %v4655, %v5558
  %v5560 = vlaneseq
  %v5561 = vshrl.u32 %v5560, 7
  %v5562 = vsub.s32 %v5324, %v5561
  %v5563 = vrot.slane %v4657, %v5562
  %v5564 = vsel %vm5329, %v5563, %v5559
  %v5565 = vlaneseq
  %v5566 = vshrl.u32 %v5565, 7
  %v5567 = vsub.s32 %v5319, %v5566
  %v5568 = vrot.slane %v4659, %v5567
  %v5569 = vlaneseq
  %v5570 = vshrl.u32 %v5569, 7
  %v5571 = vsub.s32 %v5324, %v5570
  %v5572 = vrot.slane %v4661, %v5571
  %v5573 = vsel %vm5329, %v5572, %v5568
  %v5574 = vlaneseq
  %v5575 = vshrl.u32 %v5574, 7
  %v5576 = vsub.s32 %v5319, %v5575
  %v5577 = vrot.slane %v4663, %v5576
  %v5578 = vlaneseq
  %v5579 = vshrl.u32 %v5578, 7
  %v5580 = vsub.s32 %v5324, %v5579
  %v5581 = vrot.slane %v4665, %v5580
  %v5582 = vsel %vm5329, %v5581, %v5577
  %v5583 = vlaneseq
  %v5584 = vshrl.u32 %v5583, 7
  %v5585 = vsub.s32 %v5319, %v5584
  %v5586 = vrot.slane %v4667, %v5585
  %v5587 = vlaneseq
  %v5588 = vshrl.u32 %v5587, 7
  %v5589 = vsub.s32 %v5324, %v5588
  %v5590 = vrot.slane %v4669, %v5589
  %v5591 = vsel %vm5329, %v5590, %v5586
  %v5592 = vlaneseq
  %v5593 = vshrl.u32 %v5592, 7
  %v5594 = vsub.s32 %v5319, %v5593
  %v5595 = vrot.slane %v4671, %v5594
  %v5596 = vlaneseq
  %v5597 = vshrl.u32 %v5596, 7
  %v5598 = vsub.s32 %v5324, %v5597
  %v5599 = vrot.slane %v4673, %v5598
  %v5600 = vsel %vm5329, %v5599, %v5595
  %v5601 = vlaneseq
  %v5602 = vshrl.u32 %v5601, 7
  %v5603 = vsub.s32 %v5319, %v5602
  %v5604 = vrot.slane %v4675, %v5603
  %v5605 = vlaneseq
  %v5606 = vshrl.u32 %v5605, 7
  %v5607 = vsub.s32 %v5324, %v5606
  %v5608 = vrot.slane %v4677, %v5607
  %v5609 = vsel %vm5329, %v5608, %v5604
  %v5610 = vlaneseq
  %v5611 = vshrl.u32 %v5610, 7
  %v5612 = vsub.s32 %v5319, %v5611
  %v5613 = vrot.slane %v4679, %v5612
  %v5614 = vlaneseq
  %v5615 = vshrl.u32 %v5614, 7
  %v5616 = vsub.s32 %v5324, %v5615
  %v5617 = vrot.slane %v4681, %v5616
  %v5618 = vsel %vm5329, %v5617, %v5613
  %v5619 = vlaneseq
  %v5620 = vshrl.u32 %v5619, 7
  %v5621 = vsub.s32 %v5319, %v5620
  %v5622 = vrot.slane %v4683, %v5621
  %v5623 = vlaneseq
  %v5624 = vshrl.u32 %v5623, 7
  %v5625 = vsub.s32 %v5324, %v5624
  %v5626 = vrot.slane %v4685, %v5625
  %v5627 = vsel %vm5329, %v5626, %v5622
  %v5628 = vlaneseq
  %v5629 = vshrl.u32 %v5628, 7
  %v5630 = vsub.s32 %v5319, %v5629
  %v5631 = vrot.slane %v4687, %v5630
  %v5632 = vlaneseq
  %v5633 = vshrl.u32 %v5632, 7
  %v5634 = vsub.s32 %v5324, %v5633
  %v5635 = vrot.slane %v4689, %v5634
  %v5636 = vsel %vm5329, %v5635, %v5631
  %v5637 = vlaneseq
  %v5638 = vshrl.u32 %v5637, 7
  %v5639 = vsub.s32 %v5319, %v5638
  %v5640 = vrot.slane %v4691, %v5639
  %v5641 = vlaneseq
  %v5642 = vshrl.u32 %v5641, 7
  %v5643 = vsub.s32 %v5324, %v5642
  %v5644 = vrot.slane %v4693, %v5643
  %v5645 = vsel %vm5329, %v5644, %v5640
  %v5646 = vlaneseq
  %v5647 = vshrl.u32 %v5646, 7
  %v5648 = vsub.s32 %v5319, %v5647
  %v5649 = vrot.slane %v4695, %v5648
  %v5650 = vlaneseq
  %v5651 = vshrl.u32 %v5650, 7
  %v5652 = vsub.s32 %v5324, %v5651
  %v5653 = vrot.slane %v4697, %v5652
  %v5654 = vsel %vm5329, %v5653, %v5649
  %v5655 = vlaneseq
  %v5656 = vshrl.u32 %v5655, 7
  %v5657 = vsub.s32 %v5319, %v5656
  %v5658 = vrot.slane %v4699, %v5657
  %v5659 = vlaneseq
  %v5660 = vshrl.u32 %v5659, 7
  %v5661 = vsub.s32 %v5324, %v5660
  %v5662 = vrot.slane %v4701, %v5661
  %v5663 = vsel %vm5329, %v5662, %v5658
  %v5664 = vlaneseq
  %v5665 = vshrl.u32 %v5664, 7
  %v5666 = vsub.s32 %v5319, %v5665
  %v5667 = vrot.slane %v4703, %v5666
  %v5668 = vlaneseq
  %v5669 = vshrl.u32 %v5668, 7
  %v5670 = vsub.s32 %v5324, %v5669
  %v5671 = vrot.slane %v4705, %v5670
  %v5672 = vsel %vm5329, %v5671, %v5667
  %v5673 = vlaneseq
  %v5674 = vshrl.u32 %v5673, 7
  %v5675 = vsub.s32 %v5319, %v5674
  %v5676 = vrot.slane %v4707, %v5675
  %v5677 = vlaneseq
  %v5678 = vshrl.u32 %v5677, 7
  %v5679 = vsub.s32 %v5324, %v5678
  %v5680 = vrot.slane %v4709, %v5679
  %v5681 = vsel %vm5329, %v5680, %v5676
  %v5682 = vlaneseq
  %v5683 = vshrl.u32 %v5682, 7
  %v5684 = vsub.s32 %v5319, %v5683
  %v5685 = vrot.slane %v4711, %v5684
  %v5686 = vlaneseq
  %v5687 = vshrl.u32 %v5686, 7
  %v5688 = vsub.s32 %v5324, %v5687
  %v5689 = vrot.slane %v4713, %v5688
  %v5690 = vsel %vm5329, %v5689, %v5685
  %v5691 = vlaneseq
  %v5692 = vshrl.u32 %v5691, 7
  %v5693 = vsub.s32 %v5319, %v5692
  %v5694 = vrot.slane %v4715, %v5693
  %v5695 = vlaneseq
  %v5696 = vshrl.u32 %v5695, 7
  %v5697 = vsub.s32 %v5324, %v5696
  %v5698 = vrot.slane %v4717, %v5697
  %v5699 = vsel %vm5329, %v5698, %v5694
  %v5700 = vlaneseq
  %v5701 = vshrl.u32 %v5700, 7
  %v5702 = vsub.s32 %v5319, %v5701
  %v5703 = vrot.slane %v4719, %v5702
  %v5704 = vlaneseq
  %v5705 = vshrl.u32 %v5704, 7
  %v5706 = vsub.s32 %v5324, %v5705
  %v5707 = vrot.slane %v4721, %v5706
  %v5708 = vsel %vm5329, %v5707, %v5703
  %v5709 = vlaneseq
  %v5710 = vshrl.u32 %v5709, 7
  %v5711 = vsub.s32 %v5319, %v5710
  %v5712 = vrot.slane %v4723, %v5711
  %v5713 = vlaneseq
  %v5714 = vshrl.u32 %v5713, 7
  %v5715 = vsub.s32 %v5324, %v5714
  %v5716 = vrot.slane %v4725, %v5715
  %v5717 = vsel %vm5329, %v5716, %v5712
  %v5718 = vlaneseq
  %v5719 = vshrl.u32 %v5718, 7
  %v5720 = vsub.s32 %v5319, %v5719
  %v5721 = vrot.slane %v4727, %v5720
  %v5722 = vlaneseq
  %v5723 = vshrl.u32 %v5722, 7
  %v5724 = vsub.s32 %v5324, %v5723
  %v5725 = vrot.slane %v4729, %v5724
  %v5726 = vsel %vm5329, %v5725, %v5721
  %v5727 = vlaneseq
  %v5728 = vshrl.u32 %v5727, 7
  %v5729 = vsub.s32 %v5319, %v5728
  %v5730 = vrot.slane %v4731, %v5729
  %v5731 = vlaneseq
  %v5732 = vshrl.u32 %v5731, 7
  %v5733 = vsub.s32 %v5324, %v5732
  %v5734 = vrot.slane %v4733, %v5733
  %v5735 = vsel %vm5329, %v5734, %v5730
  %v5736 = vlaneseq
  %v5737 = vshrl.u32 %v5736, 7
  %v5738 = vsub.s32 %v5319, %v5737
  %v5739 = vrot.slane %v4735, %v5738
  %v5740 = vlaneseq
  %v5741 = vshrl.u32 %v5740, 7
  %v5742 = vsub.s32 %v5324, %v5741
  %v5743 = vrot.slane %v4737, %v5742
  %v5744 = vsel %vm5329, %v5743, %v5739
  %v5745 = vlaneseq
  %v5746 = vshrl.u32 %v5745, 7
  %v5747 = vsub.s32 %v5319, %v5746
  %v5748 = vrot.slane %v4739, %v5747
  %v5749 = vlaneseq
  %v5750 = vshrl.u32 %v5749, 7
  %v5751 = vsub.s32 %v5324, %v5750
  %v5752 = vrot.slane %v4741, %v5751
  %v5753 = vsel %vm5329, %v5752, %v5748
  %v5754 = vlaneseq
  %v5755 = vshrl.u32 %v5754, 7
  %v5756 = vsub.s32 %v5319, %v5755
  %v5757 = vrot.slane %v4743, %v5756
  %v5758 = vlaneseq
  %v5759 = vshrl.u32 %v5758, 7
  %v5760 = vsub.s32 %v5324, %v5759
  %v5761 = vrot.slane %v4745, %v5760
  %v5762 = vsel %vm5329, %v5761, %v5757
  %v5763 = vlaneseq
  %v5764 = vshrl.u32 %v5763, 7
  %v5765 = vsub.s32 %v5319, %v5764
  %v5766 = vrot.slane %v4747, %v5765
  %v5767 = vlaneseq
  %v5768 = vshrl.u32 %v5767, 7
  %v5769 = vsub.s32 %v5324, %v5768
  %v5770 = vrot.slane %v4749, %v5769
  %v5771 = vsel %vm5329, %v5770, %v5766
  %v5772 = vlaneseq
  %v5773 = vshrl.u32 %v5772, 7
  %v5774 = vsub.s32 %v5319, %v5773
  %v5775 = vrot.slane %v4751, %v5774
  %v5776 = vlaneseq
  %v5777 = vshrl.u32 %v5776, 7
  %v5778 = vsub.s32 %v5324, %v5777
  %v5779 = vrot.slane %v4753, %v5778
  %v5780 = vsel %vm5329, %v5779, %v5775
  %v5781 = vlaneseq
  %v5782 = vshrl.u32 %v5781, 7
  %v5783 = vsub.s32 %v5319, %v5782
  %v5784 = vrot.slane %v4755, %v5783
  %v5785 = vlaneseq
  %v5786 = vshrl.u32 %v5785, 7
  %v5787 = vsub.s32 %v5324, %v5786
  %v5788 = vrot.slane %v4757, %v5787
  %v5789 = vsel %vm5329, %v5788, %v5784
  %v5790 = vlaneseq
  %v5791 = vshrl.u32 %v5790, 7
  %v5792 = vsub.s32 %v5319, %v5791
  %v5793 = vrot.slane %v4759, %v5792
  %v5794 = vlaneseq
  %v5795 = vshrl.u32 %v5794, 7
  %v5796 = vsub.s32 %v5324, %v5795
  %v5797 = vrot.slane %v4761, %v5796
  %v5798 = vsel %vm5329, %v5797, %v5793
  %v5799 = vlaneseq
  %v5800 = vshrl.u32 %v5799, 7
  %v5801 = vsub.s32 %v5319, %v5800
  %v5802 = vrot.slane %v4763, %v5801
  %v5803 = vlaneseq
  %v5804 = vshrl.u32 %v5803, 7
  %v5805 = vsub.s32 %v5324, %v5804
  %v5806 = vrot.slane %v4765, %v5805
  %v5807 = vsel %vm5329, %v5806, %v5802
  %v5808 = vlaneseq
  %v5809 = vshrl.u32 %v5808, 7
  %v5810 = vsub.s32 %v5319, %v5809
  %v5811 = vrot.slane %v4767, %v5810
  %v5812 = vlaneseq
  %v5813 = vshrl.u32 %v5812, 7
  %v5814 = vsub.s32 %v5324, %v5813
  %v5815 = vrot.slane %v4769, %v5814
  %v5816 = vsel %vm5329, %v5815, %v5811
  %v5817 = vlaneseq
  %v5818 = vshrl.u32 %v5817, 7
  %v5819 = vsub.s32 %v5319, %v5818
  %v5820 = vrot.slane %v4771, %v5819
  %v5821 = vlaneseq
  %v5822 = vshrl.u32 %v5821, 7
  %v5823 = vsub.s32 %v5324, %v5822
  %v5824 = vrot.slane %v4773, %v5823
  %v5825 = vsel %vm5329, %v5824, %v5820
  %v5826 = vlaneseq
  %v5827 = vshrl.u32 %v5826, 7
  %v5828 = vsub.s32 %v5319, %v5827
  %v5829 = vrot.slane %v4775, %v5828
  %v5830 = vlaneseq
  %v5831 = vshrl.u32 %v5830, 7
  %v5832 = vsub.s32 %v5324, %v5831
  %v5833 = vrot.slane %v4777, %v5832
  %v5834 = vsel %vm5329, %v5833, %v5829
  %v5835 = vlaneseq
  %v5836 = vshrl.u32 %v5835, 7
  %v5837 = vsub.s32 %v5319, %v5836
  %v5838 = vrot.slane %v4779, %v5837
  %v5839 = vlaneseq
  %v5840 = vshrl.u32 %v5839, 7
  %v5841 = vsub.s32 %v5324, %v5840
  %v5842 = vrot.slane %v4781, %v5841
  %v5843 = vsel %vm5329, %v5842, %v5838
  %v5844 = vlaneseq
  %v5845 = vshrl.u32 %v5844, 7
  %v5846 = vsub.s32 %v5319, %v5845
  %v5847 = vrot.slane %v4783, %v5846
  %v5848 = vlaneseq
  %v5849 = vshrl.u32 %v5848, 7
  %v5850 = vsub.s32 %v5324, %v5849
  %v5851 = vrot.slane %v4785, %v5850
  %v5852 = vsel %vm5329, %v5851, %v5847
  %v5853 = vlaneseq
  %v5854 = vshrl.u32 %v5853, 7
  %v5855 = vsub.s32 %v5319, %v5854
  %v5856 = vrot.slane %v4787, %v5855
  %v5857 = vlaneseq
  %v5858 = vshrl.u32 %v5857, 7
  %v5859 = vsub.s32 %v5324, %v5858
  %v5860 = vrot.slane %v4789, %v5859
  %v5861 = vsel %vm5329, %v5860, %v5856
  %v5862 = vlaneseq
  %v5863 = vshrl.u32 %v5862, 7
  %v5864 = vsub.s32 %v5319, %v5863
  %v5865 = vrot.slane %v4791, %v5864
  %v5866 = vlaneseq
  %v5867 = vshrl.u32 %v5866, 7
  %v5868 = vsub.s32 %v5324, %v5867
  %v5869 = vrot.slane %v4793, %v5868
  %v5870 = vsel %vm5329, %v5869, %v5865
  %v5871 = vlaneseq
  %v5872 = vshrl.u32 %v5871, 7
  %v5873 = vsub.s32 %v5319, %v5872
  %v5874 = vrot.slane %v4795, %v5873
  %v5875 = vlaneseq
  %v5876 = vshrl.u32 %v5875, 7
  %v5877 = vsub.s32 %v5324, %v5876
  %v5878 = vrot.slane %v4797, %v5877
  %v5879 = vsel %vm5329, %v5878, %v5874
  %v5880 = vlaneseq
  %v5881 = vshrl.u32 %v5880, 7
  %v5882 = vsub.s32 %v5319, %v5881
  %v5883 = vrot.slane %v4799, %v5882
  %v5884 = vlaneseq
  %v5885 = vshrl.u32 %v5884, 7
  %v5886 = vsub.s32 %v5324, %v5885
  %v5887 = vrot.slane %v4801, %v5886
  %v5888 = vsel %vm5329, %v5887, %v5883
  %v5889 = vlaneseq
  %v5890 = vshrl.u32 %v5889, 7
  %v5891 = vsub.s32 %v5319, %v5890
  %v5892 = vrot.slane %v4803, %v5891
  %v5893 = vlaneseq
  %v5894 = vshrl.u32 %v5893, 7
  %v5895 = vsub.s32 %v5324, %v5894
  %v5896 = vrot.slane %v4805, %v5895
  %v5897 = vsel %vm5329, %v5896, %v5892
  %v5898 = vlaneseq
  %v5899 = vshrl.u32 %v5898, 7
  %v5900 = vsub.s32 %v5319, %v5899
  %v5901 = vrot.slane %v4807, %v5900
  %v5902 = vlaneseq
  %v5903 = vshrl.u32 %v5902, 7
  %v5904 = vsub.s32 %v5324, %v5903
  %v5905 = vrot.slane %v4809, %v5904
  %v5906 = vsel %vm5329, %v5905, %v5901
  %v5907 = vlaneseq
  %v5908 = vshrl.u32 %v5907, 7
  %v5909 = vsub.s32 %v5319, %v5908
  %v5910 = vrot.slane %v4811, %v5909
  %v5911 = vlaneseq
  %v5912 = vshrl.u32 %v5911, 7
  %v5913 = vsub.s32 %v5324, %v5912
  %v5914 = vrot.slane %v4813, %v5913
  %v5915 = vsel %vm5329, %v5914, %v5910
  %v5916 = vlaneseq
  %v5917 = vshrl.u32 %v5916, 7
  %v5918 = vsub.s32 %v5319, %v5917
  %v5919 = vrot.slane %v4815, %v5918
  %v5920 = vlaneseq
  %v5921 = vshrl.u32 %v5920, 7
  %v5922 = vsub.s32 %v5324, %v5921
  %v5923 = vrot.slane %v4817, %v5922
  %v5924 = vsel %vm5329, %v5923, %v5919
  %v5925 = vlaneseq
  %v5926 = vshrl.u32 %v5925, 7
  %v5927 = vsub.s32 %v5319, %v5926
  %v5928 = vrot.slane %v4819, %v5927
  %v5929 = vlaneseq
  %v5930 = vshrl.u32 %v5929, 7
  %v5931 = vsub.s32 %v5324, %v5930
  %v5932 = vrot.slane %v4821, %v5931
  %v5933 = vsel %vm5329, %v5932, %v5928
  %v5934 = vlaneseq
  %v5935 = vshrl.u32 %v5934, 7
  %v5936 = vsub.s32 %v5319, %v5935
  %v5937 = vrot.slane %v4823, %v5936
  %v5938 = vlaneseq
  %v5939 = vshrl.u32 %v5938, 7
  %v5940 = vsub.s32 %v5324, %v5939
  %v5941 = vrot.slane %v4825, %v5940
  %v5942 = vsel %vm5329, %v5941, %v5937
  %v5943 = vlaneseq
  %v5944 = vshrl.u32 %v5943, 7
  %v5945 = vsub.s32 %v5319, %v5944
  %v5946 = vrot.slane %v4827, %v5945
  %v5947 = vlaneseq
  %v5948 = vshrl.u32 %v5947, 7
  %v5949 = vsub.s32 %v5324, %v5948
  %v5950 = vrot.slane %v4829, %v5949
  %v5951 = vsel %vm5329, %v5950, %v5946
  %v5952 = vlaneseq
  %v5953 = vshrl.u32 %v5952, 7
  %v5954 = vsub.s32 %v5319, %v5953
  %v5955 = vrot.slane %v4831, %v5954
  %v5956 = vlaneseq
  %v5957 = vshrl.u32 %v5956, 7
  %v5958 = vsub.s32 %v5324, %v5957
  %v5959 = vrot.slane %v4833, %v5958
  %v5960 = vsel %vm5329, %v5959, %v5955
  %v5961 = vlaneseq
  %v5962 = vshrl.u32 %v5961, 7
  %v5963 = vsub.s32 %v5319, %v5962
  %v5964 = vrot.slane %v4835, %v5963
  %v5965 = vlaneseq
  %v5966 = vshrl.u32 %v5965, 7
  %v5967 = vsub.s32 %v5324, %v5966
  %v5968 = vrot.slane %v4837, %v5967
  %v5969 = vsel %vm5329, %v5968, %v5964
  %v5970 = vlaneseq
  %v5971 = vshrl.u32 %v5970, 7
  %v5972 = vsub.s32 %v5319, %v5971
  %v5973 = vrot.slane %v4839, %v5972
  %v5974 = vlaneseq
  %v5975 = vshrl.u32 %v5974, 7
  %v5976 = vsub.s32 %v5324, %v5975
  %v5977 = vrot.slane %v4841, %v5976
  %v5978 = vsel %vm5329, %v5977, %v5973
  %v5979 = vlaneseq
  %v5980 = vshrl.u32 %v5979, 7
  %v5981 = vsub.s32 %v5319, %v5980
  %v5982 = vrot.slane %v4843, %v5981
  %v5983 = vlaneseq
  %v5984 = vshrl.u32 %v5983, 7
  %v5985 = vsub.s32 %v5324, %v5984
  %v5986 = vrot.slane %v4845, %v5985
  %v5987 = vsel %vm5329, %v5986, %v5982
  %v5988 = vlaneseq
  %v5989 = vshrl.u32 %v5988, 7
  %v5990 = vsub.s32 %v5319, %v5989
  %v5991 = vrot.slane %v4847, %v5990
  %v5992 = vlaneseq
  %v5993 = vshrl.u32 %v5992, 7
  %v5994 = vsub.s32 %v5324, %v5993
  %v5995 = vrot.slane %v4849, %v5994
  %v5996 = vsel %vm5329, %v5995, %v5991
  %v5997 = vlaneseq
  %v5998 = vshrl.u32 %v5997, 7
  %v5999 = vsub.s32 %v5319, %v5998
  %v6000 = vrot.slane %v4851, %v5999
  %v6001 = vlaneseq
  %v6002 = vshrl.u32 %v6001, 7
  %v6003 = vsub.s32 %v5324, %v6002
  %v6004 = vrot.slane %v4853, %v6003
  %v6005 = vsel %vm5329, %v6004, %v6000
  %v6006 = vlaneseq
  %v6007 = vshrl.u32 %v6006, 7
  %v6008 = vsub.s32 %v5319, %v6007
  %v6009 = vrot.slane %v4855, %v6008
  %v6010 = vlaneseq
  %v6011 = vshrl.u32 %v6010, 7
  %v6012 = vsub.s32 %v5324, %v6011
  %v6013 = vrot.slane %v4857, %v6012
  %v6014 = vsel %vm5329, %v6013, %v6009
  %v6015 = vlaneseq
  %v6016 = vshrl.u32 %v6015, 7
  %v6017 = vsub.s32 %v5319, %v6016
  %v6018 = vrot.slane %v4859, %v6017
  %v6019 = vlaneseq
  %v6020 = vshrl.u32 %v6019, 7
  %v6021 = vsub.s32 %v5324, %v6020
  %v6022 = vrot.slane %v4861, %v6021
  %v6023 = vsel %vm5329, %v6022, %v6018
  %v6024 = vlaneseq
  %v6025 = vshrl.u32 %v6024, 7
  %v6026 = vsub.s32 %v5319, %v6025
  %v6027 = vrot.slane %v4863, %v6026
  %v6028 = vlaneseq
  %v6029 = vshrl.u32 %v6028, 7
  %v6030 = vsub.s32 %v5324, %v6029
  %v6031 = vrot.slane %v4865, %v6030
  %v6032 = vsel %vm5329, %v6031, %v6027
  %v6033 = vlaneseq
  %v6034 = vshrl.u32 %v6033, 7
  %v6035 = vsub.s32 %v5319, %v6034
  %v6036 = vrot.slane %v4867, %v6035
  %v6037 = vlaneseq
  %v6038 = vshrl.u32 %v6037, 7
  %v6039 = vsub.s32 %v5324, %v6038
  %v6040 = vrot.slane %v4869, %v6039
  %v6041 = vsel %vm5329, %v6040, %v6036
  %v6042 = vlaneseq
  %v6043 = vshrl.u32 %v6042, 7
  %v6044 = vsub.s32 %v5319, %v6043
  %v6045 = vrot.slane %v4871, %v6044
  %v6046 = vlaneseq
  %v6047 = vshrl.u32 %v6046, 7
  %v6048 = vsub.s32 %v5324, %v6047
  %v6049 = vrot.slane %v4873, %v6048
  %v6050 = vsel %vm5329, %v6049, %v6045
  %v6051 = vlaneseq
  %v6052 = vshrl.u32 %v6051, 7
  %v6053 = vsub.s32 %v5319, %v6052
  %v6054 = vrot.slane %v4875, %v6053
  %v6055 = vlaneseq
  %v6056 = vshrl.u32 %v6055, 7
  %v6057 = vsub.s32 %v5324, %v6056
  %v6058 = vrot.slane %v4877, %v6057
  %v6059 = vsel %vm5329, %v6058, %v6054
  %v6060 = vlaneseq
  %v6061 = vshrl.u32 %v6060, 7
  %v6062 = vsub.s32 %v5319, %v6061
  %v6063 = vrot.slane %v4879, %v6062
  %v6064 = vlaneseq
  %v6065 = vshrl.u32 %v6064, 7
  %v6066 = vsub.s32 %v5324, %v6065
  %v6067 = vrot.slane %v4881, %v6066
  %v6068 = vsel %vm5329, %v6067, %v6063
  %v6069 = vlaneseq
  %v6070 = vshrl.u32 %v6069, 7
  %v6071 = vsub.s32 %v5319, %v6070
  %v6072 = vrot.slane %v4883, %v6071
  %v6073 = vlaneseq
  %v6074 = vshrl.u32 %v6073, 7
  %v6075 = vsub.s32 %v5324, %v6074
  %v6076 = vrot.slane %v4885, %v6075
  %v6077 = vsel %vm5329, %v6076, %v6072
  %v6078 = vlaneseq
  %v6079 = vshrl.u32 %v6078, 7
  %v6080 = vsub.s32 %v5319, %v6079
  %v6081 = vrot.slane %v4887, %v6080
  %v6082 = vlaneseq
  %v6083 = vshrl.u32 %v6082, 7
  %v6084 = vsub.s32 %v5324, %v6083
  %v6085 = vrot.slane %v4889, %v6084
  %v6086 = vsel %vm5329, %v6085, %v6081
  %v6087 = vlaneseq
  %v6088 = vshrl.u32 %v6087, 7
  %v6089 = vsub.s32 %v5319, %v6088
  %v6090 = vrot.slane %v4891, %v6089
  %v6091 = vlaneseq
  %v6092 = vshrl.u32 %v6091, 7
  %v6093 = vsub.s32 %v5324, %v6092
  %v6094 = vrot.slane %v4893, %v6093
  %v6095 = vsel %vm5329, %v6094, %v6090
  %v6096 = vlaneseq
  %v6097 = vshrl.u32 %v6096, 7
  %v6098 = vsub.s32 %v5319, %v6097
  %v6099 = vrot.slane %v4895, %v6098
  %v6100 = vlaneseq
  %v6101 = vshrl.u32 %v6100, 7
  %v6102 = vsub.s32 %v5324, %v6101
  %v6103 = vrot.slane %v4897, %v6102
  %v6104 = vsel %vm5329, %v6103, %v6099
  %v6105 = vlaneseq
  %v6106 = vshrl.u32 %v6105, 7
  %v6107 = vsub.s32 %v5319, %v6106
  %v6108 = vrot.slane %v4899, %v6107
  %v6109 = vlaneseq
  %v6110 = vshrl.u32 %v6109, 7
  %v6111 = vsub.s32 %v5324, %v6110
  %v6112 = vrot.slane %v4901, %v6111
  %v6113 = vsel %vm5329, %v6112, %v6108
  %v6114 = vlaneseq
  %v6115 = vshrl.u32 %v6114, 7
  %v6116 = vsub.s32 %v5319, %v6115
  %v6117 = vrot.slane %v4903, %v6116
  %v6118 = vlaneseq
  %v6119 = vshrl.u32 %v6118, 7
  %v6120 = vsub.s32 %v5324, %v6119
  %v6121 = vrot.slane %v4905, %v6120
  %v6122 = vsel %vm5329, %v6121, %v6117
  %v6123 = vlaneseq
  %v6124 = vshrl.u32 %v6123, 7
  %v6125 = vsub.s32 %v5319, %v6124
  %v6126 = vrot.slane %v4907, %v6125
  %v6127 = vlaneseq
  %v6128 = vshrl.u32 %v6127, 7
  %v6129 = vsub.s32 %v5324, %v6128
  %v6130 = vrot.slane %v4909, %v6129
  %v6131 = vsel %vm5329, %v6130, %v6126
  %v6132 = vlaneseq
  %v6133 = vshrl.u32 %v6132, 7
  %v6134 = vsub.s32 %v5319, %v6133
  %v6135 = vrot.slane %v4911, %v6134
  %v6136 = vlaneseq
  %v6137 = vshrl.u32 %v6136, 7
  %v6138 = vsub.s32 %v5324, %v6137
  %v6139 = vrot.slane %v4913, %v6138
  %v6140 = vsel %vm5329, %v6139, %v6135
  %v6141 = vlaneseq
  %v6142 = vshrl.u32 %v6141, 7
  %v6143 = vsub.s32 %v5319, %v6142
  %v6144 = vrot.slane %v4915, %v6143
  %v6145 = vlaneseq
  %v6146 = vshrl.u32 %v6145, 7
  %v6147 = vsub.s32 %v5324, %v6146
  %v6148 = vrot.slane %v4917, %v6147
  %v6149 = vsel %vm5329, %v6148, %v6144
  %v6150 = vlaneseq
  %v6151 = vshrl.u32 %v6150, 7
  %v6152 = vsub.s32 %v5319, %v6151
  %v6153 = vrot.slane %v4919, %v6152
  %v6154 = vlaneseq
  %v6155 = vshrl.u32 %v6154, 7
  %v6156 = vsub.s32 %v5324, %v6155
  %v6157 = vrot.slane %v4921, %v6156
  %v6158 = vsel %vm5329, %v6157, %v6153
  %v6159 = vlaneseq
  %v6160 = vshrl.u32 %v6159, 7
  %v6161 = vsub.s32 %v5319, %v6160
  %v6162 = vrot.slane %v4923, %v6161
  %v6163 = vlaneseq
  %v6164 = vshrl.u32 %v6163, 7
  %v6165 = vsub.s32 %v5324, %v6164
  %v6166 = vrot.slane %v4925, %v6165
  %v6167 = vsel %vm5329, %v6166, %v6162
  %v6168 = vlaneseq
  %v6169 = vshrl.u32 %v6168, 7
  %v6170 = vsub.s32 %v5319, %v6169
  %v6171 = vrot.slane %v4927, %v6170
  %v6172 = vlaneseq
  %v6173 = vshrl.u32 %v6172, 7
  %v6174 = vsub.s32 %v5324, %v6173
  %v6175 = vrot.slane %v4929, %v6174
  %v6176 = vsel %vm5329, %v6175, %v6171
  %v6177 = vlaneseq
  %v6178 = vshrl.u32 %v6177, 7
  %v6179 = vsub.s32 %v5319, %v6178
  %v6180 = vrot.slane %v4931, %v6179
  %v6181 = vlaneseq
  %v6182 = vshrl.u32 %v6181, 7
  %v6183 = vsub.s32 %v5324, %v6182
  %v6184 = vrot.slane %v4933, %v6183
  %v6185 = vsel %vm5329, %v6184, %v6180
  %v6186 = vlaneseq
  %v6187 = vshrl.u32 %v6186, 7
  %v6188 = vsub.s32 %v5319, %v6187
  %v6189 = vrot.slane %v4935, %v6188
  %v6190 = vlaneseq
  %v6191 = vshrl.u32 %v6190, 7
  %v6192 = vsub.s32 %v5324, %v6191
  %v6193 = vrot.slane %v4937, %v6192
  %v6194 = vsel %vm5329, %v6193, %v6189
  %v6195 = vlaneseq
  %v6196 = vshrl.u32 %v6195, 7
  %v6197 = vsub.s32 %v5319, %v6196
  %v6198 = vrot.slane %v4939, %v6197
  %v6199 = vlaneseq
  %v6200 = vshrl.u32 %v6199, 7
  %v6201 = vsub.s32 %v5324, %v6200
  %v6202 = vrot.slane %v4941, %v6201
  %v6203 = vsel %vm5329, %v6202, %v6198
  %v6204 = vlaneseq
  %v6205 = vshrl.u32 %v6204, 7
  %v6206 = vsub.s32 %v5319, %v6205
  %v6207 = vrot.slane %v4943, %v6206
  %v6208 = vlaneseq
  %v6209 = vshrl.u32 %v6208, 7
  %v6210 = vsub.s32 %v5324, %v6209
  %v6211 = vrot.slane %v4945, %v6210
  %v6212 = vsel %vm5329, %v6211, %v6207
  %v6213 = vlaneseq
  %v6214 = vshrl.u32 %v6213, 7
  %v6215 = vsub.s32 %v5319, %v6214
  %v6216 = vrot.slane %v4947, %v6215
  %v6217 = vlaneseq
  %v6218 = vshrl.u32 %v6217, 7
  %v6219 = vsub.s32 %v5324, %v6218
  %v6220 = vrot.slane %v4949, %v6219
  %v6221 = vsel %vm5329, %v6220, %v6216
  %v6222 = vlaneseq
  %v6223 = vshrl.u32 %v6222, 7
  %v6224 = vsub.s32 %v5319, %v6223
  %v6225 = vrot.slane %v4951, %v6224
  %v6226 = vlaneseq
  %v6227 = vshrl.u32 %v6226, 7
  %v6228 = vsub.s32 %v5324, %v6227
  %v6229 = vrot.slane %v4953, %v6228
  %v6230 = vsel %vm5329, %v6229, %v6225
  %v6231 = vlaneseq
  %v6232 = vshrl.u32 %v6231, 7
  %v6233 = vsub.s32 %v5319, %v6232
  %v6234 = vrot.slane %v4955, %v6233
  %v6235 = vlaneseq
  %v6236 = vshrl.u32 %v6235, 7
  %v6237 = vsub.s32 %v5324, %v6236
  %v6238 = vrot.slane %v4957, %v6237
  %v6239 = vsel %vm5329, %v6238, %v6234
  %v6240 = vlaneseq
  %v6241 = vshrl.u32 %v6240, 7
  %v6242 = vsub.s32 %v5319, %v6241
  %v6243 = vrot.slane %v4959, %v6242
  %v6244 = vlaneseq
  %v6245 = vshrl.u32 %v6244, 7
  %v6246 = vsub.s32 %v5324, %v6245
  %v6247 = vrot.slane %v4961, %v6246
  %v6248 = vsel %vm5329, %v6247, %v6243
  %v6249 = vlaneseq
  %v6250 = vshrl.u32 %v6249, 7
  %v6251 = vsub.s32 %v5319, %v6250
  %v6252 = vrot.slane %v4963, %v6251
  %v6253 = vlaneseq
  %v6254 = vshrl.u32 %v6253, 7
  %v6255 = vsub.s32 %v5324, %v6254
  %v6256 = vrot.slane %v4965, %v6255
  %v6257 = vsel %vm5329, %v6256, %v6252
  %v6258 = vlaneseq
  %v6259 = vshrl.u32 %v6258, 7
  %v6260 = vsub.s32 %v5319, %v6259
  %v6261 = vrot.slane %v4967, %v6260
  %v6262 = vlaneseq
  %v6263 = vshrl.u32 %v6262, 7
  %v6264 = vsub.s32 %v5324, %v6263
  %v6265 = vrot.slane %v4969, %v6264
  %v6266 = vsel %vm5329, %v6265, %v6261
  %v6267 = vlaneseq
  %v6268 = vshrl.u32 %v6267, 7
  %v6269 = vsub.s32 %v5319, %v6268
  %v6270 = vrot.slane %v4971, %v6269
  %v6271 = vlaneseq
  %v6272 = vshrl.u32 %v6271, 7
  %v6273 = vsub.s32 %v5324, %v6272
  %v6274 = vrot.slane %v4973, %v6273
  %v6275 = vsel %vm5329, %v6274, %v6270
  %v6276 = vlaneseq
  %v6277 = vshrl.u32 %v6276, 7
  %v6278 = vsub.s32 %v5319, %v6277
  %v6279 = vrot.slane %v4975, %v6278
  %v6280 = vlaneseq
  %v6281 = vshrl.u32 %v6280, 7
  %v6282 = vsub.s32 %v5324, %v6281
  %v6283 = vrot.slane %v4977, %v6282
  %v6284 = vsel %vm5329, %v6283, %v6279
  %v6285 = vlaneseq
  %v6286 = vshrl.u32 %v6285, 7
  %v6287 = vsub.s32 %v5319, %v6286
  %v6288 = vrot.slane %v4979, %v6287
  %v6289 = vlaneseq
  %v6290 = vshrl.u32 %v6289, 7
  %v6291 = vsub.s32 %v5324, %v6290
  %v6292 = vrot.slane %v4981, %v6291
  %v6293 = vsel %vm5329, %v6292, %v6288
  %v6294 = vlaneseq
  %v6295 = vshrl.u32 %v6294, 7
  %v6296 = vsub.s32 %v5319, %v6295
  %v6297 = vrot.slane %v4983, %v6296
  %v6298 = vlaneseq
  %v6299 = vshrl.u32 %v6298, 7
  %v6300 = vsub.s32 %v5324, %v6299
  %v6301 = vrot.slane %v4985, %v6300
  %v6302 = vsel %vm5329, %v6301, %v6297
  %v6303 = vlaneseq
  %v6304 = vshrl.u32 %v6303, 7
  %v6305 = vsub.s32 %v5319, %v6304
  %v6306 = vrot.slane %v4987, %v6305
  %v6307 = vlaneseq
  %v6308 = vshrl.u32 %v6307, 7
  %v6309 = vsub.s32 %v5324, %v6308
  %v6310 = vrot.slane %v4989, %v6309
  %v6311 = vsel %vm5329, %v6310, %v6306
  %v6312 = vlaneseq
  %v6313 = vshrl.u32 %v6312, 7
  %v6314 = vsub.s32 %v5319, %v6313
  %v6315 = vrot.slane %v4991, %v6314
  %v6316 = vlaneseq
  %v6317 = vshrl.u32 %v6316, 7
  %v6318 = vsub.s32 %v5324, %v6317
  %v6319 = vrot.slane %v4993, %v6318
  %v6320 = vsel %vm5329, %v6319, %v6315
  %v6321 = vlaneseq
  %v6322 = vshrl.u32 %v6321, 7
  %v6323 = vsub.s32 %v5319, %v6322
  %v6324 = vrot.slane %v4995, %v6323
  %v6325 = vlaneseq
  %v6326 = vshrl.u32 %v6325, 7
  %v6327 = vsub.s32 %v5324, %v6326
  %v6328 = vrot.slane %v4997, %v6327
  %v6329 = vsel %vm5329, %v6328, %v6324
  %v6330 = vlaneseq
  %v6331 = vshrl.u32 %v6330, 7
  %v6332 = vsub.s32 %v5319, %v6331
  %v6333 = vrot.slane %v4999, %v6332
  %v6334 = vlaneseq
  %v6335 = vshrl.u32 %v6334, 7
  %v6336 = vsub.s32 %v5324, %v6335
  %v6337 = vrot.slane %v5001, %v6336
  %v6338 = vsel %vm5329, %v6337, %v6333
  %v6339 = vlaneseq
  %v6340 = vshrl.u32 %v6339, 7
  %v6341 = vsub.s32 %v5319, %v6340
  %v6342 = vrot.slane %v5003, %v6341
  %v6343 = vlaneseq
  %v6344 = vshrl.u32 %v6343, 7
  %v6345 = vsub.s32 %v5324, %v6344
  %v6346 = vrot.slane %v5005, %v6345
  %v6347 = vsel %vm5329, %v6346, %v6342
  %v6348 = vlaneseq
  %v6349 = vshrl.u32 %v6348, 7
  %v6350 = vsub.s32 %v5319, %v6349
  %v6351 = vrot.slane %v5007, %v6350
  %v6352 = vlaneseq
  %v6353 = vshrl.u32 %v6352, 7
  %v6354 = vsub.s32 %v5324, %v6353
  %v6355 = vrot.slane %v5009, %v6354
  %v6356 = vsel %vm5329, %v6355, %v6351
  %v6357 = vlaneseq
  %v6358 = vshrl.u32 %v6357, 7
  %v6359 = vsub.s32 %v5319, %v6358
  %v6360 = vrot.slane %v5011, %v6359
  %v6361 = vlaneseq
  %v6362 = vshrl.u32 %v6361, 7
  %v6363 = vsub.s32 %v5324, %v6362
  %v6364 = vrot.slane %v5013, %v6363
  %v6365 = vsel %vm5329, %v6364, %v6360
  %v6366 = vlaneseq
  %v6367 = vshrl.u32 %v6366, 7
  %v6368 = vsub.s32 %v5319, %v6367
  %v6369 = vrot.slane %v5015, %v6368
  %v6370 = vlaneseq
  %v6371 = vshrl.u32 %v6370, 7
  %v6372 = vsub.s32 %v5324, %v6371
  %v6373 = vrot.slane %v5017, %v6372
  %v6374 = vsel %vm5329, %v6373, %v6369
  %v6375 = vlaneseq
  %v6376 = vshrl.u32 %v6375, 7
  %v6377 = vsub.s32 %v5319, %v6376
  %v6378 = vrot.slane %v5019, %v6377
  %v6379 = vlaneseq
  %v6380 = vshrl.u32 %v6379, 7
  %v6381 = vsub.s32 %v5324, %v6380
  %v6382 = vrot.slane %v5021, %v6381
  %v6383 = vsel %vm5329, %v6382, %v6378
  %v6384 = vlaneseq
  %v6385 = vshrl.u32 %v6384, 7
  %v6386 = vsub.s32 %v5319, %v6385
  %v6387 = vrot.slane %v5023, %v6386
  %v6388 = vlaneseq
  %v6389 = vshrl.u32 %v6388, 7
  %v6390 = vsub.s32 %v5324, %v6389
  %v6391 = vrot.slane %v5025, %v6390
  %v6392 = vsel %vm5329, %v6391, %v6387
  %v6393 = vlaneseq
  %v6394 = vshrl.u32 %v6393, 7
  %v6395 = vsub.s32 %v5319, %v6394
  %v6396 = vrot.slane %v5027, %v6395
  %v6397 = vlaneseq
  %v6398 = vshrl.u32 %v6397, 7
  %v6399 = vsub.s32 %v5324, %v6398
  %v6400 = vrot.slane %v5029, %v6399
  %v6401 = vsel %vm5329, %v6400, %v6396
  %v6402 = vlaneseq
  %v6403 = vshrl.u32 %v6402, 7
  %v6404 = vsub.s32 %v5319, %v6403
  %v6405 = vrot.slane %v5031, %v6404
  %v6406 = vlaneseq
  %v6407 = vshrl.u32 %v6406, 7
  %v6408 = vsub.s32 %v5324, %v6407
  %v6409 = vrot.slane %v5033, %v6408
  %v6410 = vsel %vm5329, %v6409, %v6405
  %v6411 = vlaneseq
  %v6412 = vshrl.u32 %v6411, 7
  %v6413 = vsub.s32 %v5319, %v6412
  %v6414 = vrot.slane %v5035, %v6413
  %v6415 = vlaneseq
  %v6416 = vshrl.u32 %v6415, 7
  %v6417 = vsub.s32 %v5324, %v6416
  %v6418 = vrot.slane %v5037, %v6417
  %v6419 = vsel %vm5329, %v6418, %v6414
  %v6420 = vlaneseq
  %v6421 = vshrl.u32 %v6420, 7
  %v6422 = vsub.s32 %v5319, %v6421
  %v6423 = vrot.slane %v5039, %v6422
  %v6424 = vlaneseq
  %v6425 = vshrl.u32 %v6424, 7
  %v6426 = vsub.s32 %v5324, %v6425
  %v6427 = vrot.slane %v5041, %v6426
  %v6428 = vsel %vm5329, %v6427, %v6423
  %v6429 = vlaneseq
  %v6430 = vshrl.u32 %v6429, 7
  %v6431 = vsub.s32 %v5319, %v6430
  %v6432 = vrot.slane %v5043, %v6431
  %v6433 = vlaneseq
  %v6434 = vshrl.u32 %v6433, 7
  %v6435 = vsub.s32 %v5324, %v6434
  %v6436 = vrot.slane %v5045, %v6435
  %v6437 = vsel %vm5329, %v6436, %v6432
  %v6438 = vlaneseq
  %v6439 = vshrl.u32 %v6438, 7
  %v6440 = vsub.s32 %v5319, %v6439
  %v6441 = vrot.slane %v5047, %v6440
  %v6442 = vlaneseq
  %v6443 = vshrl.u32 %v6442, 7
  %v6444 = vsub.s32 %v5324, %v6443
  %v6445 = vrot.slane %v5049, %v6444
  %v6446 = vsel %vm5329, %v6445, %v6441
  %v6447 = vlaneseq
  %v6448 = vshrl.u32 %v6447, 7
  %v6449 = vsub.s32 %v5319, %v6448
  %v6450 = vrot.slane %v5051, %v6449
  %v6451 = vlaneseq
  %v6452 = vshrl.u32 %v6451, 7
  %v6453 = vsub.s32 %v5324, %v6452
  %v6454 = vrot.slane %v5053, %v6453
  %v6455 = vsel %vm5329, %v6454, %v6450
  %v6456 = vlaneseq
  %v6457 = vshrl.u32 %v6456, 7
  %v6458 = vsub.s32 %v5319, %v6457
  %v6459 = vrot.slane %v5055, %v6458
  %v6460 = vlaneseq
  %v6461 = vshrl.u32 %v6460, 7
  %v6462 = vsub.s32 %v5324, %v6461
  %v6463 = vrot.slane %v5057, %v6462
  %v6464 = vsel %vm5329, %v6463, %v6459
  %v6465 = vlaneseq
  %v6466 = vshrl.u32 %v6465, 7
  %v6467 = vsub.s32 %v5319, %v6466
  %v6468 = vrot.slane %v5059, %v6467
  %v6469 = vlaneseq
  %v6470 = vshrl.u32 %v6469, 7
  %v6471 = vsub.s32 %v5324, %v6470
  %v6472 = vrot.slane %v5061, %v6471
  %v6473 = vsel %vm5329, %v6472, %v6468
  %vm6474 = vcmask 1041409
  %v6475 = vsel %vm6474, %v5339, %v5330
  %vm6476 = vcmask 1042434
  %v6477 = vsel %vm6476, %v5348, %v6475
  %vm6478 = vcmask 1043459
  %v6479 = vsel %vm6478, %v5357, %v6477
  %vm6480 = vcmask 1044484
  %v6481 = vsel %vm6480, %v5366, %v6479
  %vm6482 = vcmask 1045509
  %v6483 = vsel %vm6482, %v5375, %v6481
  %vm6484 = vcmask 1046534
  %v6485 = vsel %vm6484, %v5384, %v6483
  %vm6486 = vcmask 1047559
  %v6487 = vsel %vm6486, %v5393, %v6485
  %v6488 = vsel %vm6474, %v5411, %v5402
  %v6489 = vsel %vm6476, %v5420, %v6488
  %v6490 = vsel %vm6478, %v5429, %v6489
  %v6491 = vsel %vm6480, %v5438, %v6490
  %v6492 = vsel %vm6482, %v5447, %v6491
  %v6493 = vsel %vm6484, %v5456, %v6492
  %v6494 = vsel %vm6486, %v5465, %v6493
  %v6495 = vsel %vm6474, %v5483, %v5474
  %v6496 = vsel %vm6476, %v5492, %v6495
  %v6497 = vsel %vm6478, %v5501, %v6496
  %v6498 = vsel %vm6480, %v5510, %v6497
  %v6499 = vsel %vm6482, %v5519, %v6498
  %v6500 = vsel %vm6484, %v5528, %v6499
  %v6501 = vsel %vm6486, %v5537, %v6500
  %v6502 = vsel %vm6474, %v5555, %v5546
  %v6503 = vsel %vm6476, %v5564, %v6502
  %v6504 = vsel %vm6478, %v5573, %v6503
  %v6505 = vsel %vm6480, %v5582, %v6504
  %v6506 = vsel %vm6482, %v5591, %v6505
  %v6507 = vsel %vm6484, %v5600, %v6506
  %v6508 = vsel %vm6486, %v5609, %v6507
  %v6509 = vsel %vm6474, %v5627, %v5618
  %v6510 = vsel %vm6476, %v5636, %v6509
  %v6511 = vsel %vm6478, %v5645, %v6510
  %v6512 = vsel %vm6480, %v5654, %v6511
  %v6513 = vsel %vm6482, %v5663, %v6512
  %v6514 = vsel %vm6484, %v5672, %v6513
  %v6515 = vsel %vm6486, %v5681, %v6514
  %v6516 = vsel %vm6474, %v5699, %v5690
  %v6517 = vsel %vm6476, %v5708, %v6516
  %v6518 = vsel %vm6478, %v5717, %v6517
  %v6519 = vsel %vm6480, %v5726, %v6518
  %v6520 = vsel %vm6482, %v5735, %v6519
  %v6521 = vsel %vm6484, %v5744, %v6520
  %v6522 = vsel %vm6486, %v5753, %v6521
  %v6523 = vsel %vm6474, %v5771, %v5762
  %v6524 = vsel %vm6476, %v5780, %v6523
  %v6525 = vsel %vm6478, %v5789, %v6524
  %v6526 = vsel %vm6480, %v5798, %v6525
  %v6527 = vsel %vm6482, %v5807, %v6526
  %v6528 = vsel %vm6484, %v5816, %v6527
  %v6529 = vsel %vm6486, %v5825, %v6528
  %v6530 = vsel %vm6474, %v5843, %v5834
  %v6531 = vsel %vm6476, %v5852, %v6530
  %v6532 = vsel %vm6478, %v5861, %v6531
  %v6533 = vsel %vm6480, %v5870, %v6532
  %v6534 = vsel %vm6482, %v5879, %v6533
  %v6535 = vsel %vm6484, %v5888, %v6534
  %v6536 = vsel %vm6486, %v5897, %v6535
  %v6537 = vsel %vm6474, %v5915, %v5906
  %v6538 = vsel %vm6476, %v5924, %v6537
  %v6539 = vsel %vm6478, %v5933, %v6538
  %v6540 = vsel %vm6480, %v5942, %v6539
  %v6541 = vsel %vm6482, %v5951, %v6540
  %v6542 = vsel %vm6484, %v5960, %v6541
  %v6543 = vsel %vm6486, %v5969, %v6542
  %v6544 = vsel %vm6474, %v5987, %v5978
  %v6545 = vsel %vm6476, %v5996, %v6544
  %v6546 = vsel %vm6478, %v6005, %v6545
  %v6547 = vsel %vm6480, %v6014, %v6546
  %v6548 = vsel %vm6482, %v6023, %v6547
  %v6549 = vsel %vm6484, %v6032, %v6548
  %v6550 = vsel %vm6486, %v6041, %v6549
  %v6551 = vsel %vm6474, %v6059, %v6050
  %v6552 = vsel %vm6476, %v6068, %v6551
  %v6553 = vsel %vm6478, %v6077, %v6552
  %v6554 = vsel %vm6480, %v6086, %v6553
  %v6555 = vsel %vm6482, %v6095, %v6554
  %v6556 = vsel %vm6484, %v6104, %v6555
  %v6557 = vsel %vm6486, %v6113, %v6556
  %v6558 = vsel %vm6474, %v6131, %v6122
  %v6559 = vsel %vm6476, %v6140, %v6558
  %v6560 = vsel %vm6478, %v6149, %v6559
  %v6561 = vsel %vm6480, %v6158, %v6560
  %v6562 = vsel %vm6482, %v6167, %v6561
  %v6563 = vsel %vm6484, %v6176, %v6562
  %v6564 = vsel %vm6486, %v6185, %v6563
  %v6565 = vsel %vm6474, %v6203, %v6194
  %v6566 = vsel %vm6476, %v6212, %v6565
  %v6567 = vsel %vm6478, %v6221, %v6566
  %v6568 = vsel %vm6480, %v6230, %v6567
  %v6569 = vsel %vm6482, %v6239, %v6568
  %v6570 = vsel %vm6484, %v6248, %v6569
  %v6571 = vsel %vm6486, %v6257, %v6570
  %v6572 = vsel %vm6474, %v6275, %v6266
  %v6573 = vsel %vm6476, %v6284, %v6572
  %v6574 = vsel %vm6478, %v6293, %v6573
  %v6575 = vsel %vm6480, %v6302, %v6574
  %v6576 = vsel %vm6482, %v6311, %v6575
  %v6577 = vsel %vm6484, %v6320, %v6576
  %v6578 = vsel %vm6486, %v6329, %v6577
  %v6579 = vsel %vm6474, %v6347, %v6338
  %v6580 = vsel %vm6476, %v6356, %v6579
  %v6581 = vsel %vm6478, %v6365, %v6580
  %v6582 = vsel %vm6480, %v6374, %v6581
  %v6583 = vsel %vm6482, %v6383, %v6582
  %v6584 = vsel %vm6484, %v6392, %v6583
  %v6585 = vsel %vm6486, %v6401, %v6584
  %v6586 = vsel %vm6474, %v6419, %v6410
  %v6587 = vsel %vm6476, %v6428, %v6586
  %v6588 = vsel %vm6478, %v6437, %v6587
  %v6589 = vsel %vm6480, %v6446, %v6588
  %v6590 = vsel %vm6482, %v6455, %v6589
  %v6591 = vsel %vm6484, %v6464, %v6590
  %v6592 = vsel %vm6486, %v6473, %v6591
  %vm6609 = vcmask 130048
  %v6610 = vsel %vm6609, %v6487, 0.0
  %6611 = vadd.xlane.f32.xlu0 %v6610
  %v6612 = vpop.xlane.xlu0 %6611
  %v6613 = vsel %vm6609, %v6494, 0.0
  %6614 = vadd.xlane.f32.xlu0 %v6613
  %v6615 = vpop.xlane.xlu0 %6614
  %v6616 = vsel %vm6609, %v6501, 0.0
  %6617 = vadd.xlane.f32.xlu0 %v6616
  %v6618 = vpop.xlane.xlu0 %6617
  %v6619 = vsel %vm6609, %v6508, 0.0
  %6620 = vadd.xlane.f32.xlu0 %v6619
  %v6621 = vpop.xlane.xlu0 %6620
  %v6622 = vsel %vm6609, %v6515, 0.0
  %6623 = vadd.xlane.f32.xlu0 %v6622
  %v6624 = vpop.xlane.xlu0 %6623
  %v6625 = vsel %vm6609, %v6522, 0.0
  %6626 = vadd.xlane.f32.xlu0 %v6625
  %v6627 = vpop.xlane.xlu0 %6626
  %v6628 = vsel %vm6609, %v6529, 0.0
  %6629 = vadd.xlane.f32.xlu0 %v6628
  %v6630 = vpop.xlane.xlu0 %6629
  %v6631 = vsel %vm6609, %v6536, 0.0
  %6632 = vadd.xlane.f32.xlu0 %v6631
  %v6633 = vpop.xlane.xlu0 %6632
  %v6634 = vsel %vm6609, %v6543, 0.0
  %6635 = vadd.xlane.f32.xlu0 %v6634
  %v6636 = vpop.xlane.xlu0 %6635
  %v6637 = vsel %vm6609, %v6550, 0.0
  %6638 = vadd.xlane.f32.xlu0 %v6637
  %v6639 = vpop.xlane.xlu0 %6638
  %v6640 = vsel %vm6609, %v6557, 0.0
  %6641 = vadd.xlane.f32.xlu0 %v6640
  %v6642 = vpop.xlane.xlu0 %6641
  %v6643 = vsel %vm6609, %v6564, 0.0
  %6644 = vadd.xlane.f32.xlu0 %v6643
  %v6645 = vpop.xlane.xlu0 %6644
  %v6646 = vsel %vm6609, %v6571, 0.0
  %6647 = vadd.xlane.f32.xlu0 %v6646
  %v6648 = vpop.xlane.xlu0 %6647
  %v6649 = vsel %vm6609, %v6578, 0.0
  %6650 = vadd.xlane.f32.xlu0 %v6649
  %v6651 = vpop.xlane.xlu0 %6650
  %v6652 = vsel %vm6609, %v6585, 0.0
  %6653 = vadd.xlane.f32.xlu0 %v6652
  %v6654 = vpop.xlane.xlu0 %6653
  %v6655 = vsel %vm6609, %v6592, 0.0
  %6656 = vadd.xlane.f32.xlu0 %v6655
  %v6657 = vpop.xlane.xlu0 %6656
  %v6658 = vmax.f32 %v6612, -50.0
  %v6659 = vmax.f32 %v6615, -50.0
  %v6660 = vmax.f32 %v6618, -50.0
  %v6661 = vmax.f32 %v6621, -50.0
  %v6662 = vmax.f32 %v6624, -50.0
  %v6663 = vmax.f32 %v6627, -50.0
  %v6664 = vmax.f32 %v6630, -50.0
  %v6665 = vmax.f32 %v6633, -50.0
  %v6666 = vmax.f32 %v6636, -50.0
  %v6667 = vmax.f32 %v6639, -50.0
  %v6668 = vmax.f32 %v6642, -50.0
  %v6669 = vmax.f32 %v6645, -50.0
  %v6670 = vmax.f32 %v6648, -50.0
  %v6671 = vmax.f32 %v6651, -50.0
  %v6672 = vmax.f32 %v6654, -50.0
  %v6673 = vmax.f32 %v6657, -50.0
  %v6674 = vmin.f32 %v6658, 50.0
  %v6675 = vmin.f32 %v6659, 50.0
  %v6676 = vmin.f32 %v6660, 50.0
  %v6677 = vmin.f32 %v6661, 50.0
  %v6678 = vmin.f32 %v6662, 50.0
  %v6679 = vmin.f32 %v6663, 50.0
  %v6680 = vmin.f32 %v6664, 50.0
  %v6681 = vmin.f32 %v6665, 50.0
  %v6682 = vmin.f32 %v6666, 50.0
  %v6683 = vmin.f32 %v6667, 50.0
  %v6684 = vmin.f32 %v6668, 50.0
  %v6685 = vmin.f32 %v6669, 50.0
  %v6686 = vmin.f32 %v6670, 50.0
  %v6687 = vmin.f32 %v6671, 50.0
  %v6688 = vmin.f32 %v6672, 50.0
  %v6689 = vmin.f32 %v6673, 50.0
  %v6690 = vmul.f32 %v6674, 1.442695
  %v6691 = vpow.pop %v6690
  %v6692 = vmul.f32 %v6675, 1.442695
  %v6693 = vpow.pop %v6692
  %v6694 = vmul.f32 %v6676, 1.442695
  %v6695 = vpow.pop %v6694
  %v6696 = vmul.f32 %v6677, 1.442695
  %v6697 = vpow.pop %v6696
  %v6698 = vmul.f32 %v6678, 1.442695
  %v6699 = vpow.pop %v6698
  %v6700 = vmul.f32 %v6679, 1.442695
  %v6701 = vpow.pop %v6700
  %v6702 = vmul.f32 %v6680, 1.442695
  %v6703 = vpow.pop %v6702
  %v6704 = vmul.f32 %v6681, 1.442695
  %v6705 = vpow.pop %v6704
  %v6706 = vmul.f32 %v6682, 1.442695
  %v6707 = vpow.pop %v6706
  %v6708 = vmul.f32 %v6683, 1.442695
  %v6709 = vpow.pop %v6708
  %v6710 = vmul.f32 %v6684, 1.442695
  %v6711 = vpow.pop %v6710
  %v6712 = vmul.f32 %v6685, 1.442695
  %v6713 = vpow.pop %v6712
  %v6714 = vmul.f32 %v6686, 1.442695
  %v6715 = vpow.pop %v6714
  %v6716 = vmul.f32 %v6687, 1.442695
  %v6717 = vpow.pop %v6716
  %v6718 = vmul.f32 %v6688, 1.442695
  %v6719 = vpow.pop %v6718
  %v6720 = vmul.f32 %v6689, 1.442695
  %v6721 = vpow.pop %v6720
  %v6722 = vadd.f32 %v6691, 1.0
  %v6723 = vadd.f32 %v6693, 1.0
  %v6724 = vadd.f32 %v6695, 1.0
  %v6725 = vadd.f32 %v6697, 1.0
  %v6726 = vadd.f32 %v6699, 1.0
  %v6727 = vadd.f32 %v6701, 1.0
  %v6728 = vadd.f32 %v6703, 1.0
  %v6729 = vadd.f32 %v6705, 1.0
  %v6730 = vadd.f32 %v6707, 1.0
  %v6731 = vadd.f32 %v6709, 1.0
  %v6732 = vadd.f32 %v6711, 1.0
  %v6733 = vadd.f32 %v6713, 1.0
  %v6734 = vadd.f32 %v6715, 1.0
  %v6735 = vadd.f32 %v6717, 1.0
  %v6736 = vadd.f32 %v6719, 1.0
  %v6737 = vadd.f32 %v6721, 1.0
  %v6738 = vrcp.pop %v6722
  %v6739 = vmul.f32 1.0, %v6738
  %v6740 = vrcp.pop %v6723
  %v6741 = vmul.f32 1.0, %v6740
  %v6742 = vrcp.pop %v6724
  %v6743 = vmul.f32 1.0, %v6742
  %v6744 = vrcp.pop %v6725
  %v6745 = vmul.f32 1.0, %v6744
  %v6746 = vrcp.pop %v6726
  %v6747 = vmul.f32 1.0, %v6746
  %v6748 = vrcp.pop %v6727
  %v6749 = vmul.f32 1.0, %v6748
  %v6750 = vrcp.pop %v6728
  %v6751 = vmul.f32 1.0, %v6750
  %v6752 = vrcp.pop %v6729
  %v6753 = vmul.f32 1.0, %v6752
  %v6754 = vrcp.pop %v6730
  %v6755 = vmul.f32 1.0, %v6754
  %v6756 = vrcp.pop %v6731
  %v6757 = vmul.f32 1.0, %v6756
  %v6758 = vrcp.pop %v6732
  %v6759 = vmul.f32 1.0, %v6758
  %v6760 = vrcp.pop %v6733
  %v6761 = vmul.f32 1.0, %v6760
  %v6762 = vrcp.pop %v6734
  %v6763 = vmul.f32 1.0, %v6762
  %v6764 = vrcp.pop %v6735
  %v6765 = vmul.f32 1.0, %v6764
  %v6766 = vrcp.pop %v6736
  %v6767 = vmul.f32 1.0, %v6766
  %v6768 = vrcp.pop %v6737
  %v6769 = vmul.f32 1.0, %v6768
  %v6770 = vadd.f32 %v6739, 0.0
  %v6771 = vadd.f32 %v6741, 0.0
  %v6772 = vadd.f32 %v6743, 0.0
  %v6773 = vadd.f32 %v6745, 0.0
  %v6774 = vadd.f32 %v6747, 0.0
  %v6775 = vadd.f32 %v6749, 0.0
  %v6776 = vadd.f32 %v6751, 0.0
  %v6777 = vadd.f32 %v6753, 0.0
  %v6778 = vadd.f32 %v6755, 0.0
  %v6779 = vadd.f32 %v6757, 0.0
  %v6780 = vadd.f32 %v6759, 0.0
  %v6781 = vadd.f32 %v6761, 0.0
  %v6782 = vadd.f32 %v6763, 0.0
  %v6783 = vadd.f32 %v6765, 0.0
  %v6784 = vadd.f32 %v6767, 0.0
  %v6785 = vadd.f32 %v6769, 0.0
  %v6802 = vlaneseq
  %v6803 = vshrl.u32 %v6802, 7
  %v6804 = vsub.s32 %v5319, %v6803
  %v6805 = vrot.slane %v6770, %v6804
  %v6806 = vlaneseq
  %v6807 = vshrl.u32 %v6806, 7
  %v6808 = vsub.s32 %v5324, %v6807
  %v6809 = vrot.slane %v6771, %v6808
  %v6810 = vsel %vm5329, %v6809, %v6805
  %v6811 = vadd.s32 %v5319, 4294967280
  %v6812 = vlaneseq
  %v6813 = vshrl.u32 %v6812, 7
  %v6814 = vsub.s32 %v6811, %v6813
  %v6815 = vrot.slane %v6772, %v6814
  %vm6816 = vcmask 195712
  %v6817 = vsel %vm6816, %v6815, %v6810
  %v6818 = vadd.s32 %v5319, 4294967272
  %v6819 = vlaneseq
  %v6820 = vshrl.u32 %v6819, 7
  %v6821 = vsub.s32 %v6818, %v6820
  %v6822 = vrot.slane %v6773, %v6821
  %vm6823 = vcmask 261312
  %v6824 = vsel %vm6823, %v6822, %v6817
  %v6825 = vadd.s32 %v5319, 4294967264
  %v6826 = vlaneseq
  %v6827 = vshrl.u32 %v6826, 7
  %v6828 = vsub.s32 %v6825, %v6827
  %v6829 = vrot.slane %v6774, %v6828
  %vm6830 = vcmask 326912
  %v6831 = vsel %vm6830, %v6829, %v6824
  %v6832 = vadd.s32 %v5319, 4294967256
  %v6833 = vlaneseq
  %v6834 = vshrl.u32 %v6833, 7
  %v6835 = vsub.s32 %v6832, %v6834
  %v6836 = vrot.slane %v6775, %v6835
  %vm6837 = vcmask 392512
  %v6838 = vsel %vm6837, %v6836, %v6831
  %v6839 = vadd.s32 %v5319, 4294967248
  %v6840 = vlaneseq
  %v6841 = vshrl.u32 %v6840, 7
  %v6842 = vsub.s32 %v6839, %v6841
  %v6843 = vrot.slane %v6776, %v6842
  %vm6844 = vcmask 458112
  %v6845 = vsel %vm6844, %v6843, %v6838
  %v6846 = vadd.s32 %v5319, 4294967240
  %v6847 = vlaneseq
  %v6848 = vshrl.u32 %v6847, 7
  %v6849 = vsub.s32 %v6846, %v6848
  %v6850 = vrot.slane %v6777, %v6849
  %vm6851 = vcmask 523712
  %v6852 = vsel %vm6851, %v6850, %v6845
  %v6853 = vadd.s32 %v5319, 4294967232
  %v6854 = vlaneseq
  %v6855 = vshrl.u32 %v6854, 7
  %v6856 = vsub.s32 %v6853, %v6855
  %v6857 = vrot.slane %v6778, %v6856
  %vm6858 = vcmask 589312
  %v6859 = vsel %vm6858, %v6857, %v6852
  %v6860 = vadd.s32 %v5319, 4294967224
  %v6861 = vlaneseq
  %v6862 = vshrl.u32 %v6861, 7
  %v6863 = vsub.s32 %v6860, %v6862
  %v6864 = vrot.slane %v6779, %v6863
  %vm6865 = vcmask 654912
  %v6866 = vsel %vm6865, %v6864, %v6859
  %v6867 = vadd.s32 %v5319, 4294967216
  %v6868 = vlaneseq
  %v6869 = vshrl.u32 %v6868, 7
  %v6870 = vsub.s32 %v6867, %v6869
  %v6871 = vrot.slane %v6780, %v6870
  %vm6872 = vcmask 720512
  %v6873 = vsel %vm6872, %v6871, %v6866
  %v6874 = vadd.s32 %v5319, 4294967208
  %v6875 = vlaneseq
  %v6876 = vshrl.u32 %v6875, 7
  %v6877 = vsub.s32 %v6874, %v6876
  %v6878 = vrot.slane %v6781, %v6877
  %vm6879 = vcmask 786112
  %v6880 = vsel %vm6879, %v6878, %v6873
  %v6881 = vadd.s32 %v5319, 4294967200
  %v6882 = vlaneseq
  %v6883 = vshrl.u32 %v6882, 7
  %v6884 = vsub.s32 %v6881, %v6883
  %v6885 = vrot.slane %v6782, %v6884
  %vm6886 = vcmask 851712
  %v6887 = vsel %vm6886, %v6885, %v6880
  %v6888 = vadd.s32 %v5319, 4294967192
  %v6889 = vlaneseq
  %v6890 = vshrl.u32 %v6889, 7
  %v6891 = vsub.s32 %v6888, %v6890
  %v6892 = vrot.slane %v6783, %v6891
  %vm6893 = vcmask 917312
  %v6894 = vsel %vm6893, %v6892, %v6887
  %v6895 = vadd.s32 %v5319, 4294967184
  %v6896 = vlaneseq
  %v6897 = vshrl.u32 %v6896, 7
  %v6898 = vsub.s32 %v6895, %v6897
  %v6899 = vrot.slane %v6784, %v6898
  %vm6900 = vcmask 982912
  %v6901 = vsel %vm6900, %v6899, %v6894
  %v6902 = vadd.s32 %v5319, 4294967176
  %v6903 = vlaneseq
  %v6904 = vshrl.u32 %v6903, 7
  %v6905 = vsub.s32 %v6902, %v6904
  %v6906 = vrot.slane %v6785, %v6905
  %vm6907 = vcmask 1048512
  %v6908 = vsel %vm6907, %v6906, %v6901
  %6910 = vst [vmem:[%s7] sm:$0x1] %v6908
  %v6911 = vld [vmem:[%s1] sm:$0x1]
  %v6912 = vmax.f32 %v6911, -50.0
  %v6913 = vmin.f32 %v6912, 50.0
  %v6914 = vmul.f32 %v6913, 1.442695
  %v6915 = vpow.pop %v6914
  %v6916 = vadd.f32 %v6915, 1.0
  %v6917 = vrcp.pop %v6916
  %v6918 = vmul.f32 1.0, %v6917
  %v6919 = vadd.f32 %v6918, 0.0
  %6920 = vst [vmem:[%s8] sm:$0x1] %v6919
  // Predicated region
  $region30: #{preference_model.1} parent=0 // pred_check
    _
  $region31: #{preference_model.1} parent=0 // pred_check_branch
    %6922 = sbr.rel (0) target = $region33
  $region32: #{preference_model.1} parent=0 // pred_region
    _
  $region33: #{preference_model.1} parent=0 // pred_fallthru
    _
  // Predicated region
  $region34: #{preference_model.1} parent=0 // pred_check
    _
  $region35: #{preference_model.1} parent=0 // pred_check_branch
    %6924 = sbr.rel (0) target = $region37
  $region36: #{preference_model.1} parent=0 // pred_region
    _
  $region37: #{preference_model.1} parent=0 // pred_fallthru
    _
  // Predicated region
  $region38: #{preference_model.1} parent=0 // pred_check
    _
  $region39: #{preference_model.1} parent=0 // pred_check_branch
    %6926 = sbr.rel (0) target = $region41
  $region40: #{preference_model.1} parent=0 // pred_region
    _
  $region41: #{preference_model.1} parent=0 // pred_fallthru
    _
  // Predicated region
  $region42: #{preference_model.1} parent=0 // pred_check
    _
  $region43: #{preference_model.1} parent=0 // pred_check_branch
    %6928 = sbr.rel (0) target = $region45
  $region44: #{preference_model.1} parent=0 // pred_region
    _
  $region45: #{preference_model.1} parent=0 // pred_fallthru
    _

</llo_original>
